<compile_context>
chip_gen: v5e
topology: v5e:2x2
jax: 0.10.0
libtpu: 0.0.40
codegen_flags: <defaults>
</compile_context>

<pallas_src>
import math

import jax
import jax.numpy as jnp
from jax import lax
from jax.experimental import pallas as pl
from jax.experimental.pallas import tpu as pltpu


def _layer_norm(x, gamma, beta, eps=1e-5):
    mu = jnp.mean(x, axis=-1, keepdims=True)
    var = jnp.mean((x - mu) ** 2, axis=-1, keepdims=True)
    return (x - mu) * lax.rsqrt(var + eps) * gamma + beta


def _make_kernel(H, d_k, d_v, tq, return_attn):
    """Build the fused EncoderLayer kernel body (grid = (batch, q_tile))."""
    bf16 = jnp.bfloat16

    def kernel(x_ref, bias_ref, wqkv_ref, bqkv_ref, wo_ref, bo_ref,
               ln1g_ref, ln1b_ref, w1_ref, b1_ref, w2_ref, b2_ref,
               ln2g_ref, ln2b_ref, out_ref, *rest):
        if return_attn:
            attn_ref, q_scr, k_scr, v_scr = rest
        else:
            attn_ref = None
            q_scr, k_scr, v_scr = rest

        qi = pl.program_id(1)

        # ---- fused QKV projection: ONE lane-dense matmul per batch element,
        #      run on the first q-tile only; heads split into persistent bf16
        #      VMEM scratch via static lane slices (no in-kernel transpose). ----
        @pl.when(qi == 0)
        def _():
            x_all = x_ref[0].astype(bf16)                          # [S, D]
            qkv = (jnp.dot(x_all, wqkv_ref[...],
                           preferred_element_type=jnp.float32)
                   + bqkv_ref[...]).astype(bf16)                   # [S, H*(2dk+dv)]
            for h in range(H):                                     # once per batch elem
                q_scr[h] = qkv[:, h * d_k:(h + 1) * d_k]           # Q (pre-scaled)
                k_scr[h] = qkv[:, H * d_k + h * d_k:H * d_k + (h + 1) * d_k]
                v_scr[h] = qkv[:, 2 * H * d_k + h * d_v:2 * H * d_k + (h + 1) * d_v]

        # ---- attention for this query tile (all heads batched) ----
        row0 = pl.multiple_of(qi * tq, tq)
        q_t = q_scr[:, pl.ds(row0, tq), :]                         # [H, tq, d_k] bf16
        scores = jnp.einsum("hqc,hkc->hqk", q_t, k_scr[...],
                            preferred_element_type=jnp.float32)    # [H, tq, S]
        scores = scores + bias_ref[...]            # additive key mask (-1e9 on pads)
        scores = scores - jnp.max(scores, axis=-1, keepdims=True)
        e = jnp.exp(scores)
        denom = jnp.sum(e, axis=-1, keepdims=True)
        if attn_ref is not None:
            p = (e * (1.0 / denom)).astype(bf16)   # exact recip for stored probs
            attn_ref[0] = p                        # [H, tq, S] bf16
        else:
            p = (e * pl.reciprocal(denom, approx=True)).astype(bf16)

        ctx = jnp.einsum("hqk,hkv->hqv", p, v_scr[...],
                         preferred_element_type=jnp.float32)       # [H, tq, d_v]
        # heads -> lane dim, then ONE lane-dense [tq, H*d_v] @ [H*d_v, D] matmul
        ctx = jnp.concatenate([ctx[h] for h in range(H)], axis=-1).astype(bf16)
        attn_out = jnp.dot(ctx, wo_ref[...],
                           preferred_element_type=jnp.float32) + bo_ref[...]

        x_t = x_ref[0, pl.ds(row0, tq), :]                         # [tq, D] residual
        y = _layer_norm(attn_out + x_t, ln1g_ref[...], ln1b_ref[...])

        # ---- position-wise FFN (conv1d k=1 == linear); h1 kept in bf16 ----
        h1 = jnp.maximum(
            jnp.dot(y.astype(bf16), w1_ref[...],
                    preferred_element_type=jnp.float32) + b1_ref[...],
            0.0).astype(bf16)
        ff = jnp.dot(h1, w2_ref[...],
                     preferred_element_type=jnp.float32) + b2_ref[...]
        out_ref[0] = _layer_norm(ff + y, ln2g_ref[...], ln2b_ref[...])

    return kernel


def _pick_q_tile(S):
    """Largest q-tile <= 256 that divides S and respects the sublane rule."""
    for cand in (256, 128, 64, 32, 16, 8):
        if S % cand == 0:
            return cand
    return S


def _vmem_limit_bytes(S, tq, D, H, d_k, d_v, d_ff, return_attn):
    f32, bf16 = 4, 2
    E = H * (2 * d_k + d_v)
    blocks = (2 * (S * D + S + tq * D) * f32                    # x, bias, out (x2 buf)
              + (D * E + H * d_v * D + 2 * D * d_ff) * bf16     # single-buffered weights
              + (E + d_ff + 7 * D) * f32)                       # biases / LN params
    if return_attn:
        blocks += 2 * H * tq * S * bf16
    scratch = H * S * (2 * d_k + d_v) * bf16                    # persistent Q/K/V
    interm = (2 * H * tq * S * f32 + H * tq * S * bf16          # scores / exp / probs
              + H * tq * d_v * f32 + tq * H * d_v * bf16        # ctx
              + tq * d_ff * (f32 + bf16) + 6 * tq * D * f32     # FFN / LN temps
              + S * E * (f32 + bf16) + S * D * bf16)            # fused QKV at tile 0
    est = blocks + scratch + 2 * interm + (8 << 20)
    try:
        cap = int(pltpu.get_tpu_info().vmem_capacity_bytes)
    except Exception:
        cap = 64 << 20          # conservative fallback if the query is unavailable
    # 80% of physical VMEM: ~51 MiB on v7x (64 MiB), ~102 MiB on v5e/v6e (128 MiB)
    return int(min(max(est, 16 << 20), (cap * 4) // 5))


def _cost_estimate(B, S, D, H, d_k, d_v, d_ff, return_attn):
    E = H * (2 * d_k + d_v)
    flops = B * (2 * S * D * E                    # fused QKV projection
                 + 2 * H * S * S * (d_k + d_v)    # scores + ctx
                 + 2 * S * (H * d_v) * D          # output projection
                 + 4 * S * D * d_ff)              # two FFN matmuls
    bytes_accessed = (2 * B * S * D * 4 + B * S * 4
                      + (D * E + H * d_v * D + 2 * D * d_ff) * 2
                      + (E + d_ff + 7 * D) * 4)
    if return_attn:
        bytes_accessed += B * H * S * S * 2
    return pl.CostEstimate(flops=int(flops),
                           transcendentals=int(B * H * S * S),
                           bytes_accessed=int(bytes_accessed))


def encoder_layer(x, key_pad_mask, params, *, n_heads, d_k, d_v,
                  return_attn=False, q_tile=None):
    """x: [B, S, d_model] f32.  key_pad_mask: [B, S] (1.0 = padded key position)."""
    B, S, D = x.shape
    H = n_heads
    d_ff = params["w1"].shape[1]
    E = H * (2 * d_k + d_v)
    bf16 = jnp.bfloat16

    tq = q_tile if q_tile is not None else _pick_q_tile(S)
    assert S % tq == 0 and (tq % 8 == 0 or tq == S), (S, tq)
    n_qt = S // tq

    # Fuse Wq|Wk|Wv into one lane-dense weight (scale folded into Wq/bq);
    # matmul operands pre-cast to bf16, biases / LN params stay f32.
    scale = 1.0 / math.sqrt(d_k)
    wqkv = jnp.concatenate(
        [params["wq"] * scale, params["wk"], params["wv"]], axis=1).astype(bf16)
    bqkv = jnp.concatenate(
        [params["bq"] * scale, params["bk"], params["bv"]], axis=1)
    wo = params["wo"].astype(bf16)                 # original unsplit [H*d_v, D]
    w1 = params["w1"].astype(bf16)
    w2 = params["w2"].astype(bf16)

    # key-padding mask as a precomputed additive bias (one broadcast add in-kernel)
    bias = (key_pad_mask.astype(jnp.float32) * -1e9).reshape(B, 1, S)

    operands = (x, bias, wqkv, bqkv, wo, params["bo"],
                params["ln1_g"], params["ln1_b"], w1, params["b1"],
                w2, params["b2"], params["ln2_g"], params["ln2_b"])

    kernel = _make_kernel(H, d_k, d_v, tq, return_attn)

    def _build_and_run(single_buffer_weights):
        def const_spec(shape):
            zeros = (0,) * len(shape)
            if single_buffer_weights:
                # constant index_map across the grid -> one buffer is enough
                return pl.BlockSpec(shape, lambda b, q: zeros,
                                    pipeline_mode=pl.Buffered(1))
            return pl.BlockSpec(shape, lambda b, q: zeros)

        in_specs = [
            pl.BlockSpec((1, S, D), lambda b, q: (b, 0, 0)),      # x (full seq / batch)
            pl.BlockSpec((1, 1, S), lambda b, q: (b, 0, 0)),      # additive key bias
            const_spec((D, E)), const_spec((1, E)),               # Wqkv, bqkv
            const_spec((H * d_v, D)), const_spec((1, D)),         # Wo, bo
            const_spec((1, D)), const_spec((1, D)),               # ln1 gamma / beta
            const_spec((D, d_ff)), const_spec((1, d_ff)),         # W1, b1
            const_spec((d_ff, D)), const_spec((1, D)),            # W2, b2
            const_spec((1, D)), const_spec((1, D)),               # ln2 gamma / beta
        ]
        out_specs = [pl.BlockSpec((1, tq, D), lambda b, q: (b, q, 0))]
        out_shapes = [jax.ShapeDtypeStruct((B, S, D), jnp.float32)]
        if return_attn:
            out_specs.append(pl.BlockSpec((1, H, tq, S), lambda b, q: (b, 0, q, 0)))
            out_shapes.append(jax.ShapeDtypeStruct((B, H, S, S), jnp.bfloat16))

        grid_spec = pltpu.PrefetchScalarGridSpec(
            num_scalar_prefetch=0,
            grid=(B, n_qt),
            in_specs=in_specs,
            out_specs=tuple(out_specs),
            scratch_shapes=[pltpu.VMEM((H, S, d_k), bf16),    # Q (pre-scaled)
                            pltpu.VMEM((H, S, d_k), bf16),    # K
                            pltpu.VMEM((H, S, d_v), bf16)],   # V
        )
        return pl.pallas_call(
            kernel,
            grid_spec=grid_spec,
            out_shape=tuple(out_shapes),
            compiler_params=pltpu.CompilerParams(
                dimension_semantics=("parallel", "arbitrary"),
                vmem_limit_bytes=_vmem_limit_bytes(S, tq, D, H, d_k, d_v,
                                                   d_ff, return_attn)),
            cost_estimate=_cost_estimate(B, S, D, H, d_k, d_v, d_ff, return_attn),
        )(*operands)

    try:
        outs = _build_and_run(True)
    except Exception:
        # jax versions without BlockSpec pipeline_mode / pl.Buffered support:
        # fall back to default double-buffered constant blocks.
        outs = _build_and_run(False)

    if return_attn:
        return outs[0], outs[1]
    return outs[0]


def init_params(key, d_model, d_ff, n_heads, d_k, d_v):
    ks = jax.random.split(key, 8)

    def lin(k, fan_in, shape):
        return jax.random.normal(k, shape, jnp.float32) * (1.0 / math.sqrt(fan_in))

    return {
        "wq": lin(ks[0], d_model, (d_model, n_heads * d_k)),
        "bq": jnp.zeros((1, n_heads * d_k), jnp.float32),
        "wk": lin(ks[1], d_model, (d_model, n_heads * d_k)),
        "bk": jnp.zeros((1, n_heads * d_k), jnp.float32),
        "wv": lin(ks[2], d_model, (d_model, n_heads * d_v)),
        "bv": jnp.zeros((1, n_heads * d_v), jnp.float32),
        "wo": lin(ks[3], n_heads * d_v, (n_heads * d_v, d_model)),
        "bo": jnp.zeros((1, d_model), jnp.float32),
        "ln1_g": jnp.ones((1, d_model), jnp.float32),
        "ln1_b": jnp.zeros((1, d_model), jnp.float32),
        # conv1d(kernel_size=1) weights folded to [in, out] matmul weights
        "w1": lin(ks[4], d_model, (d_model, d_ff)),
        "b1": jnp.zeros((1, d_ff), jnp.float32),
        "w2": lin(ks[5], d_ff, (d_ff, d_model)),
        "b2": jnp.zeros((1, d_model), jnp.float32),
        "ln2_g": jnp.ones((1, d_model), jnp.float32),
        "ln2_b": jnp.zeros((1, d_model), jnp.float32),
    }


def _reference(x, key_pad, p, n_heads, d_k, d_v):
    """Pure-JAX f32 reference matching the PyTorch EncoderLayer forward."""
    B, S, D = x.shape

    def ln(v, g, b, eps=1e-5):
        mu = v.mean(-1, keepdims=True)
        var = ((v - mu) ** 2).mean(-1, keepdims=True)
        return (v - mu) / jnp.sqrt(var + eps) * g + b

    q = (x @ p["wq"] + p["bq"]).reshape(B, S, n_heads, d_k).transpose(0, 2, 1, 3)
    k = (x @ p["wk"] + p["bk"]).reshape(B, S, n_heads, d_k).transpose(0, 2, 1, 3)
    v = (x @ p["wv"] + p["bv"]).reshape(B, S, n_heads, d_v).transpose(0, 2, 1, 3)
    scores = jnp.einsum("bhqc,bhkc->bhqk", q, k) / math.sqrt(d_k)
    scores = jnp.where(key_pad[:, None, None, :] > 0, -1e9, scores)
    attn = jax.nn.softmax(scores, axis=-1)
    ctx = jnp.einsum("bhqk,bhkv->bhqv", attn, v)
    ctx = ctx.transpose(0, 2, 1, 3).reshape(B, S, n_heads * d_v)
    ao = ctx @ p["wo"] + p["bo"]
    y = ln(ao + x, p["ln1_g"], p["ln1_b"])
    h1 = jnp.maximum(y @ p["w1"] + p["b1"], 0.0)
    ff = h1 @ p["w2"] + p["b2"]
    return ln(ff + y, p["ln2_g"], p["ln2_b"]), attn


if __name__ == "__main__":
    B, S = 2, 16
    d_model, d_ff, n_heads, d_k, d_v = 32, 64, 2, 16, 16

    key = jax.random.PRNGKey(0)
    k_x, k_p = jax.random.split(key)
    x = jax.random.normal(k_x, (B, S, d_model), jnp.float32)

    # key-padding mask (1.0 = padded key); batch 1 has its last 2 keys padded.
    key_pad = jnp.zeros((B, S), jnp.float32).at[1, S - 2:].set(1.0)

    params = init_params(k_p, d_model, d_ff, n_heads, d_k, d_v)

    # Full path (attention returned, bf16); q_tile=8 exercises the multi-tile
    # pipeline with the Q/K/V scratch reused across query tiles.
    enc_out, attn = encoder_layer(
        x, key_pad, params, n_heads=n_heads, d_k=d_k, d_v=d_v,
        return_attn=True, q_tile=8)
    # Production path (no attention writeback, approx reciprocal).
    enc_only = encoder_layer(
        x, key_pad, params, n_heads=n_heads, d_k=d_k, d_v=d_v,
        return_attn=False, q_tile=8)
    jax.block_until_ready((enc_out, attn, enc_only))

    assert enc_out.shape == (B, S, d_model)
    assert attn.shape == (B, n_heads, S, S)
    assert enc_only.shape == (B, S, d_model)

    ref_out, ref_attn = _reference(x, key_pad, params, n_heads, d_k, d_v)
    err_out = float(jnp.max(jnp.abs(enc_out - ref_out)))
    err_out2 = float(jnp.max(jnp.abs(enc_only - ref_out)))
    err_attn = float(jnp.max(jnp.abs(attn.astype(jnp.float32) - ref_attn)))
    # bf16 MXU operands / bf16 attention output => small deviation vs f32 ref
    assert err_out < 1e-1 and err_out2 < 1e-1 and err_attn < 5e-2, (
        err_out, err_out2, err_attn)

    print("KERNEL_OK")
</pallas_src>

<mosaic_0001>
module attributes {stable_mosaic.version = 11 : i64} {
  func.func @kernel(%arg0: i32, %arg1: i32, %arg2: memref<1x16x32xf32, #tpu.memory_space<vmem>>, %arg3: memref<1x1x16xf32, #tpu.memory_space<vmem>>, %arg4: memref<32x96xbf16, #tpu.memory_space<vmem>>, %arg5: memref<1x96xf32, #tpu.memory_space<vmem>>, %arg6: memref<32x32xbf16, #tpu.memory_space<vmem>>, %arg7: memref<1x32xf32, #tpu.memory_space<vmem>>, %arg8: memref<1x32xf32, #tpu.memory_space<vmem>>, %arg9: memref<1x32xf32, #tpu.memory_space<vmem>>, %arg10: memref<32x64xbf16, #tpu.memory_space<vmem>>, %arg11: memref<1x64xf32, #tpu.memory_space<vmem>>, %arg12: memref<64x32xbf16, #tpu.memory_space<vmem>>, %arg13: memref<1x32xf32, #tpu.memory_space<vmem>>, %arg14: memref<1x32xf32, #tpu.memory_space<vmem>>, %arg15: memref<1x32xf32, #tpu.memory_space<vmem>>, %arg16: memref<1x8x32xf32, #tpu.memory_space<vmem>>, %arg17: memref<1x2x8x16xbf16, #tpu.memory_space<vmem>>, %arg18: memref<2x16x16xbf16, #tpu.memory_space<vmem>>, %arg19: memref<2x16x16xbf16, #tpu.memory_space<vmem>>, %arg20: memref<2x16x16xbf16, #tpu.memory_space<vmem>>) attributes {dimension_semantics = [#tpu.dimension_semantics<parallel>, #tpu.dimension_semantics<arbitrary>], iteration_bounds = array<i64: 2, 2>, scalar_prefetch = 0 : i64, scratch_operands = 3 : i64, tpu.core_type = #tpu.core_type<tc>, window_params = [{transform_indices = @transform_0, window_bounds = array<i64: 1, 16, 32>}, {transform_indices = @transform_1, window_bounds = array<i64: 1, 1, 16>}, {pipeline_mode = #tpu.pipeline_mode<synchronous>, transform_indices = @transform_2, window_bounds = array<i64: 32, 96>}, {pipeline_mode = #tpu.pipeline_mode<synchronous>, transform_indices = @transform_3, window_bounds = array<i64: 1, 96>}, {pipeline_mode = #tpu.pipeline_mode<synchronous>, transform_indices = @transform_4, window_bounds = array<i64: 32, 32>}, {pipeline_mode = #tpu.pipeline_mode<synchronous>, transform_indices = @transform_5, window_bounds = array<i64: 1, 32>}, {pipeline_mode = #tpu.pipeline_mode<synchronous>, transform_indices = @transform_6, window_bounds = array<i64: 1, 32>}, {pipeline_mode = #tpu.pipeline_mode<synchronous>, transform_indices = @transform_7, window_bounds = array<i64: 1, 32>}, {pipeline_mode = #tpu.pipeline_mode<synchronous>, transform_indices = @transform_8, window_bounds = array<i64: 32, 64>}, {pipeline_mode = #tpu.pipeline_mode<synchronous>, transform_indices = @transform_9, window_bounds = array<i64: 1, 64>}, {pipeline_mode = #tpu.pipeline_mode<synchronous>, transform_indices = @transform_10, window_bounds = array<i64: 64, 32>}, {pipeline_mode = #tpu.pipeline_mode<synchronous>, transform_indices = @transform_11, window_bounds = array<i64: 1, 32>}, {pipeline_mode = #tpu.pipeline_mode<synchronous>, transform_indices = @transform_12, window_bounds = array<i64: 1, 32>}, {pipeline_mode = #tpu.pipeline_mode<synchronous>, transform_indices = @transform_13, window_bounds = array<i64: 1, 32>}, {transform_indices = @transform_14, window_bounds = array<i64: 1, 8, 32>}, {transform_indices = @transform_15, window_bounds = array<i64: 1, 2, 8, 16>}]} {
    %c0_i32 = arith.constant 0 : i32
    %0 = arith.cmpi eq, %arg1, %c0_i32 : i32
    %1 = arith.extui %0 : i1 to i32
    %c0_i32_0 = arith.constant 0 : i32
    %2 = arith.cmpi ne, %1, %c0_i32_0 : i32
    scf.if %2 {
      %c0_58 = arith.constant 0 : index
      %c0_59 = arith.constant 0 : index
      %c0_60 = arith.constant 0 : index
      %110 = vector.load %arg2[%c0_58, %c0_59, %c0_60] : memref<1x16x32xf32, #tpu.memory_space<vmem>>, vector<1x16x32xf32>
      %111 = vector.shape_cast %110 : vector<1x16x32xf32> to vector<16x32xf32>
      %112 = arith.truncf %111 : vector<16x32xf32> to vector<16x32xbf16>
      %c0_61 = arith.constant 0 : index
      %c0_62 = arith.constant 0 : index
      %113 = vector.load %arg4[%c0_61, %c0_62] : memref<32x96xbf16, #tpu.memory_space<vmem>>, vector<32x96xbf16>
      %cst_63 = arith.constant dense<0.000000e+00> : vector<16x96xf32>
      %114 = tpu.matmul %112, %113, %cst_63 {dimension_numbers = #tpu.dot_dimension_numbers<[1], [0], [0], [1], [0, 0, 1, 1], [], []>} : vector<16x32xbf16>, vector<32x96xbf16>, vector<16x96xf32> -> vector<16x96xf32>
      %c0_64 = arith.constant 0 : index
      %c0_65 = arith.constant 0 : index
      %115 = vector.load %arg5[%c0_64, %c0_65] : memref<1x96xf32, #tpu.memory_space<vmem>>, vector<1x96xf32>
      %116 = vector.broadcast %115 : vector<1x96xf32> to vector<16x96xf32>
      %117 = arith.addf %114, %116 : vector<16x96xf32>
      %118 = arith.truncf %117 : vector<16x96xf32> to vector<16x96xbf16>
      %119 = vector.extract_strided_slice %118 {offsets = [0, 0], sizes = [16, 16], strides = [1, 1]} : vector<16x96xbf16> to vector<16x16xbf16>
      %c0_66 = arith.constant 0 : index
      %c0_67 = arith.constant 0 : index
      %c0_68 = arith.constant 0 : index
      %120 = vector.load %arg18[%c0_66, %c0_67, %c0_68] : memref<2x16x16xbf16, #tpu.memory_space<vmem>>, vector<1x16x16xbf16>
      %121 = vector.shape_cast %120 : vector<1x16x16xbf16> to vector<16x16xbf16>
      %122 = vector.shape_cast %119 : vector<16x16xbf16> to vector<1x16x16xbf16>
      tpu.vector_store %arg18[%c0_66, %c0_67, %c0_68], %122 {strides = array<i32>} : memref<2x16x16xbf16, #tpu.memory_space<vmem>>, vector<1x16x16xbf16>,
      %123 = vector.extract_strided_slice %118 {offsets = [0, 32], sizes = [16, 16], strides = [1, 1]} : vector<16x96xbf16> to vector<16x16xbf16>
      %c0_69 = arith.constant 0 : index
      %c0_70 = arith.constant 0 : index
      %c0_71 = arith.constant 0 : index
      %124 = vector.load %arg19[%c0_69, %c0_70, %c0_71] : memref<2x16x16xbf16, #tpu.memory_space<vmem>>, vector<1x16x16xbf16>
      %125 = vector.shape_cast %124 : vector<1x16x16xbf16> to vector<16x16xbf16>
      %126 = vector.shape_cast %123 : vector<16x16xbf16> to vector<1x16x16xbf16>
      tpu.vector_store %arg19[%c0_69, %c0_70, %c0_71], %126 {strides = array<i32>} : memref<2x16x16xbf16, #tpu.memory_space<vmem>>, vector<1x16x16xbf16>,
      %127 = vector.extract_strided_slice %118 {offsets = [0, 64], sizes = [16, 16], strides = [1, 1]} : vector<16x96xbf16> to vector<16x16xbf16>
      %c0_72 = arith.constant 0 : index
      %c0_73 = arith.constant 0 : index
      %c0_74 = arith.constant 0 : index
      %128 = vector.load %arg20[%c0_72, %c0_73, %c0_74] : memref<2x16x16xbf16, #tpu.memory_space<vmem>>, vector<1x16x16xbf16>
      %129 = vector.shape_cast %128 : vector<1x16x16xbf16> to vector<16x16xbf16>
      %130 = vector.shape_cast %127 : vector<16x16xbf16> to vector<1x16x16xbf16>
      tpu.vector_store %arg20[%c0_72, %c0_73, %c0_74], %130 {strides = array<i32>} : memref<2x16x16xbf16, #tpu.memory_space<vmem>>, vector<1x16x16xbf16>,
      %131 = vector.extract_strided_slice %118 {offsets = [0, 16], sizes = [16, 16], strides = [1, 1]} : vector<16x96xbf16> to vector<16x16xbf16>
      %c1 = arith.constant 1 : index
      %c0_75 = arith.constant 0 : index
      %c0_76 = arith.constant 0 : index
      %132 = vector.load %arg18[%c1, %c0_75, %c0_76] : memref<2x16x16xbf16, #tpu.memory_space<vmem>>, vector<1x16x16xbf16>
      %133 = vector.shape_cast %132 : vector<1x16x16xbf16> to vector<16x16xbf16>
      %134 = vector.shape_cast %131 : vector<16x16xbf16> to vector<1x16x16xbf16>
      tpu.vector_store %arg18[%c1, %c0_75, %c0_76], %134 {strides = array<i32>} : memref<2x16x16xbf16, #tpu.memory_space<vmem>>, vector<1x16x16xbf16>,
      %135 = vector.extract_strided_slice %118 {offsets = [0, 48], sizes = [16, 16], strides = [1, 1]} : vector<16x96xbf16> to vector<16x16xbf16>
      %c1_77 = arith.constant 1 : index
      %c0_78 = arith.constant 0 : index
      %c0_79 = arith.constant 0 : index
      %136 = vector.load %arg19[%c1_77, %c0_78, %c0_79] : memref<2x16x16xbf16, #tpu.memory_space<vmem>>, vector<1x16x16xbf16>
      %137 = vector.shape_cast %136 : vector<1x16x16xbf16> to vector<16x16xbf16>
      %138 = vector.shape_cast %135 : vector<16x16xbf16> to vector<1x16x16xbf16>
      tpu.vector_store %arg19[%c1_77, %c0_78, %c0_79], %138 {strides = array<i32>} : memref<2x16x16xbf16, #tpu.memory_space<vmem>>, vector<1x16x16xbf16>,
      %139 = vector.extract_strided_slice %118 {offsets = [0, 80], sizes = [16, 16], strides = [1, 1]} : vector<16x96xbf16> to vector<16x16xbf16>
      %c1_80 = arith.constant 1 : index
      %c0_81 = arith.constant 0 : index
      %c0_82 = arith.constant 0 : index
      %140 = vector.load %arg20[%c1_80, %c0_81, %c0_82] : memref<2x16x16xbf16, #tpu.memory_space<vmem>>, vector<1x16x16xbf16>
      %141 = vector.shape_cast %140 : vector<1x16x16xbf16> to vector<16x16xbf16>
      %142 = vector.shape_cast %139 : vector<16x16xbf16> to vector<1x16x16xbf16>
      tpu.vector_store %arg20[%c1_80, %c0_81, %c0_82], %142 {strides = array<i32>} : memref<2x16x16xbf16, #tpu.memory_space<vmem>>, vector<1x16x16xbf16>,
    } else {
    }
    %c8_i32 = arith.constant 8 : i32
    %3 = arith.muli %arg1, %c8_i32 : i32
    %4 = tpu.assume_multiple %3, 8 : i32
    %c0 = arith.constant 0 : index
    %5 = arith.index_cast %4 : i32 to index
    %c0_1 = arith.constant 0 : index
    %6 = vector.load %arg18[%c0, %5, %c0_1] : memref<2x16x16xbf16, #tpu.memory_space<vmem>>, vector<2x8x16xbf16>
    %c0_2 = arith.constant 0 : index
    %c0_3 = arith.constant 0 : index
    %c0_4 = arith.constant 0 : index
    %7 = vector.load %arg19[%c0_2, %c0_3, %c0_4] : memref<2x16x16xbf16, #tpu.memory_space<vmem>>, vector<2x16x16xbf16>
    "tpu.trace_start"() <{level = 10 : i32, message = "hqc,hkc->hqk"}> : () -> ()
    %cst = arith.constant dense<0.000000e+00> : vector<2x8x16xf32>
    %8 = tpu.matmul %6, %7, %cst {dimension_numbers = #tpu.dot_dimension_numbers<[2], [2], [1], [1], [0, 0, 0, 1, 1, 1], [0], [0]>} : vector<2x8x16xbf16>, vector<2x16x16xbf16>, vector<2x8x16xf32> -> vector<2x8x16xf32>
    "tpu.trace_stop"() : () -> ()
    %c0_5 = arith.constant 0 : index
    %c0_6 = arith.constant 0 : index
    %c0_7 = arith.constant 0 : index
    %9 = vector.load %arg3[%c0_5, %c0_6, %c0_7] : memref<1x1x16xf32, #tpu.memory_space<vmem>>, vector<1x1x16xf32>
    %10 = vector.broadcast %9 : vector<1x1x16xf32> to vector<2x8x16xf32>
    %11 = arith.addf %8, %10 : vector<2x8x16xf32>
    %cst_8 = arith.constant dense<0xFF800000> : vector<2x8xf32>
    %12 = vector.multi_reduction <maximumf>, %11, %cst_8 [2] : vector<2x8x16xf32> to vector<2x8xf32>
    %13 = vector.shape_cast %12 : vector<2x8xf32> to vector<2x8x1xf32>
    %14 = vector.broadcast %13 : vector<2x8x1xf32> to vector<2x8x16xf32>
    %15 = arith.subf %11, %14 : vector<2x8x16xf32>
    %16 = math.exp %15 : vector<2x8x16xf32>
    %cst_9 = arith.constant dense<0.000000e+00> : vector<2x8xf32>
    %17 = vector.multi_reduction <add>, %16, %cst_9 [2] : vector<2x8x16xf32> to vector<2x8xf32>
    %18 = vector.shape_cast %17 : vector<2x8xf32> to vector<2x8x1xf32>
    %cst_10 = arith.constant 1.000000e+00 : f32
    %19 = vector.broadcast %cst_10 : f32 to vector<2x8x1xf32>
    %20 = arith.divf %19, %18 : vector<2x8x1xf32>
    %21 = vector.broadcast %20 : vector<2x8x1xf32> to vector<2x8x16xf32>
    %22 = arith.mulf %16, %21 : vector<2x8x16xf32>
    %23 = arith.truncf %22 : vector<2x8x16xf32> to vector<2x8x16xbf16>
    %c0_11 = arith.constant 0 : index
    %c0_12 = arith.constant 0 : index
    %c0_13 = arith.constant 0 : index
    %c0_14 = arith.constant 0 : index
    %24 = vector.load %arg17[%c0_11, %c0_12, %c0_13, %c0_14] : memref<1x2x8x16xbf16, #tpu.memory_space<vmem>>, vector<1x2x8x16xbf16>
    %25 = vector.shape_cast %24 : vector<1x2x8x16xbf16> to vector<2x8x16xbf16>
    %26 = vector.shape_cast %23 : vector<2x8x16xbf16> to vector<1x2x8x16xbf16>
    tpu.vector_store %arg17[%c0_11, %c0_12, %c0_13, %c0_14], %26 {strides = array<i32>} : memref<1x2x8x16xbf16, #tpu.memory_space<vmem>>, vector<1x2x8x16xbf16>,
    %c0_15 = arith.constant 0 : index
    %c0_16 = arith.constant 0 : index
    %c0_17 = arith.constant 0 : index
    %27 = vector.load %arg20[%c0_15, %c0_16, %c0_17] : memref<2x16x16xbf16, #tpu.memory_space<vmem>>, vector<2x16x16xbf16>
    "tpu.trace_start"() <{level = 10 : i32, message = "hqk,hkv->hqv"}> : () -> ()
    %cst_18 = arith.constant dense<0.000000e+00> : vector<2x8x16xf32>
    %28 = tpu.matmul %23, %27, %cst_18 {dimension_numbers = #tpu.dot_dimension_numbers<[2], [1], [1], [2], [0, 0, 0, 1, 1, 2], [0], [0]>} : vector<2x8x16xbf16>, vector<2x16x16xbf16>, vector<2x8x16xf32> -> vector<2x8x16xf32>
    "tpu.trace_stop"() : () -> ()
    %29 = vector.extract_strided_slice %28 {offsets = [0, 0, 0], sizes = [1, 8, 16], strides = [1, 1, 1]} : vector<2x8x16xf32> to vector<1x8x16xf32>
    %30 = vector.shape_cast %29 : vector<1x8x16xf32> to vector<8x16xf32>
    %31 = vector.extract_strided_slice %28 {offsets = [1, 0, 0], sizes = [1, 8, 16], strides = [1, 1, 1]} : vector<2x8x16xf32> to vector<1x8x16xf32>
    %32 = vector.shape_cast %31 : vector<1x8x16xf32> to vector<8x16xf32>
    %33 = tpu.concatenate %30, %32 in 1 : vector<8x16xf32>, vector<8x16xf32> -> vector<8x32xf32>
    %34 = arith.truncf %33 : vector<8x32xf32> to vector<8x32xbf16>
    %c0_19 = arith.constant 0 : index
    %c0_20 = arith.constant 0 : index
    %35 = vector.load %arg6[%c0_19, %c0_20] : memref<32x32xbf16, #tpu.memory_space<vmem>>, vector<32x32xbf16>
    %cst_21 = arith.constant dense<0.000000e+00> : vector<8x32xf32>
    %36 = tpu.matmul %34, %35, %cst_21 {dimension_numbers = #tpu.dot_dimension_numbers<[1], [0], [0], [1], [0, 0, 1, 1], [], []>} : vector<8x32xbf16>, vector<32x32xbf16>, vector<8x32xf32> -> vector<8x32xf32>
    %c0_22 = arith.constant 0 : index
    %c0_23 = arith.constant 0 : index
    %37 = vector.load %arg7[%c0_22, %c0_23] : memref<1x32xf32, #tpu.memory_space<vmem>>, vector<1x32xf32>
    %38 = vector.broadcast %37 : vector<1x32xf32> to vector<8x32xf32>
    %39 = arith.addf %36, %38 : vector<8x32xf32>
    %c0_24 = arith.constant 0 : index
    %40 = arith.index_cast %4 : i32 to index
    %c0_25 = arith.constant 0 : index
    %41 = vector.load %arg2[%c0_24, %40, %c0_25] : memref<1x16x32xf32, #tpu.memory_space<vmem>>, vector<1x8x32xf32>
    %42 = vector.shape_cast %41 : vector<1x8x32xf32> to vector<8x32xf32>
    %43 = arith.addf %39, %42 : vector<8x32xf32>
    %c0_26 = arith.constant 0 : index
    %c0_27 = arith.constant 0 : index
    %44 = vector.load %arg8[%c0_26, %c0_27] : memref<1x32xf32, #tpu.memory_space<vmem>>, vector<1x32xf32>
    %c0_28 = arith.constant 0 : index
    %c0_29 = arith.constant 0 : index
    %45 = vector.load %arg9[%c0_28, %c0_29] : memref<1x32xf32, #tpu.memory_space<vmem>>, vector<1x32xf32>
    %cst_30 = arith.constant dense<0.000000e+00> : vector<8xf32>
    %46 = vector.multi_reduction <add>, %43, %cst_30 [1] : vector<8x32xf32> to vector<8xf32>
    %47 = vector.shape_cast %46 : vector<8xf32> to vector<8x1xf32>
    %cst_31 = arith.constant 3.200000e+01 : f32
    %48 = vector.broadcast %cst_31 : f32 to vector<8x1xf32>
    %49 = arith.divf %47, %48 : vector<8x1xf32>
    %50 = vector.broadcast %49 : vector<8x1xf32> to vector<8x32xf32>
    %51 = arith.subf %43, %50 : vector<8x32xf32>
    %52 = arith.mulf %51, %51 : vector<8x32xf32>
    %cst_32 = arith.constant dense<0.000000e+00> : vector<8xf32>
    %53 = vector.multi_reduction <add>, %52, %cst_32 [1] : vector<8x32xf32> to vector<8xf32>
    %54 = vector.shape_cast %53 : vector<8xf32> to vector<8x1xf32>
    %cst_33 = arith.constant 3.200000e+01 : f32
    %55 = vector.broadcast %cst_33 : f32 to vector<8x1xf32>
    %56 = arith.divf %54, %55 : vector<8x1xf32>
    %57 = vector.broadcast %49 : vector<8x1xf32> to vector<8x32xf32>
    %58 = arith.subf %43, %57 : vector<8x32xf32>
    %cst_34 = arith.constant 9.99999974E-6 : f32
    %59 = vector.broadcast %cst_34 : f32 to vector<8x1xf32>
    %60 = arith.addf %56, %59 : vector<8x1xf32>
    %61 = math.rsqrt %60 : vector<8x1xf32>
    %62 = vector.broadcast %61 : vector<8x1xf32> to vector<8x32xf32>
    %63 = arith.mulf %58, %62 : vector<8x32xf32>
    %64 = vector.broadcast %44 : vector<1x32xf32> to vector<8x32xf32>
    %65 = arith.mulf %63, %64 : vector<8x32xf32>
    %66 = vector.broadcast %45 : vector<1x32xf32> to vector<8x32xf32>
    %67 = arith.addf %65, %66 : vector<8x32xf32>
    %68 = arith.truncf %67 : vector<8x32xf32> to vector<8x32xbf16>
    %c0_35 = arith.constant 0 : index
    %c0_36 = arith.constant 0 : index
    %69 = vector.load %arg10[%c0_35, %c0_36] : memref<32x64xbf16, #tpu.memory_space<vmem>>, vector<32x64xbf16>
    %cst_37 = arith.constant dense<0.000000e+00> : vector<8x64xf32>
    %70 = tpu.matmul %68, %69, %cst_37 {dimension_numbers = #tpu.dot_dimension_numbers<[1], [0], [0], [1], [0, 0, 1, 1], [], []>} : vector<8x32xbf16>, vector<32x64xbf16>, vector<8x64xf32> -> vector<8x64xf32>
    %c0_38 = arith.constant 0 : index
    %c0_39 = arith.constant 0 : index
    %71 = vector.load %arg11[%c0_38, %c0_39] : memref<1x64xf32, #tpu.memory_space<vmem>>, vector<1x64xf32>
    %72 = vector.broadcast %71 : vector<1x64xf32> to vector<8x64xf32>
    %73 = arith.addf %70, %72 : vector<8x64xf32>
    %cst_40 = arith.constant 0.000000e+00 : f32
    %74 = vector.broadcast %cst_40 : f32 to vector<8x64xf32>
    %75 = arith.maximumf %73, %74 : vector<8x64xf32>
    %76 = arith.truncf %75 : vector<8x64xf32> to vector<8x64xbf16>
    %c0_41 = arith.constant 0 : index
    %c0_42 = arith.constant 0 : index
    %77 = vector.load %arg12[%c0_41, %c0_42] : memref<64x32xbf16, #tpu.memory_space<vmem>>, vector<64x32xbf16>
    %cst_43 = arith.constant dense<0.000000e+00> : vector<8x32xf32>
    %78 = tpu.matmul %76, %77, %cst_43 {dimension_numbers = #tpu.dot_dimension_numbers<[1], [0], [0], [1], [0, 0, 1, 1], [], []>} : vector<8x64xbf16>, vector<64x32xbf16>, vector<8x32xf32> -> vector<8x32xf32>
    %c0_44 = arith.constant 0 : index
    %c0_45 = arith.constant 0 : index
    %79 = vector.load %arg13[%c0_44, %c0_45] : memref<1x32xf32, #tpu.memory_space<vmem>>, vector<1x32xf32>
    %80 = vector.broadcast %79 : vector<1x32xf32> to vector<8x32xf32>
    %81 = arith.addf %78, %80 : vector<8x32xf32>
    %82 = arith.addf %81, %67 : vector<8x32xf32>
    %c0_46 = arith.constant 0 : index
    %c0_47 = arith.constant 0 : index
    %83 = vector.load %arg14[%c0_46, %c0_47] : memref<1x32xf32, #tpu.memory_space<vmem>>, vector<1x32xf32>
    %c0_48 = arith.constant 0 : index
    %c0_49 = arith.constant 0 : index
    %84 = vector.load %arg15[%c0_48, %c0_49] : memref<1x32xf32, #tpu.memory_space<vmem>>, vector<1x32xf32>
    %cst_50 = arith.constant dense<0.000000e+00> : vector<8xf32>
    %85 = vector.multi_reduction <add>, %82, %cst_50 [1] : vector<8x32xf32> to vector<8xf32>
    %86 = vector.shape_cast %85 : vector<8xf32> to vector<8x1xf32>
    %cst_51 = arith.constant 3.200000e+01 : f32
    %87 = vector.broadcast %cst_51 : f32 to vector<8x1xf32>
    %88 = arith.divf %86, %87 : vector<8x1xf32>
    %89 = vector.broadcast %88 : vector<8x1xf32> to vector<8x32xf32>
    %90 = arith.subf %82, %89 : vector<8x32xf32>
    %91 = arith.mulf %90, %90 : vector<8x32xf32>
    %cst_52 = arith.constant dense<0.000000e+00> : vector<8xf32>
    %92 = vector.multi_reduction <add>, %91, %cst_52 [1] : vector<8x32xf32> to vector<8xf32>
    %93 = vector.shape_cast %92 : vector<8xf32> to vector<8x1xf32>
    %cst_53 = arith.constant 3.200000e+01 : f32
    %94 = vector.broadcast %cst_53 : f32 to vector<8x1xf32>
    %95 = arith.divf %93, %94 : vector<8x1xf32>
    %96 = vector.broadcast %88 : vector<8x1xf32> to vector<8x32xf32>
    %97 = arith.subf %82, %96 : vector<8x32xf32>
    %cst_54 = arith.constant 9.99999974E-6 : f32
    %98 = vector.broadcast %cst_54 : f32 to vector<8x1xf32>
    %99 = arith.addf %95, %98 : vector<8x1xf32>
    %100 = math.rsqrt %99 : vector<8x1xf32>
    %101 = vector.broadcast %100 : vector<8x1xf32> to vector<8x32xf32>
    %102 = arith.mulf %97, %101 : vector<8x32xf32>
    %103 = vector.broadcast %83 : vector<1x32xf32> to vector<8x32xf32>
    %104 = arith.mulf %102, %103 : vector<8x32xf32>
    %105 = vector.broadcast %84 : vector<1x32xf32> to vector<8x32xf32>
    %106 = arith.addf %104, %105 : vector<8x32xf32>
    %c0_55 = arith.constant 0 : index
    %c0_56 = arith.constant 0 : index
    %c0_57 = arith.constant 0 : index
    %107 = vector.load %arg16[%c0_55, %c0_56, %c0_57] : memref<1x8x32xf32, #tpu.memory_space<vmem>>, vector<1x8x32xf32>
    %108 = vector.shape_cast %107 : vector<1x8x32xf32> to vector<8x32xf32>
    %109 = vector.shape_cast %106 : vector<8x32xf32> to vector<1x8x32xf32>
    tpu.vector_store %arg16[%c0_55, %c0_56, %c0_57], %109 {strides = array<i32>} : memref<1x8x32xf32, #tpu.memory_space<vmem>>, vector<1x8x32xf32>,
    return
  }
  func.func @transform_0(%arg0: i32, %arg1: i32) -> (i32, i32, i32) {
    %c0_i32 = arith.constant 0 : i32
    %c0_i32_0 = arith.constant 0 : i32
    %c0_i32_1 = arith.constant 0 : i32
    return %arg0, %c0_i32, %c0_i32_0 : i32, i32, i32
  }
  func.func @transform_1(%arg0: i32, %arg1: i32) -> (i32, i32, i32) {
    %c0_i32 = arith.constant 0 : i32
    %c0_i32_0 = arith.constant 0 : i32
    %c0_i32_1 = arith.constant 0 : i32
    return %arg0, %c0_i32, %c0_i32_0 : i32, i32, i32
  }
  func.func @transform_2(%arg0: i32, %arg1: i32) -> (i32, i32) {
    %c0_i32 = arith.constant 0 : i32
    %c0_i32_0 = arith.constant 0 : i32
    %c0_i32_1 = arith.constant 0 : i32
    return %c0_i32, %c0_i32_0 : i32, i32
  }
  func.func @transform_3(%arg0: i32, %arg1: i32) -> (i32, i32) {
    %c0_i32 = arith.constant 0 : i32
    %c0_i32_0 = arith.constant 0 : i32
    %c0_i32_1 = arith.constant 0 : i32
    return %c0_i32, %c0_i32_0 : i32, i32
  }
  func.func @transform_4(%arg0: i32, %arg1: i32) -> (i32, i32) {
    %c0_i32 = arith.constant 0 : i32
    %c0_i32_0 = arith.constant 0 : i32
    %c0_i32_1 = arith.constant 0 : i32
    return %c0_i32, %c0_i32_0 : i32, i32
  }
  func.func @transform_5(%arg0: i32, %arg1: i32) -> (i32, i32) {
    %c0_i32 = arith.constant 0 : i32
    %c0_i32_0 = arith.constant 0 : i32
    %c0_i32_1 = arith.constant 0 : i32
    return %c0_i32, %c0_i32_0 : i32, i32
  }
  func.func @transform_6(%arg0: i32, %arg1: i32) -> (i32, i32) {
    %c0_i32 = arith.constant 0 : i32
    %c0_i32_0 = arith.constant 0 : i32
    %c0_i32_1 = arith.constant 0 : i32
    return %c0_i32, %c0_i32_0 : i32, i32
  }
  func.func @transform_7(%arg0: i32, %arg1: i32) -> (i32, i32) {
    %c0_i32 = arith.constant 0 : i32
    %c0_i32_0 = arith.constant 0 : i32
    %c0_i32_1 = arith.constant 0 : i32
    return %c0_i32, %c0_i32_0 : i32, i32
  }
  func.func @transform_8(%arg0: i32, %arg1: i32) -> (i32, i32) {
    %c0_i32 = arith.constant 0 : i32
    %c0_i32_0 = arith.constant 0 : i32
    %c0_i32_1 = arith.constant 0 : i32
    return %c0_i32, %c0_i32_0 : i32, i32
  }
  func.func @transform_9(%arg0: i32, %arg1: i32) -> (i32, i32) {
    %c0_i32 = arith.constant 0 : i32
    %c0_i32_0 = arith.constant 0 : i32
    %c0_i32_1 = arith.constant 0 : i32
    return %c0_i32, %c0_i32_0 : i32, i32
  }
  func.func @transform_10(%arg0: i32, %arg1: i32) -> (i32, i32) {
    %c0_i32 = arith.constant 0 : i32
    %c0_i32_0 = arith.constant 0 : i32
    %c0_i32_1 = arith.constant 0 : i32
    return %c0_i32, %c0_i32_0 : i32, i32
  }
  func.func @transform_11(%arg0: i32, %arg1: i32) -> (i32, i32) {
    %c0_i32 = arith.constant 0 : i32
    %c0_i32_0 = arith.constant 0 : i32
    %c0_i32_1 = arith.constant 0 : i32
    return %c0_i32, %c0_i32_0 : i32, i32
  }
  func.func @transform_12(%arg0: i32, %arg1: i32) -> (i32, i32) {
    %c0_i32 = arith.constant 0 : i32
    %c0_i32_0 = arith.constant 0 : i32
    %c0_i32_1 = arith.constant 0 : i32
    return %c0_i32, %c0_i32_0 : i32, i32
  }
  func.func @transform_13(%arg0: i32, %arg1: i32) -> (i32, i32) {
    %c0_i32 = arith.constant 0 : i32
    %c0_i32_0 = arith.constant 0 : i32
    %c0_i32_1 = arith.constant 0 : i32
    return %c0_i32, %c0_i32_0 : i32, i32
  }
  func.func @transform_14(%arg0: i32, %arg1: i32) -> (i32, i32, i32) {
    %c0_i32 = arith.constant 0 : i32
    %c0_i32_0 = arith.constant 0 : i32
    return %arg0, %arg1, %c0_i32 : i32, i32, i32
  }
  func.func @transform_15(%arg0: i32, %arg1: i32) -> (i32, i32, i32, i32) {
    %c0_i32 = arith.constant 0 : i32
    %c0_i32_0 = arith.constant 0 : i32
    %c0_i32_1 = arith.constant 0 : i32
    return %arg0, %c0_i32, %arg1, %c0_i32_0 : i32, i32, i32, i32
  }
}

module attributes {stable_mosaic.version = 11 : i64} {
  func.func @kernel(%arg0: i32, %arg1: i32, %arg2: memref<1x16x32xf32, #tpu.memory_space<vmem>>, %arg3: memref<1x1x16xf32, #tpu.memory_space<vmem>>, %arg4: memref<32x96xbf16, #tpu.memory_space<vmem>>, %arg5: memref<1x96xf32, #tpu.memory_space<vmem>>, %arg6: memref<32x32xbf16, #tpu.memory_space<vmem>>, %arg7: memref<1x32xf32, #tpu.memory_space<vmem>>, %arg8: memref<1x32xf32, #tpu.memory_space<vmem>>, %arg9: memref<1x32xf32, #tpu.memory_space<vmem>>, %arg10: memref<32x64xbf16, #tpu.memory_space<vmem>>, %arg11: memref<1x64xf32, #tpu.memory_space<vmem>>, %arg12: memref<64x32xbf16, #tpu.memory_space<vmem>>, %arg13: memref<1x32xf32, #tpu.memory_space<vmem>>, %arg14: memref<1x32xf32, #tpu.memory_space<vmem>>, %arg15: memref<1x32xf32, #tpu.memory_space<vmem>>, %arg16: memref<1x8x32xf32, #tpu.memory_space<vmem>>, %arg17: memref<1x2x8x16xbf16, #tpu.memory_space<vmem>>, %arg18: memref<2x16x16xbf16, #tpu.memory_space<vmem>>, %arg19: memref<2x16x16xbf16, #tpu.memory_space<vmem>>, %arg20: memref<2x16x16xbf16, #tpu.memory_space<vmem>>) attributes {dimension_semantics = [#tpu.dimension_semantics<parallel>, #tpu.dimension_semantics<arbitrary>], iteration_bounds = array<i64: 2, 2>, scalar_prefetch = 0 : i64, scratch_operands = 3 : i64, tpu.core_type = #tpu.core_type<tc>, window_params = [{transform_indices = @transform_0, window_bounds = array<i64: 1, 16, 32>}, {transform_indices = @transform_1, window_bounds = array<i64: 1, 1, 16>}, {pipeline_mode = #tpu.pipeline_mode<synchronous>, transform_indices = @transform_2, window_bounds = array<i64: 32, 96>}, {pipeline_mode = #tpu.pipeline_mode<synchronous>, transform_indices = @transform_3, window_bounds = array<i64: 1, 96>}, {pipeline_mode = #tpu.pipeline_mode<synchronous>, transform_indices = @transform_4, window_bounds = array<i64: 32, 32>}, {pipeline_mode = #tpu.pipeline_mode<synchronous>, transform_indices = @transform_5, window_bounds = array<i64: 1, 32>}, {pipeline_mode = #tpu.pipeline_mode<synchronous>, transform_indices = @transform_6, window_bounds = array<i64: 1, 32>}, {pipeline_mode = #tpu.pipeline_mode<synchronous>, transform_indices = @transform_7, window_bounds = array<i64: 1, 32>}, {pipeline_mode = #tpu.pipeline_mode<synchronous>, transform_indices = @transform_8, window_bounds = array<i64: 32, 64>}, {pipeline_mode = #tpu.pipeline_mode<synchronous>, transform_indices = @transform_9, window_bounds = array<i64: 1, 64>}, {pipeline_mode = #tpu.pipeline_mode<synchronous>, transform_indices = @transform_10, window_bounds = array<i64: 64, 32>}, {pipeline_mode = #tpu.pipeline_mode<synchronous>, transform_indices = @transform_11, window_bounds = array<i64: 1, 32>}, {pipeline_mode = #tpu.pipeline_mode<synchronous>, transform_indices = @transform_12, window_bounds = array<i64: 1, 32>}, {pipeline_mode = #tpu.pipeline_mode<synchronous>, transform_indices = @transform_13, window_bounds = array<i64: 1, 32>}, {transform_indices = @transform_14, window_bounds = array<i64: 1, 8, 32>}, {transform_indices = @transform_15, window_bounds = array<i64: 1, 2, 8, 16>}]} {
    %c0_i32 = arith.constant 0 : i32
    %0 = arith.cmpi eq, %arg1, %c0_i32 : i32
    %1 = arith.extui %0 : i1 to i32
    %c0_i32_0 = arith.constant 0 : i32
    %2 = arith.cmpi ne, %1, %c0_i32_0 : i32
    scf.if %2 {
      %c0_58 = arith.constant 0 : index
      %c0_59 = arith.constant 0 : index
      %c0_60 = arith.constant 0 : index
      %110 = vector.load %arg2[%c0_58, %c0_59, %c0_60] : memref<1x16x32xf32, #tpu.memory_space<vmem>>, vector<1x16x32xf32>
      %111 = vector.shape_cast %110 : vector<1x16x32xf32> to vector<16x32xf32>
      %112 = arith.truncf %111 : vector<16x32xf32> to vector<16x32xbf16>
      %c0_61 = arith.constant 0 : index
      %c0_62 = arith.constant 0 : index
      %113 = vector.load %arg4[%c0_61, %c0_62] : memref<32x96xbf16, #tpu.memory_space<vmem>>, vector<32x96xbf16>
      %cst_63 = arith.constant dense<0.000000e+00> : vector<16x96xf32>
      %114 = tpu.matmul %112, %113, %cst_63 {dimension_numbers = #tpu.dot_dimension_numbers<[1], [0], [0], [1], [0, 0, 1, 1], [], []>} : vector<16x32xbf16>, vector<32x96xbf16>, vector<16x96xf32> -> vector<16x96xf32>
      %c0_64 = arith.constant 0 : index
      %c0_65 = arith.constant 0 : index
      %115 = vector.load %arg5[%c0_64, %c0_65] : memref<1x96xf32, #tpu.memory_space<vmem>>, vector<1x96xf32>
      %116 = vector.broadcast %115 : vector<1x96xf32> to vector<16x96xf32>
      %117 = arith.addf %114, %116 : vector<16x96xf32>
      %118 = arith.truncf %117 : vector<16x96xf32> to vector<16x96xbf16>
      %119 = vector.extract_strided_slice %118 {offsets = [0, 0], sizes = [16, 16], strides = [1, 1]} : vector<16x96xbf16> to vector<16x16xbf16>
      %c0_66 = arith.constant 0 : index
      %c0_67 = arith.constant 0 : index
      %c0_68 = arith.constant 0 : index
      %120 = vector.load %arg18[%c0_66, %c0_67, %c0_68] : memref<2x16x16xbf16, #tpu.memory_space<vmem>>, vector<1x16x16xbf16>
      %121 = vector.shape_cast %120 : vector<1x16x16xbf16> to vector<16x16xbf16>
      %122 = vector.shape_cast %119 : vector<16x16xbf16> to vector<1x16x16xbf16>
      tpu.vector_store %arg18[%c0_66, %c0_67, %c0_68], %122 {strides = array<i32>} : memref<2x16x16xbf16, #tpu.memory_space<vmem>>, vector<1x16x16xbf16>,
      %123 = vector.extract_strided_slice %118 {offsets = [0, 32], sizes = [16, 16], strides = [1, 1]} : vector<16x96xbf16> to vector<16x16xbf16>
      %c0_69 = arith.constant 0 : index
      %c0_70 = arith.constant 0 : index
      %c0_71 = arith.constant 0 : index
      %124 = vector.load %arg19[%c0_69, %c0_70, %c0_71] : memref<2x16x16xbf16, #tpu.memory_space<vmem>>, vector<1x16x16xbf16>
      %125 = vector.shape_cast %124 : vector<1x16x16xbf16> to vector<16x16xbf16>
      %126 = vector.shape_cast %123 : vector<16x16xbf16> to vector<1x16x16xbf16>
      tpu.vector_store %arg19[%c0_69, %c0_70, %c0_71], %126 {strides = array<i32>} : memref<2x16x16xbf16, #tpu.memory_space<vmem>>, vector<1x16x16xbf16>,
      %127 = vector.extract_strided_slice %118 {offsets = [0, 64], sizes = [16, 16], strides = [1, 1]} : vector<16x96xbf16> to vector<16x16xbf16>
      %c0_72 = arith.constant 0 : index
      %c0_73 = arith.constant 0 : index
      %c0_74 = arith.constant 0 : index
      %128 = vector.load %arg20[%c0_72, %c0_73, %c0_74] : memref<2x16x16xbf16, #tpu.memory_space<vmem>>, vector<1x16x16xbf16>
      %129 = vector.shape_cast %128 : vector<1x16x16xbf16> to vector<16x16xbf16>
      %130 = vector.shape_cast %127 : vector<16x16xbf16> to vector<1x16x16xbf16>
      tpu.vector_store %arg20[%c0_72, %c0_73, %c0_74], %130 {strides = array<i32>} : memref<2x16x16xbf16, #tpu.memory_space<vmem>>, vector<1x16x16xbf16>,
      %131 = vector.extract_strided_slice %118 {offsets = [0, 16], sizes = [16, 16], strides = [1, 1]} : vector<16x96xbf16> to vector<16x16xbf16>
      %c1 = arith.constant 1 : index
      %c0_75 = arith.constant 0 : index
      %c0_76 = arith.constant 0 : index
      %132 = vector.load %arg18[%c1, %c0_75, %c0_76] : memref<2x16x16xbf16, #tpu.memory_space<vmem>>, vector<1x16x16xbf16>
      %133 = vector.shape_cast %132 : vector<1x16x16xbf16> to vector<16x16xbf16>
      %134 = vector.shape_cast %131 : vector<16x16xbf16> to vector<1x16x16xbf16>
      tpu.vector_store %arg18[%c1, %c0_75, %c0_76], %134 {strides = array<i32>} : memref<2x16x16xbf16, #tpu.memory_space<vmem>>, vector<1x16x16xbf16>,
      %135 = vector.extract_strided_slice %118 {offsets = [0, 48], sizes = [16, 16], strides = [1, 1]} : vector<16x96xbf16> to vector<16x16xbf16>
      %c1_77 = arith.constant 1 : index
      %c0_78 = arith.constant 0 : index
      %c0_79 = arith.constant 0 : index
      %136 = vector.load %arg19[%c1_77, %c0_78, %c0_79] : memref<2x16x16xbf16, #tpu.memory_space<vmem>>, vector<1x16x16xbf16>
      %137 = vector.shape_cast %136 : vector<1x16x16xbf16> to vector<16x16xbf16>
      %138 = vector.shape_cast %135 : vector<16x16xbf16> to vector<1x16x16xbf16>
      tpu.vector_store %arg19[%c1_77, %c0_78, %c0_79], %138 {strides = array<i32>} : memref<2x16x16xbf16, #tpu.memory_space<vmem>>, vector<1x16x16xbf16>,
      %139 = vector.extract_strided_slice %118 {offsets = [0, 80], sizes = [16, 16], strides = [1, 1]} : vector<16x96xbf16> to vector<16x16xbf16>
      %c1_80 = arith.constant 1 : index
      %c0_81 = arith.constant 0 : index
      %c0_82 = arith.constant 0 : index
      %140 = vector.load %arg20[%c1_80, %c0_81, %c0_82] : memref<2x16x16xbf16, #tpu.memory_space<vmem>>, vector<1x16x16xbf16>
      %141 = vector.shape_cast %140 : vector<1x16x16xbf16> to vector<16x16xbf16>
      %142 = vector.shape_cast %139 : vector<16x16xbf16> to vector<1x16x16xbf16>
      tpu.vector_store %arg20[%c1_80, %c0_81, %c0_82], %142 {strides = array<i32>} : memref<2x16x16xbf16, #tpu.memory_space<vmem>>, vector<1x16x16xbf16>,
    } else {
    }
    %c8_i32 = arith.constant 8 : i32
    %3 = arith.muli %arg1, %c8_i32 : i32
    %4 = tpu.assume_multiple %3, 8 : i32
    %c0 = arith.constant 0 : index
    %5 = arith.index_cast %4 : i32 to index
    %c0_1 = arith.constant 0 : index
    %6 = vector.load %arg18[%c0, %5, %c0_1] : memref<2x16x16xbf16, #tpu.memory_space<vmem>>, vector<2x8x16xbf16>
    %c0_2 = arith.constant 0 : index
    %c0_3 = arith.constant 0 : index
    %c0_4 = arith.constant 0 : index
    %7 = vector.load %arg19[%c0_2, %c0_3, %c0_4] : memref<2x16x16xbf16, #tpu.memory_space<vmem>>, vector<2x16x16xbf16>
    "tpu.trace_start"() <{level = 10 : i32, message = "hqc,hkc->hqk"}> : () -> ()
    %cst = arith.constant dense<0.000000e+00> : vector<2x8x16xf32>
    %8 = tpu.matmul %6, %7, %cst {dimension_numbers = #tpu.dot_dimension_numbers<[2], [2], [1], [1], [0, 0, 0, 1, 1, 1], [0], [0]>} : vector<2x8x16xbf16>, vector<2x16x16xbf16>, vector<2x8x16xf32> -> vector<2x8x16xf32>
    "tpu.trace_stop"() : () -> ()
    %c0_5 = arith.constant 0 : index
    %c0_6 = arith.constant 0 : index
    %c0_7 = arith.constant 0 : index
    %9 = vector.load %arg3[%c0_5, %c0_6, %c0_7] : memref<1x1x16xf32, #tpu.memory_space<vmem>>, vector<1x1x16xf32>
    %10 = vector.broadcast %9 : vector<1x1x16xf32> to vector<2x8x16xf32>
    %11 = arith.addf %8, %10 : vector<2x8x16xf32>
    %cst_8 = arith.constant dense<0xFF800000> : vector<2x8xf32>
    %12 = vector.multi_reduction <maximumf>, %11, %cst_8 [2] : vector<2x8x16xf32> to vector<2x8xf32>
    %13 = vector.shape_cast %12 : vector<2x8xf32> to vector<2x8x1xf32>
    %14 = vector.broadcast %13 : vector<2x8x1xf32> to vector<2x8x16xf32>
    %15 = arith.subf %11, %14 : vector<2x8x16xf32>
    %16 = math.exp %15 : vector<2x8x16xf32>
    %cst_9 = arith.constant dense<0.000000e+00> : vector<2x8xf32>
    %17 = vector.multi_reduction <add>, %16, %cst_9 [2] : vector<2x8x16xf32> to vector<2x8xf32>
    %18 = vector.shape_cast %17 : vector<2x8xf32> to vector<2x8x1xf32>
    %cst_10 = arith.constant 1.000000e+00 : f32
    %19 = vector.broadcast %cst_10 : f32 to vector<2x8x1xf32>
    %20 = arith.divf %19, %18 : vector<2x8x1xf32>
    %21 = vector.broadcast %20 : vector<2x8x1xf32> to vector<2x8x16xf32>
    %22 = arith.mulf %16, %21 : vector<2x8x16xf32>
    %23 = arith.truncf %22 : vector<2x8x16xf32> to vector<2x8x16xbf16>
    %c0_11 = arith.constant 0 : index
    %c0_12 = arith.constant 0 : index
    %c0_13 = arith.constant 0 : index
    %c0_14 = arith.constant 0 : index
    %24 = vector.load %arg17[%c0_11, %c0_12, %c0_13, %c0_14] : memref<1x2x8x16xbf16, #tpu.memory_space<vmem>>, vector<1x2x8x16xbf16>
    %25 = vector.shape_cast %24 : vector<1x2x8x16xbf16> to vector<2x8x16xbf16>
    %26 = vector.shape_cast %23 : vector<2x8x16xbf16> to vector<1x2x8x16xbf16>
    tpu.vector_store %arg17[%c0_11, %c0_12, %c0_13, %c0_14], %26 {strides = array<i32>} : memref<1x2x8x16xbf16, #tpu.memory_space<vmem>>, vector<1x2x8x16xbf16>,
    %c0_15 = arith.constant 0 : index
    %c0_16 = arith.constant 0 : index
    %c0_17 = arith.constant 0 : index
    %27 = vector.load %arg20[%c0_15, %c0_16, %c0_17] : memref<2x16x16xbf16, #tpu.memory_space<vmem>>, vector<2x16x16xbf16>
    "tpu.trace_start"() <{level = 10 : i32, message = "hqk,hkv->hqv"}> : () -> ()
    %cst_18 = arith.constant dense<0.000000e+00> : vector<2x8x16xf32>
    %28 = tpu.matmul %23, %27, %cst_18 {dimension_numbers = #tpu.dot_dimension_numbers<[2], [1], [1], [2], [0, 0, 0, 1, 1, 2], [0], [0]>} : vector<2x8x16xbf16>, vector<2x16x16xbf16>, vector<2x8x16xf32> -> vector<2x8x16xf32>
    "tpu.trace_stop"() : () -> ()
    %29 = vector.extract_strided_slice %28 {offsets = [0, 0, 0], sizes = [1, 8, 16], strides = [1, 1, 1]} : vector<2x8x16xf32> to vector<1x8x16xf32>
    %30 = vector.shape_cast %29 : vector<1x8x16xf32> to vector<8x16xf32>
    %31 = vector.extract_strided_slice %28 {offsets = [1, 0, 0], sizes = [1, 8, 16], strides = [1, 1, 1]} : vector<2x8x16xf32> to vector<1x8x16xf32>
    %32 = vector.shape_cast %31 : vector<1x8x16xf32> to vector<8x16xf32>
    %33 = tpu.concatenate %30, %32 in 1 : vector<8x16xf32>, vector<8x16xf32> -> vector<8x32xf32>
    %34 = arith.truncf %33 : vector<8x32xf32> to vector<8x32xbf16>
    %c0_19 = arith.constant 0 : index
    %c0_20 = arith.constant 0 : index
    %35 = vector.load %arg6[%c0_19, %c0_20] : memref<32x32xbf16, #tpu.memory_space<vmem>>, vector<32x32xbf16>
    %cst_21 = arith.constant dense<0.000000e+00> : vector<8x32xf32>
    %36 = tpu.matmul %34, %35, %cst_21 {dimension_numbers = #tpu.dot_dimension_numbers<[1], [0], [0], [1], [0, 0, 1, 1], [], []>} : vector<8x32xbf16>, vector<32x32xbf16>, vector<8x32xf32> -> vector<8x32xf32>
    %c0_22 = arith.constant 0 : index
    %c0_23 = arith.constant 0 : index
    %37 = vector.load %arg7[%c0_22, %c0_23] : memref<1x32xf32, #tpu.memory_space<vmem>>, vector<1x32xf32>
    %38 = vector.broadcast %37 : vector<1x32xf32> to vector<8x32xf32>
    %39 = arith.addf %36, %38 : vector<8x32xf32>
    %c0_24 = arith.constant 0 : index
    %40 = arith.index_cast %4 : i32 to index
    %c0_25 = arith.constant 0 : index
    %41 = vector.load %arg2[%c0_24, %40, %c0_25] : memref<1x16x32xf32, #tpu.memory_space<vmem>>, vector<1x8x32xf32>
    %42 = vector.shape_cast %41 : vector<1x8x32xf32> to vector<8x32xf32>
    %43 = arith.addf %39, %42 : vector<8x32xf32>
    %c0_26 = arith.constant 0 : index
    %c0_27 = arith.constant 0 : index
    %44 = vector.load %arg8[%c0_26, %c0_27] : memref<1x32xf32, #tpu.memory_space<vmem>>, vector<1x32xf32>
    %c0_28 = arith.constant 0 : index
    %c0_29 = arith.constant 0 : index
    %45 = vector.load %arg9[%c0_28, %c0_29] : memref<1x32xf32, #tpu.memory_space<vmem>>, vector<1x32xf32>
    %cst_30 = arith.constant dense<0.000000e+00> : vector<8xf32>
    %46 = vector.multi_reduction <add>, %43, %cst_30 [1] : vector<8x32xf32> to vector<8xf32>
    %47 = vector.shape_cast %46 : vector<8xf32> to vector<8x1xf32>
    %cst_31 = arith.constant 3.200000e+01 : f32
    %48 = vector.broadcast %cst_31 : f32 to vector<8x1xf32>
    %49 = arith.divf %47, %48 : vector<8x1xf32>
    %50 = vector.broadcast %49 : vector<8x1xf32> to vector<8x32xf32>
    %51 = arith.subf %43, %50 : vector<8x32xf32>
    %52 = arith.mulf %51, %51 : vector<8x32xf32>
    %cst_32 = arith.constant dense<0.000000e+00> : vector<8xf32>
    %53 = vector.multi_reduction <add>, %52, %cst_32 [1] : vector<8x32xf32> to vector<8xf32>
    %54 = vector.shape_cast %53 : vector<8xf32> to vector<8x1xf32>
    %cst_33 = arith.constant 3.200000e+01 : f32
    %55 = vector.broadcast %cst_33 : f32 to vector<8x1xf32>
    %56 = arith.divf %54, %55 : vector<8x1xf32>
    %57 = vector.broadcast %49 : vector<8x1xf32> to vector<8x32xf32>
    %58 = arith.subf %43, %57 : vector<8x32xf32>
    %cst_34 = arith.constant 9.99999974E-6 : f32
    %59 = vector.broadcast %cst_34 : f32 to vector<8x1xf32>
    %60 = arith.addf %56, %59 : vector<8x1xf32>
    %61 = math.rsqrt %60 : vector<8x1xf32>
    %62 = vector.broadcast %61 : vector<8x1xf32> to vector<8x32xf32>
    %63 = arith.mulf %58, %62 : vector<8x32xf32>
    %64 = vector.broadcast %44 : vector<1x32xf32> to vector<8x32xf32>
    %65 = arith.mulf %63, %64 : vector<8x32xf32>
    %66 = vector.broadcast %45 : vector<1x32xf32> to vector<8x32xf32>
    %67 = arith.addf %65, %66 : vector<8x32xf32>
    %68 = arith.truncf %67 : vector<8x32xf32> to vector<8x32xbf16>
    %c0_35 = arith.constant 0 : index
    %c0_36 = arith.constant 0 : index
    %69 = vector.load %arg10[%c0_35, %c0_36] : memref<32x64xbf16, #tpu.memory_space<vmem>>, vector<32x64xbf16>
    %cst_37 = arith.constant dense<0.000000e+00> : vector<8x64xf32>
    %70 = tpu.matmul %68, %69, %cst_37 {dimension_numbers = #tpu.dot_dimension_numbers<[1], [0], [0], [1], [0, 0, 1, 1], [], []>} : vector<8x32xbf16>, vector<32x64xbf16>, vector<8x64xf32> -> vector<8x64xf32>
    %c0_38 = arith.constant 0 : index
    %c0_39 = arith.constant 0 : index
    %71 = vector.load %arg11[%c0_38, %c0_39] : memref<1x64xf32, #tpu.memory_space<vmem>>, vector<1x64xf32>
    %72 = vector.broadcast %71 : vector<1x64xf32> to vector<8x64xf32>
    %73 = arith.addf %70, %72 : vector<8x64xf32>
    %cst_40 = arith.constant 0.000000e+00 : f32
    %74 = vector.broadcast %cst_40 : f32 to vector<8x64xf32>
    %75 = arith.maximumf %73, %74 : vector<8x64xf32>
    %76 = arith.truncf %75 : vector<8x64xf32> to vector<8x64xbf16>
    %c0_41 = arith.constant 0 : index
    %c0_42 = arith.constant 0 : index
    %77 = vector.load %arg12[%c0_41, %c0_42] : memref<64x32xbf16, #tpu.memory_space<vmem>>, vector<64x32xbf16>
    %cst_43 = arith.constant dense<0.000000e+00> : vector<8x32xf32>
    %78 = tpu.matmul %76, %77, %cst_43 {dimension_numbers = #tpu.dot_dimension_numbers<[1], [0], [0], [1], [0, 0, 1, 1], [], []>} : vector<8x64xbf16>, vector<64x32xbf16>, vector<8x32xf32> -> vector<8x32xf32>
    %c0_44 = arith.constant 0 : index
    %c0_45 = arith.constant 0 : index
    %79 = vector.load %arg13[%c0_44, %c0_45] : memref<1x32xf32, #tpu.memory_space<vmem>>, vector<1x32xf32>
    %80 = vector.broadcast %79 : vector<1x32xf32> to vector<8x32xf32>
    %81 = arith.addf %78, %80 : vector<8x32xf32>
    %82 = arith.addf %81, %67 : vector<8x32xf32>
    %c0_46 = arith.constant 0 : index
    %c0_47 = arith.constant 0 : index
    %83 = vector.load %arg14[%c0_46, %c0_47] : memref<1x32xf32, #tpu.memory_space<vmem>>, vector<1x32xf32>
    %c0_48 = arith.constant 0 : index
    %c0_49 = arith.constant 0 : index
    %84 = vector.load %arg15[%c0_48, %c0_49] : memref<1x32xf32, #tpu.memory_space<vmem>>, vector<1x32xf32>
    %cst_50 = arith.constant dense<0.000000e+00> : vector<8xf32>
    %85 = vector.multi_reduction <add>, %82, %cst_50 [1] : vector<8x32xf32> to vector<8xf32>
    %86 = vector.shape_cast %85 : vector<8xf32> to vector<8x1xf32>
    %cst_51 = arith.constant 3.200000e+01 : f32
    %87 = vector.broadcast %cst_51 : f32 to vector<8x1xf32>
    %88 = arith.divf %86, %87 : vector<8x1xf32>
    %89 = vector.broadcast %88 : vector<8x1xf32> to vector<8x32xf32>
    %90 = arith.subf %82, %89 : vector<8x32xf32>
    %91 = arith.mulf %90, %90 : vector<8x32xf32>
    %cst_52 = arith.constant dense<0.000000e+00> : vector<8xf32>
    %92 = vector.multi_reduction <add>, %91, %cst_52 [1] : vector<8x32xf32> to vector<8xf32>
    %93 = vector.shape_cast %92 : vector<8xf32> to vector<8x1xf32>
    %cst_53 = arith.constant 3.200000e+01 : f32
    %94 = vector.broadcast %cst_53 : f32 to vector<8x1xf32>
    %95 = arith.divf %93, %94 : vector<8x1xf32>
    %96 = vector.broadcast %88 : vector<8x1xf32> to vector<8x32xf32>
    %97 = arith.subf %82, %96 : vector<8x32xf32>
    %cst_54 = arith.constant 9.99999974E-6 : f32
    %98 = vector.broadcast %cst_54 : f32 to vector<8x1xf32>
    %99 = arith.addf %95, %98 : vector<8x1xf32>
    %100 = math.rsqrt %99 : vector<8x1xf32>
    %101 = vector.broadcast %100 : vector<8x1xf32> to vector<8x32xf32>
    %102 = arith.mulf %97, %101 : vector<8x32xf32>
    %103 = vector.broadcast %83 : vector<1x32xf32> to vector<8x32xf32>
    %104 = arith.mulf %102, %103 : vector<8x32xf32>
    %105 = vector.broadcast %84 : vector<1x32xf32> to vector<8x32xf32>
    %106 = arith.addf %104, %105 : vector<8x32xf32>
    %c0_55 = arith.constant 0 : index
    %c0_56 = arith.constant 0 : index
    %c0_57 = arith.constant 0 : index
    %107 = vector.load %arg16[%c0_55, %c0_56, %c0_57] : memref<1x8x32xf32, #tpu.memory_space<vmem>>, vector<1x8x32xf32>
    %108 = vector.shape_cast %107 : vector<1x8x32xf32> to vector<8x32xf32>
    %109 = vector.shape_cast %106 : vector<8x32xf32> to vector<1x8x32xf32>
    tpu.vector_store %arg16[%c0_55, %c0_56, %c0_57], %109 {strides = array<i32>} : memref<1x8x32xf32, #tpu.memory_space<vmem>>, vector<1x8x32xf32>,
    return
  }
  func.func @transform_0(%arg0: i32, %arg1: i32) -> (i32, i32, i32) {
    %c0_i32 = arith.constant 0 : i32
    %c0_i32_0 = arith.constant 0 : i32
    %c0_i32_1 = arith.constant 0 : i32
    return %arg0, %c0_i32, %c0_i32_0 : i32, i32, i32
  }
  func.func @transform_1(%arg0: i32, %arg1: i32) -> (i32, i32, i32) {
    %c0_i32 = arith.constant 0 : i32
    %c0_i32_0 = arith.constant 0 : i32
    %c0_i32_1 = arith.constant 0 : i32
    return %arg0, %c0_i32, %c0_i32_0 : i32, i32, i32
  }
  func.func @transform_2(%arg0: i32, %arg1: i32) -> (i32, i32) {
    %c0_i32 = arith.constant 0 : i32
    %c0_i32_0 = arith.constant 0 : i32
    %c0_i32_1 = arith.constant 0 : i32
    return %c0_i32, %c0_i32_0 : i32, i32
  }
  func.func @transform_3(%arg0: i32, %arg1: i32) -> (i32, i32) {
    %c0_i32 = arith.constant 0 : i32
    %c0_i32_0 = arith.constant 0 : i32
    %c0_i32_1 = arith.constant 0 : i32
    return %c0_i32, %c0_i32_0 : i32, i32
  }
  func.func @transform_4(%arg0: i32, %arg1: i32) -> (i32, i32) {
    %c0_i32 = arith.constant 0 : i32
    %c0_i32_0 = arith.constant 0 : i32
    %c0_i32_1 = arith.constant 0 : i32
    return %c0_i32, %c0_i32_0 : i32, i32
  }
  func.func @transform_5(%arg0: i32, %arg1: i32) -> (i32, i32) {
    %c0_i32 = arith.constant 0 : i32
    %c0_i32_0 = arith.constant 0 : i32
    %c0_i32_1 = arith.constant 0 : i32
    return %c0_i32, %c0_i32_0 : i32, i32
  }
  func.func @transform_6(%arg0: i32, %arg1: i32) -> (i32, i32) {
    %c0_i32 = arith.constant 0 : i32
    %c0_i32_0 = arith.constant 0 : i32
    %c0_i32_1 = arith.constant 0 : i32
    return %c0_i32, %c0_i32_0 : i32, i32
  }
  func.func @transform_7(%arg0: i32, %arg1: i32) -> (i32, i32) {
    %c0_i32 = arith.constant 0 : i32
    %c0_i32_0 = arith.constant 0 : i32
    %c0_i32_1 = arith.constant 0 : i32
    return %c0_i32, %c0_i32_0 : i32, i32
  }
  func.func @transform_8(%arg0: i32, %arg1: i32) -> (i32, i32) {
    %c0_i32 = arith.constant 0 : i32
    %c0_i32_0 = arith.constant 0 : i32
    %c0_i32_1 = arith.constant 0 : i32
    return %c0_i32, %c0_i32_0 : i32, i32
  }
  func.func @transform_9(%arg0: i32, %arg1: i32) -> (i32, i32) {
    %c0_i32 = arith.constant 0 : i32
    %c0_i32_0 = arith.constant 0 : i32
    %c0_i32_1 = arith.constant 0 : i32
    return %c0_i32, %c0_i32_0 : i32, i32
  }
  func.func @transform_10(%arg0: i32, %arg1: i32) -> (i32, i32) {
    %c0_i32 = arith.constant 0 : i32
    %c0_i32_0 = arith.constant 0 : i32
    %c0_i32_1 = arith.constant 0 : i32
    return %c0_i32, %c0_i32_0 : i32, i32
  }
  func.func @transform_11(%arg0: i32, %arg1: i32) -> (i32, i32) {
    %c0_i32 = arith.constant 0 : i32
    %c0_i32_0 = arith.constant 0 : i32
    %c0_i32_1 = arith.constant 0 : i32
    return %c0_i32, %c0_i32_0 : i32, i32
  }
  func.func @transform_12(%arg0: i32, %arg1: i32) -> (i32, i32) {
    %c0_i32 = arith.constant 0 : i32
    %c0_i32_0 = arith.constant 0 : i32
    %c0_i32_1 = arith.constant 0 : i32
    return %c0_i32, %c0_i32_0 : i32, i32
  }
  func.func @transform_13(%arg0: i32, %arg1: i32) -> (i32, i32) {
    %c0_i32 = arith.constant 0 : i32
    %c0_i32_0 = arith.constant 0 : i32
    %c0_i32_1 = arith.constant 0 : i32
    return %c0_i32, %c0_i32_0 : i32, i32
  }
  func.func @transform_14(%arg0: i32, %arg1: i32) -> (i32, i32, i32) {
    %c0_i32 = arith.constant 0 : i32
    %c0_i32_0 = arith.constant 0 : i32
    return %arg0, %arg1, %c0_i32 : i32, i32, i32
  }
  func.func @transform_15(%arg0: i32, %arg1: i32) -> (i32, i32, i32, i32) {
    %c0_i32 = arith.constant 0 : i32
    %c0_i32_0 = arith.constant 0 : i32
    %c0_i32_1 = arith.constant 0 : i32
    return %arg0, %c0_i32, %arg1, %c0_i32_0 : i32, i32, i32, i32
  }
}

</mosaic_0001>

<llo_original>
// kernel: tpu_custom_call.1
$region0: #{tpu_custom_call.1}
  #allocation0 [shape = 'u32[]', space=smem, size = 0x4, offset = 0x4, fixed_abs, tag = 'smem constant byte address 0x4 - core index']
  #allocation1 [shape = 'u32[72,128]{1,0:T(1,128)}', space=vmem, size = 0x9000, scoped, tag = 'internal scratch']
  #allocation2 [shape = 'bf16[2,16,16]{2,1,0:T(8,128)(2,1)}', space=vmem, size = 0x2000, scoped, tag = 'scratch operand']
  #allocation3 [shape = 'bf16[2,16,16]{2,1,0:T(8,128)(2,1)}', space=vmem, size = 0x2000, scoped, tag = 'scratch operand']
  #allocation4 [shape = 'bf16[2,16,16]{2,1,0:T(8,128)(2,1)}', space=vmem, size = 0x2000, scoped, tag = 'scratch operand']
  %s0 = inlined_call_operand.vmem [shape: f32[2,16,32], index: 0, kind: input, shape index: {}]
  %s1 = inlined_call_operand.hbm [shape: f32[2,1,16], index: 1, kind: input, shape index: {}]
  %s2 = inlined_call_operand.vmem [shape: bf16[32,96], index: 2, kind: input, shape index: {}]
  %s3 = inlined_call_operand.vmem [shape: f32[1,96], index: 3, kind: input, shape index: {}]
  %s4 = inlined_call_operand.hbm [shape: bf16[32,32], index: 4, kind: input, shape index: {}]
  %s5 = inlined_call_operand.vmem [shape: f32[1,32], index: 5, kind: input, shape index: {}]
  %s6 = inlined_call_operand.vmem [shape: f32[1,32], index: 6, kind: input, shape index: {}]
  %s7 = inlined_call_operand.vmem [shape: f32[1,32], index: 7, kind: input, shape index: {}]
  %s8 = inlined_call_operand.hbm [shape: bf16[32,64], index: 8, kind: input, shape index: {}]
  %s9 = inlined_call_operand.vmem [shape: f32[1,64], index: 9, kind: input, shape index: {}]
  %s10 = inlined_call_operand.vmem [shape: bf16[64,32], index: 10, kind: input, shape index: {}]
  %s11 = inlined_call_operand.vmem [shape: f32[1,32], index: 11, kind: input, shape index: {}]
  %s12 = inlined_call_operand.vmem [shape: f32[1,32], index: 12, kind: input, shape index: {}]
  %s13 = inlined_call_operand.vmem [shape: f32[1,32], index: 13, kind: input, shape index: {}]
  %s14 = inlined_call_operand.hbm [shape: f32[2,16,32], index: 14, kind: output, shape index: {0}]
  %s15 = inlined_call_operand.hbm [shape: bf16[2,2,16,16], index: 15, kind: output, shape index: {1}]
  %16 = xla_tuple %s14, %s15
  %s17 = sld [smem:[#allocation0]]
  $region113: #{tpu_custom_call.1} parent=0
    _
  %s19 = ssub.s32 1, %s17
  %s20 = scalar_select 0, %s19, %s17
  $region1: #{tpu_custom_call.1} parent=0
    #allocation5 [shape = 'u8[1024]{0}', space=vmem, size = 0x400, scoped, tag = 'input window, operand 1']
    #allocation6 [shape = 's32[2]{0}', space=sflag, size = 0x8, scoped, tag = 'scoped memory for tpu_custom_call.1']
    #allocation7 [shape = 's32[2]{0}', space=sflag, size = 0x8, scoped, tag = 'scoped memory for tpu_custom_call.1']
    #allocation8 [shape = 'u8[8192]{0}', space=vmem, size = 0x2000, scoped, tag = 'input window, operand 4, single buffered']
    #allocation9 [shape = 's32[1]{0}', space=sflag, size = 0x4, scoped, tag = 'scoped memory for tpu_custom_call.1']
    #allocation10 [shape = 'u8[8192]{0}', space=vmem, size = 0x2000, scoped, tag = 'input window, operand 8, single buffered']
    #allocation11 [shape = 'u8[8192]{0}', space=vmem, size = 0x2000, scoped, tag = 'output window, operand 0']
    #allocation12 [shape = 'u8[8192]{0}', space=vmem, size = 0x2000, scoped, tag = 'output window, operand 1']
    #allocation13 [shape = 's32[2]{0}', space=sflag, size = 0x8, scoped, tag = 'scoped memory for tpu_custom_call.1']
    %21 = vsyncpa [#allocation6], 0
    %s22 = scalar_lea.sflag [#allocation6], 1
    %23 = vsyncpa %s22, 0
    %24 = vsyncpa [#allocation9], 0
    %25 = vsyncpa [#allocation7], 0
    %s26 = scalar_lea.sflag [#allocation7], 1
    %27 = vsyncpa %s26, 0
    %28 = vsyncpa [#allocation13], 0
    %s29 = scalar_lea.sflag [#allocation13], 1
    %30 = vsyncpa %s29, 0
    loop: start=0, step=1, limit=6
    $region2: #{tpu_custom_call.1} parent=1 // loop_pre_header
      _
    $region3: #{tpu_custom_call.1} parent=1 // loop_header
      %s32 = sphi 0, %s36
      %p33 = scmp.ge.s32.totalorder %s32, 6
      %s39 = sphi 0, %s51
      %s40 = sphi 0, %s47
      %s41 = sphi 0, %s39
      %s42 = sphi 0, %s40
      %s43 = sphi 0, %s41
      %s44 = sphi 0, %s42
      %s54 = sphi 0, %s56
      %s57 = sphi 0, %s54
      %s58 = sphi 0, %s57
      %s74 = sphi 0, %s58
      %s80 = sphi 0, %s82
      %s83 = sphi 0, %s80
      %s84 = sphi 0, %s83
      %s100 = sphi 0, %s84
      %s104 = sphi 0, %s104
      %s106 = sphi 0, %s104
      %s107 = sphi 0, %s106
      %s121 = sphi 0, %s107
      %s125 = sphi 0, %s125
      %s127 = sphi 0, %s125
      %s128 = sphi 0, %s127
      %s142 = sphi 0, %s128
      %s146 = sphi 0, %s146
      %s148 = sphi 0, %s146
      %s149 = sphi 0, %s148
      %s163 = sphi 0, %s149
      %s167 = sphi 0, %s167
      %s169 = sphi 0, %s167
      %s170 = sphi 0, %s169
      %s184 = sphi 0, %s170
      %s188 = sphi 0, %s188
      %s190 = sphi 0, %s188
      %s191 = sphi 0, %s190
      %s205 = sphi 0, %s191
      %s209 = sphi 0, %s209
      %s211 = sphi 0, %s209
      %s212 = sphi 0, %s211
      %s226 = sphi 0, %s212
      %s230 = sphi 0, %s230
      %s232 = sphi 0, %s230
      %s233 = sphi 0, %s232
      %s247 = sphi 0, %s233
      %s251 = sphi 0, %s251
      %s253 = sphi 0, %s251
      %s254 = sphi 0, %s253
      %s268 = sphi 0, %s254
      %s272 = sphi 0, %s272
      %s274 = sphi 0, %s272
      %s275 = sphi 0, %s274
      %s289 = sphi 0, %s275
      %s293 = sphi 0, %s293
      %s295 = sphi 0, %s293
      %s296 = sphi 0, %s295
      %s310 = sphi 0, %s296
      %s314 = sphi 0, %s314
      %s316 = sphi 0, %s314
      %s317 = sphi 0, %s316
      %s331 = sphi 0, %s317
      %s335 = sphi 0, %s335
      %s337 = sphi 0, %s335
      %s338 = sphi 0, %s337
      %s352 = sphi 0, %s338
      %s360 = sphi 0, %s362
      %s363 = sphi 0, %s360
      %s364 = sphi 0, %s363
      %s380 = sphi 0, %s364
      %s388 = sphi 0, %s390
      %s391 = sphi 0, %s388
      %s392 = sphi 0, %s391
      %s408 = sphi 0, %s392
    $region4: #{tpu_custom_call.1} parent=1 // loop_header_branch
      %35 = sbr.rel (%p33) target = $region8
    $region5: #{tpu_custom_call.1} parent=1 // loop_body
      %s37 = ssub.s32 %s32, 1
      %s38 = ssub.s32 %s32, 2
      %s45 = sadd.s32 1, %s40
      %p46 = scmp.ge.s32.totalorder %s45, 2
      %s47 = scalar_select %p46, 0, %s45
      %s48 = sadd.s32 1, %s39
      %s49 = scalar_select %p46, %s48, %s39
      %p50 = scmp.ge.s32.totalorder %s49, 2
      %s51 = scalar_select %p50, 0, %s49
      %s52 = ssub.s32 %s39, %s51
      %p53 = scmp.eq.s32.totalorder %s52, 0
      %s55 = sadd.s32 %s54, 1
      %s56 = scalar_select %p53, %s54, %s55
      %p59 = pneg %p53
      %p60 = scmp.eq.s32.totalorder %s32, 3
      %p61 = por %p59, %p60
      %p62 = scmp.ne.s32.totalorder %s54, %s57
      %p63 = scmp.eq.s32.totalorder %s32, 0
      %p64 = por %p62, %p63
      %p65 = scmp.ne.s32.totalorder %s54, %s57
      %p66 = scmp.eq.s32.totalorder %s37, 3
      %p67 = por %p65, %p66
      %p68 = scmp.ne.s32.totalorder %s57, %s58
      %p69 = scmp.eq.s32.totalorder %s37, 0
      %p70 = por %p68, %p69
      %p71 = scmp.ne.s32.totalorder %s57, %s58
      %p72 = scmp.eq.s32.totalorder %s38, 3
      %p73 = por %p71, %p72
      %p75 = scmp.ne.s32.totalorder %s58, %s74
      %p76 = scmp.eq.s32.totalorder %s38, 0
      %p77 = por %p75, %p76
      %s78 = ssub.s32 %s39, %s51
      %p79 = scmp.eq.s32.totalorder %s78, 0
      %s81 = sadd.s32 %s80, 1
      %s82 = scalar_select %p79, %s80, %s81
      %p85 = pneg %p79
      %p86 = scmp.eq.s32.totalorder %s32, 3
      %p87 = por %p85, %p86
      %p88 = scmp.ne.s32.totalorder %s80, %s83
      %p89 = scmp.eq.s32.totalorder %s32, 0
      %p90 = por %p88, %p89
      %p91 = scmp.ne.s32.totalorder %s80, %s83
      %p92 = scmp.eq.s32.totalorder %s37, 3
      %p93 = por %p91, %p92
      %p94 = scmp.ne.s32.totalorder %s83, %s84
      %p95 = scmp.eq.s32.totalorder %s37, 0
      %p96 = por %p94, %p95
      %p97 = scmp.ne.s32.totalorder %s83, %s84
      %p98 = scmp.eq.s32.totalorder %s38, 3
      %p99 = por %p97, %p98
      %p101 = scmp.ne.s32.totalorder %s84, %s100
      %p102 = scmp.eq.s32.totalorder %s38, 0
      %p103 = por %p101, %p102
      %s105 = sadd.s32 %s104, 1
      %p108 = scmp.eq.s32.totalorder %s32, 3
      %p109 = scmp.ne.s32.totalorder %s104, %s106
      %p110 = scmp.eq.s32.totalorder %s32, 0
      %p111 = por %p109, %p110
      %p112 = scmp.ne.s32.totalorder %s104, %s106
      %p113 = scmp.eq.s32.totalorder %s37, 3
      %p114 = por %p112, %p113
      %p115 = scmp.ne.s32.totalorder %s106, %s107
      %p116 = scmp.eq.s32.totalorder %s37, 0
      %p117 = por %p115, %p116
      %p118 = scmp.ne.s32.totalorder %s106, %s107
      %p119 = scmp.eq.s32.totalorder %s38, 3
      %p120 = por %p118, %p119
      %p122 = scmp.ne.s32.totalorder %s107, %s121
      %p123 = scmp.eq.s32.totalorder %s38, 0
      %p124 = por %p122, %p123
      %s126 = sadd.s32 %s125, 1
      %p129 = scmp.eq.s32.totalorder %s32, 3
      %p130 = scmp.ne.s32.totalorder %s125, %s127
      %p131 = scmp.eq.s32.totalorder %s32, 0
      %p132 = por %p130, %p131
      %p133 = scmp.ne.s32.totalorder %s125, %s127
      %p134 = scmp.eq.s32.totalorder %s37, 3
      %p135 = por %p133, %p134
      %p136 = scmp.ne.s32.totalorder %s127, %s128
      %p137 = scmp.eq.s32.totalorder %s37, 0
      %p138 = por %p136, %p137
      %p139 = scmp.ne.s32.totalorder %s127, %s128
      %p140 = scmp.eq.s32.totalorder %s38, 3
      %p141 = por %p139, %p140
      %p143 = scmp.ne.s32.totalorder %s128, %s142
      %p144 = scmp.eq.s32.totalorder %s38, 0
      %p145 = por %p143, %p144
      %s147 = sadd.s32 %s146, 1
      %p150 = scmp.eq.s32.totalorder %s32, 3
      %p151 = scmp.ne.s32.totalorder %s146, %s148
      %p152 = scmp.eq.s32.totalorder %s32, 0
      %p153 = por %p151, %p152
      %p154 = scmp.ne.s32.totalorder %s146, %s148
      %p155 = scmp.eq.s32.totalorder %s37, 3
      %p156 = por %p154, %p155
      %p157 = scmp.ne.s32.totalorder %s148, %s149
      %p158 = scmp.eq.s32.totalorder %s37, 0
      %p159 = por %p157, %p158
      %p160 = scmp.ne.s32.totalorder %s148, %s149
      %p161 = scmp.eq.s32.totalorder %s38, 3
      %p162 = por %p160, %p161
      %p164 = scmp.ne.s32.totalorder %s149, %s163
      %p165 = scmp.eq.s32.totalorder %s38, 0
      %p166 = por %p164, %p165
      %s168 = sadd.s32 %s167, 1
      %p171 = scmp.eq.s32.totalorder %s32, 3
      %p172 = scmp.ne.s32.totalorder %s167, %s169
      %p173 = scmp.eq.s32.totalorder %s32, 0
      %p174 = por %p172, %p173
      %p175 = scmp.ne.s32.totalorder %s167, %s169
      %p176 = scmp.eq.s32.totalorder %s37, 3
      %p177 = por %p175, %p176
      %p178 = scmp.ne.s32.totalorder %s169, %s170
      %p179 = scmp.eq.s32.totalorder %s37, 0
      %p180 = por %p178, %p179
      %p181 = scmp.ne.s32.totalorder %s169, %s170
      %p182 = scmp.eq.s32.totalorder %s38, 3
      %p183 = por %p181, %p182
      %p185 = scmp.ne.s32.totalorder %s170, %s184
      %p186 = scmp.eq.s32.totalorder %s38, 0
      %p187 = por %p185, %p186
      %s189 = sadd.s32 %s188, 1
      %p192 = scmp.eq.s32.totalorder %s32, 3
      %p193 = scmp.ne.s32.totalorder %s188, %s190
      %p194 = scmp.eq.s32.totalorder %s32, 0
      %p195 = por %p193, %p194
      %p196 = scmp.ne.s32.totalorder %s188, %s190
      %p197 = scmp.eq.s32.totalorder %s37, 3
      %p198 = por %p196, %p197
      %p199 = scmp.ne.s32.totalorder %s190, %s191
      %p200 = scmp.eq.s32.totalorder %s37, 0
      %p201 = por %p199, %p200
      %p202 = scmp.ne.s32.totalorder %s190, %s191
      %p203 = scmp.eq.s32.totalorder %s38, 3
      %p204 = por %p202, %p203
      %p206 = scmp.ne.s32.totalorder %s191, %s205
      %p207 = scmp.eq.s32.totalorder %s38, 0
      %p208 = por %p206, %p207
      %s210 = sadd.s32 %s209, 1
      %p213 = scmp.eq.s32.totalorder %s32, 3
      %p214 = scmp.ne.s32.totalorder %s209, %s211
      %p215 = scmp.eq.s32.totalorder %s32, 0
      %p216 = por %p214, %p215
      %p217 = scmp.ne.s32.totalorder %s209, %s211
      %p218 = scmp.eq.s32.totalorder %s37, 3
      %p219 = por %p217, %p218
      %p220 = scmp.ne.s32.totalorder %s211, %s212
      %p221 = scmp.eq.s32.totalorder %s37, 0
      %p222 = por %p220, %p221
      %p223 = scmp.ne.s32.totalorder %s211, %s212
      %p224 = scmp.eq.s32.totalorder %s38, 3
      %p225 = por %p223, %p224
      %p227 = scmp.ne.s32.totalorder %s212, %s226
      %p228 = scmp.eq.s32.totalorder %s38, 0
      %p229 = por %p227, %p228
      %s231 = sadd.s32 %s230, 1
      %p234 = scmp.eq.s32.totalorder %s32, 3
      %p235 = scmp.ne.s32.totalorder %s230, %s232
      %p236 = scmp.eq.s32.totalorder %s32, 0
      %p237 = por %p235, %p236
      %p238 = scmp.ne.s32.totalorder %s230, %s232
      %p239 = scmp.eq.s32.totalorder %s37, 3
      %p240 = por %p238, %p239
      %p241 = scmp.ne.s32.totalorder %s232, %s233
      %p242 = scmp.eq.s32.totalorder %s37, 0
      %p243 = por %p241, %p242
      %p244 = scmp.ne.s32.totalorder %s232, %s233
      %p245 = scmp.eq.s32.totalorder %s38, 3
      %p246 = por %p244, %p245
      %p248 = scmp.ne.s32.totalorder %s233, %s247
      %p249 = scmp.eq.s32.totalorder %s38, 0
      %p250 = por %p248, %p249
      %s252 = sadd.s32 %s251, 1
      %p255 = scmp.eq.s32.totalorder %s32, 3
      %p256 = scmp.ne.s32.totalorder %s251, %s253
      %p257 = scmp.eq.s32.totalorder %s32, 0
      %p258 = por %p256, %p257
      %p259 = scmp.ne.s32.totalorder %s251, %s253
      %p260 = scmp.eq.s32.totalorder %s37, 3
      %p261 = por %p259, %p260
      %p262 = scmp.ne.s32.totalorder %s253, %s254
      %p263 = scmp.eq.s32.totalorder %s37, 0
      %p264 = por %p262, %p263
      %p265 = scmp.ne.s32.totalorder %s253, %s254
      %p266 = scmp.eq.s32.totalorder %s38, 3
      %p267 = por %p265, %p266
      %p269 = scmp.ne.s32.totalorder %s254, %s268
      %p270 = scmp.eq.s32.totalorder %s38, 0
      %p271 = por %p269, %p270
      %s273 = sadd.s32 %s272, 1
      %p276 = scmp.eq.s32.totalorder %s32, 3
      %p277 = scmp.ne.s32.totalorder %s272, %s274
      %p278 = scmp.eq.s32.totalorder %s32, 0
      %p279 = por %p277, %p278
      %p280 = scmp.ne.s32.totalorder %s272, %s274
      %p281 = scmp.eq.s32.totalorder %s37, 3
      %p282 = por %p280, %p281
      %p283 = scmp.ne.s32.totalorder %s274, %s275
      %p284 = scmp.eq.s32.totalorder %s37, 0
      %p285 = por %p283, %p284
      %p286 = scmp.ne.s32.totalorder %s274, %s275
      %p287 = scmp.eq.s32.totalorder %s38, 3
      %p288 = por %p286, %p287
      %p290 = scmp.ne.s32.totalorder %s275, %s289
      %p291 = scmp.eq.s32.totalorder %s38, 0
      %p292 = por %p290, %p291
      %s294 = sadd.s32 %s293, 1
      %p297 = scmp.eq.s32.totalorder %s32, 3
      %p298 = scmp.ne.s32.totalorder %s293, %s295
      %p299 = scmp.eq.s32.totalorder %s32, 0
      %p300 = por %p298, %p299
      %p301 = scmp.ne.s32.totalorder %s293, %s295
      %p302 = scmp.eq.s32.totalorder %s37, 3
      %p303 = por %p301, %p302
      %p304 = scmp.ne.s32.totalorder %s295, %s296
      %p305 = scmp.eq.s32.totalorder %s37, 0
      %p306 = por %p304, %p305
      %p307 = scmp.ne.s32.totalorder %s295, %s296
      %p308 = scmp.eq.s32.totalorder %s38, 3
      %p309 = por %p307, %p308
      %p311 = scmp.ne.s32.totalorder %s296, %s310
      %p312 = scmp.eq.s32.totalorder %s38, 0
      %p313 = por %p311, %p312
      %s315 = sadd.s32 %s314, 1
      %p318 = scmp.eq.s32.totalorder %s32, 3
      %p319 = scmp.ne.s32.totalorder %s314, %s316
      %p320 = scmp.eq.s32.totalorder %s32, 0
      %p321 = por %p319, %p320
      %p322 = scmp.ne.s32.totalorder %s314, %s316
      %p323 = scmp.eq.s32.totalorder %s37, 3
      %p324 = por %p322, %p323
      %p325 = scmp.ne.s32.totalorder %s316, %s317
      %p326 = scmp.eq.s32.totalorder %s37, 0
      %p327 = por %p325, %p326
      %p328 = scmp.ne.s32.totalorder %s316, %s317
      %p329 = scmp.eq.s32.totalorder %s38, 3
      %p330 = por %p328, %p329
      %p332 = scmp.ne.s32.totalorder %s317, %s331
      %p333 = scmp.eq.s32.totalorder %s38, 0
      %p334 = por %p332, %p333
      %s336 = sadd.s32 %s335, 1
      %p339 = scmp.eq.s32.totalorder %s32, 3
      %p340 = scmp.ne.s32.totalorder %s335, %s337
      %p341 = scmp.eq.s32.totalorder %s32, 0
      %p342 = por %p340, %p341
      %p343 = scmp.ne.s32.totalorder %s335, %s337
      %p344 = scmp.eq.s32.totalorder %s37, 3
      %p345 = por %p343, %p344
      %p346 = scmp.ne.s32.totalorder %s337, %s338
      %p347 = scmp.eq.s32.totalorder %s37, 0
      %p348 = por %p346, %p347
      %p349 = scmp.ne.s32.totalorder %s337, %s338
      %p350 = scmp.eq.s32.totalorder %s38, 3
      %p351 = por %p349, %p350
      %p353 = scmp.ne.s32.totalorder %s338, %s352
      %p354 = scmp.eq.s32.totalorder %s38, 0
      %p355 = por %p353, %p354
      %s356 = ssub.s32 %s39, %s51
      %s357 = ssub.s32 %s40, %s47
      %s358 = sor.u32 %s356, %s357
      %p359 = scmp.eq.s32.totalorder %s358, 0
      %s361 = sadd.s32 %s360, 1
      %s362 = scalar_select %p359, %s360, %s361
      %p365 = pneg %p359
      %p366 = scmp.eq.s32.totalorder %s32, 3
      %p367 = por %p365, %p366
      %p368 = scmp.ne.s32.totalorder %s360, %s363
      %p369 = scmp.eq.s32.totalorder %s32, 0
      %p370 = por %p368, %p369
      %p371 = scmp.ne.s32.totalorder %s360, %s363
      %p372 = scmp.eq.s32.totalorder %s37, 3
      %p373 = por %p371, %p372
      %p374 = scmp.ne.s32.totalorder %s363, %s364
      %p375 = scmp.eq.s32.totalorder %s37, 0
      %p376 = por %p374, %p375
      %p377 = scmp.ne.s32.totalorder %s363, %s364
      %p378 = scmp.eq.s32.totalorder %s38, 3
      %p379 = por %p377, %p378
      %p381 = scmp.ne.s32.totalorder %s364, %s380
      %p382 = scmp.eq.s32.totalorder %s38, 0
      %p383 = por %p381, %p382
      %s384 = ssub.s32 %s39, %s51
      %s385 = ssub.s32 %s40, %s47
      %s386 = sor.u32 %s384, %s385
      %p387 = scmp.eq.s32.totalorder %s386, 0
      %s389 = sadd.s32 %s388, 1
      %s390 = scalar_select %p387, %s388, %s389
      %p393 = pneg %p387
      %p394 = scmp.eq.s32.totalorder %s32, 3
      %p395 = por %p393, %p394
      %p396 = scmp.ne.s32.totalorder %s388, %s391
      %p397 = scmp.eq.s32.totalorder %s32, 0
      %p398 = por %p396, %p397
      %p399 = scmp.ne.s32.totalorder %s388, %s391
      %p400 = scmp.eq.s32.totalorder %s37, 3
      %p401 = por %p399, %p400
      %p402 = scmp.ne.s32.totalorder %s391, %s392
      %p403 = scmp.eq.s32.totalorder %s37, 0
      %p404 = por %p402, %p403
      %p405 = scmp.ne.s32.totalorder %s391, %s392
      %p406 = scmp.eq.s32.totalorder %s38, 3
      %p407 = por %p405, %p406
      %p409 = scmp.ne.s32.totalorder %s392, %s408
      %p410 = scmp.eq.s32.totalorder %s38, 0
      %p411 = por %p409, %p410
      %p412 = scmp.le.s32.totalorder 1, %s32
      %p413 = scmp.lt.s32.totalorder %s32, 5
      %p414 = pnand %p412, %p413
      %p415 = pneg %p414
      // Predicated region
      $region9: #{tpu_custom_call.1} parent=5 // pred_check
        _
      $region10: #{tpu_custom_call.1} parent=5 // pred_check_branch
        %417 = sbr.rel (%p414) target = $region12
      $region11: #{tpu_custom_call.1} parent=5 // pred_region
        %s418 = ssub.s32 %s32, 1
        // Predicated region
        $region13: #{tpu_custom_call.1} parent=11 // pred_check
          %p419 = pneg %p117
        $region14: #{tpu_custom_call.1} parent=11 // pred_check_branch
          %421 = sbr.rel (%p419) target = $region16
        $region15: #{tpu_custom_call.1} parent=11 // pred_region
          _
        $region16: #{tpu_custom_call.1} parent=11 // pred_fallthru
          _
        // Predicated region
        $region17: #{tpu_custom_call.1} parent=11 // pred_check
          %p422 = pneg %p138
        $region18: #{tpu_custom_call.1} parent=11 // pred_check_branch
          %424 = sbr.rel (%p422) target = $region20
        $region19: #{tpu_custom_call.1} parent=11 // pred_region
          _
        $region20: #{tpu_custom_call.1} parent=11 // pred_fallthru
          _
        // Predicated region
        $region21: #{tpu_custom_call.1} parent=11 // pred_check
          %p425 = pneg %p159
        $region22: #{tpu_custom_call.1} parent=11 // pred_check_branch
          %427 = sbr.rel (%p425) target = $region24
        $region23: #{tpu_custom_call.1} parent=11 // pred_region
          %429 = vsyncadd [#allocation9], 0
          %s430 = sshll.u32 %s4, 4
          %s431 = int_to_ptr.hbm [resolvable:$true] %s430
          %s432 = sshll.u32 [#allocation8], 4
          %s433 = int_to_ptr.vmem [resolvable:$true] %s432
          %438 = dma.hbm_to_vmem [thread:$0]  %s431, 256, %s433, [#allocation9], 64, 64, 4
        $region24: #{tpu_custom_call.1} parent=11 // pred_fallthru
          _
        // Predicated region
        $region25: #{tpu_custom_call.1} parent=11 // pred_check
          %p439 = pneg %p180
        $region26: #{tpu_custom_call.1} parent=11 // pred_check_branch
          %441 = sbr.rel (%p439) target = $region28
        $region27: #{tpu_custom_call.1} parent=11 // pred_region
          _
        $region28: #{tpu_custom_call.1} parent=11 // pred_fallthru
          _
        // Predicated region
        $region29: #{tpu_custom_call.1} parent=11 // pred_check
          %p442 = pneg %p201
        $region30: #{tpu_custom_call.1} parent=11 // pred_check_branch
          %444 = sbr.rel (%p442) target = $region32
        $region31: #{tpu_custom_call.1} parent=11 // pred_region
          _
        $region32: #{tpu_custom_call.1} parent=11 // pred_fallthru
          _
        // Predicated region
        $region33: #{tpu_custom_call.1} parent=11 // pred_check
          %p445 = pneg %p222
        $region34: #{tpu_custom_call.1} parent=11 // pred_check_branch
          %447 = sbr.rel (%p445) target = $region36
        $region35: #{tpu_custom_call.1} parent=11 // pred_region
          _
        $region36: #{tpu_custom_call.1} parent=11 // pred_fallthru
          _
        // Predicated region
        $region37: #{tpu_custom_call.1} parent=11 // pred_check
          %p448 = pneg %p243
        $region38: #{tpu_custom_call.1} parent=11 // pred_check_branch
          %450 = sbr.rel (%p448) target = $region40
        $region39: #{tpu_custom_call.1} parent=11 // pred_region
          %452 = vsyncadd [#allocation9], 0
          %s453 = sshll.u32 %s8, 4
          %s454 = int_to_ptr.hbm [resolvable:$true] %s453
          %s455 = sshll.u32 [#allocation10], 4
          %s456 = int_to_ptr.vmem [resolvable:$true] %s455
          %461 = dma.hbm_to_vmem [thread:$0]  %s454, 256, %s456, [#allocation9], 64, 64, 4
        $region40: #{tpu_custom_call.1} parent=11 // pred_fallthru
          _
        // Predicated region
        $region41: #{tpu_custom_call.1} parent=11 // pred_check
          %p462 = pneg %p264
        $region42: #{tpu_custom_call.1} parent=11 // pred_check_branch
          %464 = sbr.rel (%p462) target = $region44
        $region43: #{tpu_custom_call.1} parent=11 // pred_region
          _
        $region44: #{tpu_custom_call.1} parent=11 // pred_fallthru
          _
        // Predicated region
        $region45: #{tpu_custom_call.1} parent=11 // pred_check
          %p465 = pneg %p285
        $region46: #{tpu_custom_call.1} parent=11 // pred_check_branch
          %467 = sbr.rel (%p465) target = $region48
        $region47: #{tpu_custom_call.1} parent=11 // pred_region
          _
        $region48: #{tpu_custom_call.1} parent=11 // pred_fallthru
          _
        // Predicated region
        $region49: #{tpu_custom_call.1} parent=11 // pred_check
          %p468 = pneg %p306
        $region50: #{tpu_custom_call.1} parent=11 // pred_check_branch
          %470 = sbr.rel (%p468) target = $region52
        $region51: #{tpu_custom_call.1} parent=11 // pred_region
          _
        $region52: #{tpu_custom_call.1} parent=11 // pred_fallthru
          _
        // Predicated region
        $region53: #{tpu_custom_call.1} parent=11 // pred_check
          %p471 = pneg %p327
        $region54: #{tpu_custom_call.1} parent=11 // pred_check_branch
          %473 = sbr.rel (%p471) target = $region56
        $region55: #{tpu_custom_call.1} parent=11 // pred_region
          _
        $region56: #{tpu_custom_call.1} parent=11 // pred_fallthru
          _
        // Predicated region
        $region57: #{tpu_custom_call.1} parent=11 // pred_check
          %p474 = pneg %p348
        $region58: #{tpu_custom_call.1} parent=11 // pred_check_branch
          %476 = sbr.rel (%p474) target = $region60
        $region59: #{tpu_custom_call.1} parent=11 // pred_region
          _
        $region60: #{tpu_custom_call.1} parent=11 // pred_fallthru
          _
      $region12: #{tpu_custom_call.1} parent=5 // pred_fallthru
        _
      %p477 = scmp.lt.s32.totalorder %s32, 4
      // Predicated region
      $region61: #{tpu_custom_call.1} parent=5 // pred_check
        %p478 = pneg %p477
      $region62: #{tpu_custom_call.1} parent=5 // pred_check_branch
        %480 = sbr.rel (%p478) target = $region64
      $region63: #{tpu_custom_call.1} parent=5 // pred_region
        // Predicated region
        $region65: #{tpu_custom_call.1} parent=63 // pred_check
          %p481 = pneg %p64
        $region66: #{tpu_custom_call.1} parent=63 // pred_check_branch
          %483 = sbr.rel (%p481) target = $region68
        $region67: #{tpu_custom_call.1} parent=63 // pred_region
          %p484 = scmp.lt.s32.totalorder %s39, 1
          %s485 = scalar_select %p484, %s39, 1
          %s486 = smul.addr %s485, 2
          %s487 = smul.addr %s486, 8
          %s488 = scalar_lea.vmem %s0, %s487
        $region68: #{tpu_custom_call.1} parent=63 // pred_fallthru
          _
        // Predicated region
        $region69: #{tpu_custom_call.1} parent=63 // pred_check
          %p489 = pneg %p90
        $region70: #{tpu_custom_call.1} parent=63 // pred_check_branch
          %491 = sbr.rel (%p489) target = $region72
        $region71: #{tpu_custom_call.1} parent=63 // pred_region
          %s492 = sand.u32 %s80, 1
          %s493 = scalar_lea.sflag [#allocation6], %s492
          %s494 = sand.u32 %s80, 1
          %s495 = scalar_lea.vmem [#allocation5], %s494
          %497 = vsyncadd %s493, 0
          %s498 = scalar_lea.hbm %s1, %s39
          %s500 = sshll.u32 %s498, 4
          %s501 = int_to_ptr.hbm [resolvable:$true] %s500
          %s502 = sshll.u32 %s495, 4
          %s503 = int_to_ptr.vmem [resolvable:$true] %s502
          %505 = dma.hbm_to_vmem [thread:$0]  %s501, 16, %s503, %s493
        $region72: #{tpu_custom_call.1} parent=63 // pred_fallthru
          _
      $region64: #{tpu_custom_call.1} parent=5 // pred_fallthru
        _
      %p506 = scmp.le.s32.totalorder 1, %s32
      %p507 = scmp.lt.s32.totalorder %s32, 5
      %p508 = pnand %p506, %p507
      %p509 = pneg %p508
      // Predicated region
      $region73: #{tpu_custom_call.1} parent=5 // pred_check
        _
      $region74: #{tpu_custom_call.1} parent=5 // pred_check_branch
        %511 = sbr.rel (%p508) target = $region76
      $region75: #{tpu_custom_call.1} parent=5 // pred_region
        %s512 = ssub.s32 %s32, 1
        %s513 = sand.u32 %s83, 1
        %s514 = scalar_lea.sflag [#allocation6], %s513
        %s515 = sand.u32 %s83, 1
        %s516 = scalar_lea.vmem [#allocation5], %s515
        // Predicated region
        $region77: #{tpu_custom_call.1} parent=75 // pred_check
          %p517 = pneg %p96
        $region78: #{tpu_custom_call.1} parent=75 // pred_check_branch
          %519 = sbr.rel (%p517) target = $region80
        $region79: #{tpu_custom_call.1} parent=75 // pred_region
          %521 = dma.done %s514, 16
        $region80: #{tpu_custom_call.1} parent=75 // pred_fallthru
          _
        // Predicated region
        $region81: #{tpu_custom_call.1} parent=75 // pred_check
          %p522 = pneg %p159
        $region82: #{tpu_custom_call.1} parent=75 // pred_check_branch
          %524 = sbr.rel (%p522) target = $region84
        $region83: #{tpu_custom_call.1} parent=75 // pred_region
          %526 = dma.done [#allocation9], 256
        $region84: #{tpu_custom_call.1} parent=75 // pred_fallthru
          _
        // Predicated region
        $region85: #{tpu_custom_call.1} parent=75 // pred_check
          %p527 = pneg %p243
        $region86: #{tpu_custom_call.1} parent=75 // pred_check_branch
          %529 = sbr.rel (%p527) target = $region88
        $region87: #{tpu_custom_call.1} parent=75 // pred_region
          %531 = dma.done [#allocation9], 256
        $region88: #{tpu_custom_call.1} parent=75 // pred_fallthru
          _
        %p532 = scmp.lt.s32.totalorder %s41, 1
        %s533 = scalar_select %p532, %s41, 1
        %s534 = smul.addr %s533, 2
        %s535 = smul.addr %s534, 8
        %s536 = scalar_lea.vmem %s0, %s535
        %p537 = pneg %p70
        %p538 = pneg %p67
        %s539 = sand.u32 %s83, 1
        %s540 = scalar_lea.sflag [#allocation6], %s539
        %s541 = sand.u32 %s83, 1
        %s542 = scalar_lea.vmem [#allocation5], %s541
        %p543 = pneg %p96
        %p544 = pneg %p93
        %p545 = pneg %p117
        %p546 = pneg %p114
        %p547 = pneg %p138
        %p548 = pneg %p135
        %p549 = pneg %p159
        %p550 = pneg %p156
        %p551 = pneg %p180
        %p552 = pneg %p177
        %p553 = pneg %p201
        %p554 = pneg %p198
        %p555 = pneg %p222
        %p556 = pneg %p219
        %p557 = pneg %p243
        %p558 = pneg %p240
        %p559 = pneg %p264
        %p560 = pneg %p261
        %p561 = pneg %p285
        %p562 = pneg %p282
        %p563 = pneg %p306
        %p564 = pneg %p303
        %p565 = pneg %p327
        %p566 = pneg %p324
        %p567 = pneg %p348
        %p568 = pneg %p345
        %p569 = pneg %p376
        %p570 = pneg %p373
        %s571 = sand.u32 %s363, 1
        %s572 = scalar_lea.sflag [#allocation7], %s571
        %s573 = sand.u32 %s363, 1
        %s574 = smul.addr %s573, 8
        %s575 = scalar_lea.vmem [#allocation11], %s574
        %p576 = pneg %p404
        %p577 = pneg %p401
        %s578 = sand.u32 %s391, 1
        %s579 = scalar_lea.sflag [#allocation13], %s578
        %s580 = sand.u32 %s391, 1
        %s581 = smul.addr %s580, 8
        %s582 = scalar_lea.vmem [#allocation12], %s581
        %p583 = scmp.lt.s32.totalorder %s41, 1
        %s584 = scalar_select %p583, %s41, 1
        %s585 = smul.addr %s584, 2
        %s586 = smul.addr %s585, 8
        %s587 = scalar_lea.vmem %s0, %s586
        %p589 = scmp.eq.s32.totalorder %s42, 0
        // Predicated region
        $region89: #{tpu_custom_call.1} parent=75 // pred_check
          %p590 = pneg %p589
        $region90: #{tpu_custom_call.1} parent=75 // pred_check_branch
          %592 = sbr.rel (%p590) target = $region92
        $region91: #{tpu_custom_call.1} parent=75 // pred_region
          %v593 = vld [vmem:[%s587] sm:$0xff]
          %v594 = vld [vmem:[%s587 + $0x8] sm:$0xff]
          %v595 = vpack.c.bf16 %v594, %v593
          %v596 = vld [vmem:[%s2] sm:$0xf]
          %v597 = vld [vmem:[%s2 + $0x4] sm:$0xf]
          %v598 = vld [vmem:[%s2 + $0x8] sm:$0xf]
          %v599 = vld [vmem:[%s2 + $0xc] sm:$0xf]
          %v600 = vld [vmem:[%s3] sm:$0x1]
          %v602 = vperm.slane %v600, 0
          %v608 = vunpack.c.l.b16 %v596
          %v609 = vunpack.c.l.b16 %v597
          %v610 = vunpack.c.l.b16 %v598
          %v611 = vunpack.c.l.b16 %v599
          %v612 = vpack.c.b16 %v609, %v608
          %v613 = vpack.c.b16 %v611, %v610
          %vm616 = vcmask 261120
          %v618 = vsel %vm616, %v595, 0
          %620 = vmatpush.bf16.msra.mxu0 0
          %621 = vmatpush.bf16.msra.mxu0 0
          %622 = vmatpush.bf16.msra.mxu0 0
          %623 = vmatpush.bf16.msra.mxu0 0
          %624 = vmatpush.bf16.msra.mxu0 0
          %625 = vmatpush.bf16.msra.mxu0 0
          %626 = vmatpush.bf16.msra.mxu0 %v613
          %627 = vmatpush.bf16.msra.mxu0 %v612
          %628 = vmatmul.bf16.gmra.mxu0 %v618
          %v629 = vpop.f32.mrf.mxu0
          %v630 = vadd.f32 %v602, %v629
          %v631 = vpop.f32.mrf.mxu0
          %v632 = vadd.f32 %v602, %v631
          %633 = vdwg.mxu0
          %v634 = vpack.c.bf16 %v630, %v630
          %v635 = vpack.c.bf16 %v632, %v632
          %vm636 = vcmask 125952
          %637 = vst.msk [vmem:[#allocation2] sm:$0xf] %vm636, %v634
          %638 = vst.msk [vmem:[#allocation2 + $0x4] sm:$0xf] %vm636, %v635
          %641 = vrot.lane.b32.xlu0 %v634, 96
          %v642 = vpop.permute.xlu0 %641
          %643 = vrot.lane.b32.xlu0 %v635, 96
          %v644 = vpop.permute.xlu0 %643
          %647 = vst.msk [vmem:[#allocation3] sm:$0xf] %vm636, %v642
          %648 = vst.msk [vmem:[#allocation3 + $0x4] sm:$0xf] %vm636, %v644
          %649 = vrot.lane.b32.xlu0 %v634, 64
          %v650 = vpop.permute.xlu0 %649
          %651 = vrot.lane.b32.xlu0 %v635, 64
          %v652 = vpop.permute.xlu0 %651
          %655 = vst.msk [vmem:[#allocation4] sm:$0xf] %vm636, %v650
          %656 = vst.msk [vmem:[#allocation4 + $0x4] sm:$0xf] %vm636, %v652
          %657 = vrot.lane.b32.xlu0 %v634, 112
          %v658 = vpop.permute.xlu0 %657
          %659 = vrot.lane.b32.xlu0 %v635, 112
          %v660 = vpop.permute.xlu0 %659
          %s663 = scalar_lea.vmem [#allocation2], 8
          %664 = vst.msk [vmem:[%s663] sm:$0xf] %vm636, %v658
          %665 = vst.msk [vmem:[%s663 + $0x4] sm:$0xf] %vm636, %v660
          %666 = vrot.lane.b32.xlu0 %v634, 80
          %v667 = vpop.permute.xlu0 %666
          %668 = vrot.lane.b32.xlu0 %v635, 80
          %v669 = vpop.permute.xlu0 %668
          %s672 = scalar_lea.vmem [#allocation3], 8
          %673 = vst.msk [vmem:[%s672] sm:$0xf] %vm636, %v667
          %674 = vst.msk [vmem:[%s672 + $0x4] sm:$0xf] %vm636, %v669
          %675 = vrot.lane.b32.xlu0 %v634, 48
          %v676 = vpop.permute.xlu0 %675
          %677 = vrot.lane.b32.xlu0 %v635, 48
          %v678 = vpop.permute.xlu0 %677
          %s681 = scalar_lea.vmem [#allocation4], 8
          %682 = vst.msk [vmem:[%s681] sm:$0xf] %vm636, %v676
          %683 = vst.msk [vmem:[%s681 + $0x4] sm:$0xf] %vm636, %v678
        $region92: #{tpu_custom_call.1} parent=75 // pred_fallthru
          _
        %s684 = smul.u32 %s42, 8
        %s685 = sshra.s32 %s684, 3
        %s686 = sand.u32 %s684, 7
        %s687 = smul.addr %s685, 4
        %s688 = scalar_lea.vmem [#allocation2], %s687
        %v689 = vld [vmem:[%s688] sm:$0xf]
        %v690 = vld [vmem:[%s688 + $0x8] sm:$0xf]
        %v691 = vld [vmem:[#allocation3] sm:$0xf]
        %v692 = vld [vmem:[#allocation3 + $0x4] sm:$0xf]
        %v693 = vld [vmem:[#allocation3 + $0x8] sm:$0xf]
        %v694 = vld [vmem:[#allocation3 + $0xc] sm:$0xf]
        %v695 = vld [vmem:[%s516] sm:$0x1]
        %v697 = vperm.slane %v695, 0
        %v701 = vunpack.c.l.b16 %v691
        %v702 = vunpack.c.l.b16 %v692
        %v703 = vpack.c.b16 %v702, %v701
        %vm704 = vcmask 130048
        %v706 = vsel %vm704, %v689, 0
        %v709 = vsel %vm704, %v703, 0
        %711 = vmatpush.bf16.xpose.msra.mxu0 0
        %712 = vmatpush.bf16.xpose.msra.mxu0 0
        %713 = vmatpush.bf16.xpose.msra.mxu0 0
        %714 = vmatpush.bf16.xpose.msra.mxu0 0
        %715 = vmatpush.bf16.xpose.msra.mxu0 0
        %716 = vmatpush.bf16.xpose.msra.mxu0 0
        %717 = vmatpush.bf16.xpose.msra.mxu0 0
        %718 = vmatpush.bf16.xpose.msra.mxu0 %v709
        %719 = vmatmul.bf16.gmra.mxu0 %v706
        %v720 = vpop.f32.mrf.mxu0
        %v721 = vadd.f32 %v697, %v720
        %v722 = vpop.f32.mrf.mxu0
        %723 = vdwg.mxu0
        %v726 = vunpack.c.l.b16 %v693
        %v727 = vunpack.c.l.b16 %v694
        %v728 = vpack.c.b16 %v727, %v726
        %v730 = vsel %vm704, %v690, 0
        %v733 = vsel %vm704, %v728, 0
        %735 = vmatpush.bf16.xpose.msra.mxu0 0
        %736 = vmatpush.bf16.xpose.msra.mxu0 0
        %737 = vmatpush.bf16.xpose.msra.mxu0 0
        %738 = vmatpush.bf16.xpose.msra.mxu0 0
        %739 = vmatpush.bf16.xpose.msra.mxu0 0
        %740 = vmatpush.bf16.xpose.msra.mxu0 0
        %741 = vmatpush.bf16.xpose.msra.mxu0 0
        %742 = vmatpush.bf16.xpose.msra.mxu0 %v733
        %743 = vmatmul.bf16.gmra.mxu0 %v730
        %v744 = vpop.f32.mrf.mxu0
        %v745 = vadd.f32 %v697, %v744
        %v746 = vpop.f32.mrf.mxu0
        %747 = vdwg.mxu0
        %v748 = vsel %vm704, %v721, -inf
        %749 = vmax.xlane.f32.xlu0 %v748
        %v750 = vpop.xlane.xlu0 %749
        %v751 = vsel %vm704, %v745, -inf
        %752 = vmax.xlane.f32.xlu0 %v751
        %v753 = vpop.xlane.xlu0 %752
        %v754 = vsub.f32 %v721, %v750
        %v755 = vsub.f32 %v745, %v753
        %v756 = vmul.f32 %v754, 1.442695
        %v757 = vpow.pop %v756
        %v758 = vmul.f32 %v755, 1.442695
        %v759 = vpow.pop %v758
        %v760 = vsel %vm704, %v757, 0.0
        %761 = vadd.xlane.f32.xlu0 %v760
        %v762 = vpop.xlane.xlu0 %761
        %v763 = vsel %vm704, %v759, 0.0
        %764 = vadd.xlane.f32.xlu0 %v763
        %v765 = vpop.xlane.xlu0 %764
        %v766 = vrcp.pop %v762
        %v767 = vmul.f32 %v762, %v766
        %v768 = vsub.f32 1.0, %v767
        %v769 = vmul.f32 %v766, %v768
        %v770 = vadd.f32 %v766, %v769
        %vm771 = vweird.f32 %v762
        %vm772 = vweird.f32 %v766
        %vm773 = vmor %vm771, %vm772
        %v774 = vsel %vm773, %v766, %v770
        %v775 = vand.u32 2147483647, %v762
        %vm776 = vcmp.eq.f32.partialorder %v775, 8.507059e+37
        %v777 = vand.u32 %v762, 2147483648
        %v778 = vor.u32 1.1754944e-38, %v777
        %v779 = vsel %vm776, %v778, %v774
        %v780 = vmul.f32 1.0, %v779
        %v781 = vrcp.pop %v765
        %v782 = vmul.f32 %v765, %v781
        %v783 = vsub.f32 1.0, %v782
        %v784 = vmul.f32 %v781, %v783
        %v785 = vadd.f32 %v781, %v784
        %vm786 = vweird.f32 %v765
        %vm787 = vweird.f32 %v781
        %vm788 = vmor %vm786, %vm787
        %v789 = vsel %vm788, %v781, %v785
        %v790 = vand.u32 2147483647, %v765
        %vm791 = vcmp.eq.f32.partialorder %v790, 8.507059e+37
        %v792 = vand.u32 %v765, 2147483648
        %v793 = vor.u32 1.1754944e-38, %v792
        %v794 = vsel %vm791, %v793, %v789
        %v795 = vmul.f32 1.0, %v794
        %v796 = vmul.f32 %v757, %v780
        %v797 = vmul.f32 %v759, %v795
        %v798 = vpack.c.bf16 %v796, %v796
        %v799 = vpack.c.bf16 %v797, %v797
        %vm800 = vcmask 125952
        %801 = vst.msk [vmem:[%s582] sm:$0xf] %vm800, %v798
        %802 = vst.msk [vmem:[%s582 + $0x4] sm:$0xf] %vm800, %v799
        %v803 = vld [vmem:[#allocation4] sm:$0xf]
        %v804 = vld [vmem:[#allocation4 + $0x4] sm:$0xf]
        %v805 = vld [vmem:[#allocation4 + $0x8] sm:$0xf]
        %v806 = vld [vmem:[#allocation4 + $0xc] sm:$0xf]
        %v809 = vunpack.c.l.b16 %v803
        %v810 = vunpack.c.l.b16 %v804
        %v811 = vpack.c.b16 %v810, %v809
        %v814 = vsel %vm704, %v798, 0
        %816 = vmatpush.bf16.msra.mxu0 0
        %817 = vmatpush.bf16.msra.mxu0 0
        %818 = vmatpush.bf16.msra.mxu0 0
        %819 = vmatpush.bf16.msra.mxu0 0
        %820 = vmatpush.bf16.msra.mxu0 0
        %821 = vmatpush.bf16.msra.mxu0 0
        %822 = vmatpush.bf16.msra.mxu0 0
        %823 = vmatpush.bf16.msra.mxu0 %v811
        %824 = vmatmul.bf16.gmra.mxu0 %v814
        %v825 = vpop.f32.mrf.mxu0
        %v826 = vadd.f32 0.0, %v825
        %v827 = vpop.f32.mrf.mxu0
        %828 = vdwg.mxu0
        %v831 = vunpack.c.l.b16 %v805
        %v832 = vunpack.c.l.b16 %v806
        %v833 = vpack.c.b16 %v832, %v831
        %v836 = vsel %vm704, %v799, 0
        %838 = vmatpush.bf16.msra.mxu0 0
        %839 = vmatpush.bf16.msra.mxu0 0
        %840 = vmatpush.bf16.msra.mxu0 0
        %841 = vmatpush.bf16.msra.mxu0 0
        %842 = vmatpush.bf16.msra.mxu0 0
        %843 = vmatpush.bf16.msra.mxu0 0
        %844 = vmatpush.bf16.msra.mxu0 0
        %845 = vmatpush.bf16.msra.mxu0 %v833
        %846 = vmatmul.bf16.gmra.mxu0 %v836
        %v847 = vpop.f32.mrf.mxu0
        %v848 = vadd.f32 0.0, %v847
        %v849 = vpop.f32.mrf.mxu0
        %850 = vdwg.mxu0
        %852 = vrot.lane.b32.xlu0 %v848, 16
        %v853 = vpop.permute.xlu0 %852
        %v855 = vsel %vm704, %v826, %v853
        %v856 = vpack.c.bf16 %v855, %v855
        %v857 = vld [vmem:[#allocation8] sm:$0xf]
        %v858 = vld [vmem:[#allocation8 + $0x4] sm:$0xf]
        %v859 = vld [vmem:[#allocation8 + $0x8] sm:$0xf]
        %v860 = vld [vmem:[#allocation8 + $0xc] sm:$0xf]
        %v861 = vld [vmem:[%s5] sm:$0x1]
        %v863 = vperm.slane %v861, 0
        %v869 = vunpack.c.l.b16 %v857
        %v870 = vunpack.c.l.b16 %v858
        %v871 = vunpack.c.l.b16 %v859
        %v872 = vunpack.c.l.b16 %v860
        %v873 = vpack.c.b16 %v870, %v869
        %v874 = vpack.c.b16 %v872, %v871
        %vm877 = vcmask 261120
        %v879 = vsel %vm877, %v856, 0
        %881 = vmatpush.bf16.msra.mxu0 0
        %882 = vmatpush.bf16.msra.mxu0 0
        %883 = vmatpush.bf16.msra.mxu0 0
        %884 = vmatpush.bf16.msra.mxu0 0
        %885 = vmatpush.bf16.msra.mxu0 0
        %886 = vmatpush.bf16.msra.mxu0 0
        %887 = vmatpush.bf16.msra.mxu0 %v874
        %888 = vmatpush.bf16.msra.mxu0 %v873
        %889 = vmatmul.bf16.gmra.mxu0 %v879
        %v890 = vpop.f32.mrf.mxu0
        %v891 = vadd.f32 %v863, %v890
        %v892 = vpop.f32.mrf.mxu0
        %893 = vdwg.mxu0
        %s894 = scalar_lea.vmem %s587, %s684
        %v895 = vld [vmem:[%s894] sm:$0xff]
        %v896 = vadd.f32 %v891, %v895
        %v897 = vld [vmem:[%s6] sm:$0x1]
        %v898 = vld [vmem:[%s7] sm:$0x1]
        %v899 = vsel %vm877, %v896, 0.0
        %900 = vadd.xlane.f32.xlu0 %v899
        %v901 = vpop.xlane.xlu0 %900
        %v902 = vrcp.pop 32.0
        %v903 = vmul.f32 32.0, %v902
        %v904 = vsub.f32 1.0, %v903
        %v905 = vmul.f32 %v902, %v904
        %v906 = vadd.f32 %v902, %v905
        %vm907 = vweird.f32 %v902
        %v908 = vsel %vm907, %v902, %v906
        %v909 = vmul.f32 %v901, %v908
        %v910 = vsub.f32 %v896, %v909
        %v911 = vmul.f32 %v910, %v910
        %v912 = vsel %vm877, %v911, 0.0
        %913 = vadd.xlane.f32.xlu0 %v912
        %v914 = vpop.xlane.xlu0 %913
        %v915 = vmul.f32 %v914, %v908
        %v916 = vadd.f32 %v915, 1e-05
        %v917 = vrsqrt.pop %v916
        %v918 = vmul.f32 %v917, %v916
        %v919 = vmul.f32 %v918, %v917
        %v920 = vmul.f32 0.5, %v919
        %v921 = vsub.f32 1.5, %v920
        %v922 = vmul.f32 %v917, %v921
        %vm923 = vweird.f32 %v916
        %vm924 = vweird.f32 %v917
        %vm925 = vmor %vm923, %vm924
        %v926 = vsel %vm925, %v917, %v922
        %v927 = vmul.f32 %v910, %v926
        %v929 = vperm.slane %v897, 0
        %v931 = vmul.f32 %v927, %v929
        %v933 = vperm.slane %v898, 0
        %v935 = vadd.f32 %v931, %v933
        %v936 = vpack.c.bf16 %v935, %v935
        %v937 = vld [vmem:[#allocation10] sm:$0xf]
        %v938 = vld [vmem:[#allocation10 + $0x4] sm:$0xf]
        %v939 = vld [vmem:[#allocation10 + $0x8] sm:$0xf]
        %v940 = vld [vmem:[#allocation10 + $0xc] sm:$0xf]
        %v941 = vld [vmem:[%s9] sm:$0x1]
        %v943 = vperm.slane %v941, 0
        %v949 = vunpack.c.l.b16 %v937
        %v950 = vunpack.c.l.b16 %v938
        %v951 = vunpack.c.l.b16 %v939
        %v952 = vunpack.c.l.b16 %v940
        %v953 = vpack.c.b16 %v950, %v949
        %v954 = vpack.c.b16 %v952, %v951
        %v958 = vsel %vm877, %v936, 0
        %960 = vmatpush.bf16.msra.mxu0 0
        %961 = vmatpush.bf16.msra.mxu0 0
        %962 = vmatpush.bf16.msra.mxu0 0
        %963 = vmatpush.bf16.msra.mxu0 0
        %964 = vmatpush.bf16.msra.mxu0 0
        %965 = vmatpush.bf16.msra.mxu0 0
        %966 = vmatpush.bf16.msra.mxu0 %v954
        %967 = vmatpush.bf16.msra.mxu0 %v953
        %968 = vmatmul.bf16.gmra.mxu0 %v958
        %v969 = vpop.f32.mrf.mxu0
        %v970 = vadd.f32 %v943, %v969
        %v971 = vpop.f32.mrf.mxu0
        %972 = vdwg.mxu0
        %v973 = vmax.f32 %v970, 0.0
        %v974 = vpack.c.bf16 %v973, %v973
        %v975 = vld [vmem:[%s10] sm:$0xf]
        %v976 = vld [vmem:[%s10 + $0x4] sm:$0xf]
        %v977 = vld [vmem:[%s10 + $0x8] sm:$0xf]
        %v978 = vld [vmem:[%s10 + $0xc] sm:$0xf]
        %v979 = vld [vmem:[%s10 + $0x10] sm:$0xf]
        %v980 = vld [vmem:[%s10 + $0x14] sm:$0xf]
        %v981 = vld [vmem:[%s10 + $0x18] sm:$0xf]
        %v982 = vld [vmem:[%s10 + $0x1c] sm:$0xf]
        %v983 = vld [vmem:[%s11] sm:$0x1]
        %v985 = vperm.slane %v983, 0
        %v995 = vunpack.c.l.b16 %v975
        %v996 = vunpack.c.l.b16 %v976
        %v997 = vunpack.c.l.b16 %v977
        %v998 = vunpack.c.l.b16 %v978
        %v999 = vunpack.c.l.b16 %v979
        %v1000 = vunpack.c.l.b16 %v980
        %v1001 = vunpack.c.l.b16 %v981
        %v1002 = vunpack.c.l.b16 %v982
        %v1003 = vpack.c.b16 %v996, %v995
        %v1004 = vpack.c.b16 %v998, %v997
        %v1005 = vpack.c.b16 %v1000, %v999
        %v1006 = vpack.c.b16 %v1002, %v1001
        %vm1011 = vcmask 523264
        %v1013 = vsel %vm1011, %v974, 0
        %1015 = vmatpush.bf16.msra.mxu0 0
        %1016 = vmatpush.bf16.msra.mxu0 0
        %1017 = vmatpush.bf16.msra.mxu0 0
        %1018 = vmatpush.bf16.msra.mxu0 0
        %1019 = vmatpush.bf16.msra.mxu0 %v1006
        %1020 = vmatpush.bf16.msra.mxu0 %v1005
        %1021 = vmatpush.bf16.msra.mxu0 %v1004
        %1022 = vmatpush.bf16.msra.mxu0 %v1003
        %1023 = vmatmul.bf16.gmra.mxu0 %v1013
        %v1024 = vpop.f32.mrf.mxu0
        %v1025 = vadd.f32 %v985, %v1024
        %v1026 = vpop.f32.mrf.mxu0
        %1027 = vdwg.mxu0
        %v1028 = vadd.f32 %v1025, %v935
        %v1029 = vld [vmem:[%s12] sm:$0x1]
        %v1030 = vld [vmem:[%s13] sm:$0x1]
        %v1031 = vsel %vm877, %v1028, 0.0
        %1032 = vadd.xlane.f32.xlu0 %v1031
        %v1033 = vpop.xlane.xlu0 %1032
        %v1034 = vmul.f32 %v1033, %v908
        %v1035 = vsub.f32 %v1028, %v1034
        %v1036 = vmul.f32 %v1035, %v1035
        %v1037 = vsel %vm877, %v1036, 0.0
        %1038 = vadd.xlane.f32.xlu0 %v1037
        %v1039 = vpop.xlane.xlu0 %1038
        %v1040 = vmul.f32 %v1039, %v908
        %v1041 = vadd.f32 %v1040, 1e-05
        %v1042 = vrsqrt.pop %v1041
        %v1043 = vmul.f32 %v1042, %v1041
        %v1044 = vmul.f32 %v1043, %v1042
        %v1045 = vmul.f32 0.5, %v1044
        %v1046 = vsub.f32 1.5, %v1045
        %v1047 = vmul.f32 %v1042, %v1046
        %vm1048 = vweird.f32 %v1041
        %vm1049 = vweird.f32 %v1042
        %vm1050 = vmor %vm1048, %vm1049
        %v1051 = vsel %vm1050, %v1042, %v1047
        %v1052 = vmul.f32 %v1035, %v1051
        %v1054 = vperm.slane %v1029, 0
        %v1056 = vmul.f32 %v1052, %v1054
        %v1058 = vperm.slane %v1030, 0
        %v1060 = vadd.f32 %v1056, %v1058
        %1061 = vst.msk [vmem:[%s575] sm:$0xff] %vm877, %v1060
        %s1062 = sand.u32 %s363, 1
        %s1063 = scalar_lea.sflag [#allocation7], %s1062
        %s1064 = sand.u32 %s363, 1
        %s1065 = smul.addr %s1064, 8
        %s1066 = scalar_lea.vmem [#allocation11], %s1065
        %s1067 = sand.u32 %s391, 1
        %s1068 = scalar_lea.sflag [#allocation13], %s1067
        %s1069 = sand.u32 %s391, 1
        %s1070 = smul.addr %s1069, 8
        %s1071 = scalar_lea.vmem [#allocation12], %s1070
        // Predicated region
        $region93: #{tpu_custom_call.1} parent=75 // pred_check
          %p1072 = pneg %p373
        $region94: #{tpu_custom_call.1} parent=75 // pred_check_branch
          %1074 = sbr.rel (%p1072) target = $region96
        $region95: #{tpu_custom_call.1} parent=75 // pred_region
          %1076 = vsyncadd %s1063, 0
          %s1077 = smul.addr %s41, 2
          %s1078 = sadd.s32 %s42, %s1077
          %s1079 = smul.addr %s1078, 8
          %s1080 = scalar_lea.hbm %s14, %s1079
          %s1082 = sshll.u32 %s1066, 4
          %s1083 = int_to_ptr.vmem [resolvable:$true] %s1082
          %s1084 = sshll.u32 %s1080, 4
          %s1085 = int_to_ptr.hbm [resolvable:$true] %s1084
          %1087 = dma.vmem_to_hbm [thread:$0]  %s1083, 128, %s1085, %s1063
        $region96: #{tpu_custom_call.1} parent=75 // pred_fallthru
          _
        // Predicated region
        $region97: #{tpu_custom_call.1} parent=75 // pred_check
          %p1088 = pneg %p401
        $region98: #{tpu_custom_call.1} parent=75 // pred_check_branch
          %1090 = sbr.rel (%p1088) target = $region100
        $region99: #{tpu_custom_call.1} parent=75 // pred_region
          %1092 = vsyncadd %s1068, 0
          %s1093 = smul.addr %s41, 4
          %s1094 = sadd.s32 %s42, %s1093
          %s1095 = smul.addr %s1094, 4
          %s1096 = scalar_lea.hbm %s15, %s1095
          %s1097 = sshll.u32 %s1071, 4
          %s1098 = int_to_ptr.vmem [resolvable:$true] %s1097
          %s1099 = sshll.u32 %s1096, 4
          %s1100 = int_to_ptr.hbm [resolvable:$true] %s1099
          %1105 = dma.vmem_to_hbm [thread:$0]  %s1098, 128, %s1100, %s1068, 64, 128, 4
        $region100: #{tpu_custom_call.1} parent=75 // pred_fallthru
          _
      $region76: #{tpu_custom_call.1} parent=5 // pred_fallthru
        _
      %p1106 = scmp.le.s32.totalorder 2, %s32
      // Predicated region
      $region101: #{tpu_custom_call.1} parent=5 // pred_check
        %p1107 = pneg %p1106
      $region102: #{tpu_custom_call.1} parent=5 // pred_check_branch
        %1109 = sbr.rel (%p1107) target = $region104
      $region103: #{tpu_custom_call.1} parent=5 // pred_region
        %s1110 = ssub.s32 %s32, 2
        // Predicated region
        $region105: #{tpu_custom_call.1} parent=103 // pred_check
          %p1111 = pneg %p379
        $region106: #{tpu_custom_call.1} parent=103 // pred_check_branch
          %1113 = sbr.rel (%p1111) target = $region108
        $region107: #{tpu_custom_call.1} parent=103 // pred_region
          %s1114 = sand.u32 %s364, 1
          %s1115 = scalar_lea.sflag [#allocation7], %s1114
          %s1116 = sand.u32 %s364, 1
          %s1117 = smul.addr %s1116, 8
          %s1118 = scalar_lea.vmem [#allocation11], %s1117
          %1120 = dma.done %s1115, 128
        $region108: #{tpu_custom_call.1} parent=103 // pred_fallthru
          _
        // Predicated region
        $region109: #{tpu_custom_call.1} parent=103 // pred_check
          %p1121 = pneg %p407
        $region110: #{tpu_custom_call.1} parent=103 // pred_check_branch
          %1123 = sbr.rel (%p1121) target = $region112
        $region111: #{tpu_custom_call.1} parent=103 // pred_region
          %s1124 = sand.u32 %s392, 1
          %s1125 = scalar_lea.sflag [#allocation13], %s1124
          %s1126 = sand.u32 %s392, 1
          %s1127 = smul.addr %s1126, 8
          %s1128 = scalar_lea.vmem [#allocation12], %s1127
          %1130 = dma.done %s1125, 128
        $region112: #{tpu_custom_call.1} parent=103 // pred_fallthru
          _
      $region104: #{tpu_custom_call.1} parent=5 // pred_fallthru
        _
    $region6: #{tpu_custom_call.1} parent=1 // loop_footer
      %s36 = sadd.s32 1, %s32
    $region7: #{tpu_custom_call.1} parent=1 // loop_footer_branch
      %31 = sbr.rel target = $region3
    $region8: #{tpu_custom_call.1} parent=1 // loop_exit
      _
    %1131 = vsyncpa [#allocation6], 1
    %s1132 = scalar_lea.sflag [#allocation6], 1
    %1133 = vsyncpa %s1132, 1
    %1134 = vsyncpa [#allocation9], 1
    %1135 = vsyncpa [#allocation7], 1
    %s1136 = scalar_lea.sflag [#allocation7], 1
    %1137 = vsyncpa %s1136, 1
    %1138 = vsyncpa [#allocation13], 1
    %s1139 = scalar_lea.sflag [#allocation13], 1
    %1140 = vsyncpa %s1139, 1

// kernel: tpu_custom_call.1
$region0: #{tpu_custom_call.1}
  #allocation0 [shape = 'u32[]', space=smem, size = 0x4, offset = 0x4, fixed_abs, tag = 'smem constant byte address 0x4 - core index']
  #allocation1 [shape = 'u32[72,128]{1,0:T(1,128)}', space=vmem, size = 0x9000, scoped, tag = 'internal scratch']
  #allocation2 [shape = 'bf16[2,16,16]{2,1,0:T(8,128)(2,1)}', space=vmem, size = 0x2000, scoped, tag = 'scratch operand']
  #allocation3 [shape = 'bf16[2,16,16]{2,1,0:T(8,128)(2,1)}', space=vmem, size = 0x2000, scoped, tag = 'scratch operand']
  #allocation4 [shape = 'bf16[2,16,16]{2,1,0:T(8,128)(2,1)}', space=vmem, size = 0x2000, scoped, tag = 'scratch operand']
  %s0 = inlined_call_operand.vmem [shape: f32[2,16,32], index: 0, kind: input, shape index: {}]
  %s1 = inlined_call_operand.hbm [shape: f32[2,1,16], index: 1, kind: input, shape index: {}]
  %s2 = inlined_call_operand.vmem [shape: bf16[32,96], index: 2, kind: input, shape index: {}]
  %s3 = inlined_call_operand.vmem [shape: f32[1,96], index: 3, kind: input, shape index: {}]
  %s4 = inlined_call_operand.hbm [shape: bf16[32,32], index: 4, kind: input, shape index: {}]
  %s5 = inlined_call_operand.vmem [shape: f32[1,32], index: 5, kind: input, shape index: {}]
  %s6 = inlined_call_operand.vmem [shape: f32[1,32], index: 6, kind: input, shape index: {}]
  %s7 = inlined_call_operand.vmem [shape: f32[1,32], index: 7, kind: input, shape index: {}]
  %s8 = inlined_call_operand.hbm [shape: bf16[32,64], index: 8, kind: input, shape index: {}]
  %s9 = inlined_call_operand.vmem [shape: f32[1,64], index: 9, kind: input, shape index: {}]
  %s10 = inlined_call_operand.vmem [shape: bf16[64,32], index: 10, kind: input, shape index: {}]
  %s11 = inlined_call_operand.vmem [shape: f32[1,32], index: 11, kind: input, shape index: {}]
  %s12 = inlined_call_operand.vmem [shape: f32[1,32], index: 12, kind: input, shape index: {}]
  %s13 = inlined_call_operand.vmem [shape: f32[1,32], index: 13, kind: input, shape index: {}]
  %s14 = inlined_call_operand.hbm [shape: f32[2,16,32], index: 14, kind: output, shape index: {0}]
  %s15 = inlined_call_operand.hbm [shape: bf16[2,2,16,16], index: 15, kind: output, shape index: {1}]
  %16 = xla_tuple %s14, %s15
  %s17 = sld [smem:[#allocation0]]
  $region113: #{tpu_custom_call.1} parent=0
    _
  %s19 = ssub.s32 1, %s17
  %s20 = scalar_select 0, %s19, %s17
  $region1: #{tpu_custom_call.1} parent=0
    #allocation5 [shape = 'u8[1024]{0}', space=vmem, size = 0x400, scoped, tag = 'input window, operand 1']
    #allocation6 [shape = 's32[2]{0}', space=sflag, size = 0x8, scoped, tag = 'scoped memory for tpu_custom_call.1']
    #allocation7 [shape = 's32[2]{0}', space=sflag, size = 0x8, scoped, tag = 'scoped memory for tpu_custom_call.1']
    #allocation8 [shape = 'u8[8192]{0}', space=vmem, size = 0x2000, scoped, tag = 'input window, operand 4, single buffered']
    #allocation9 [shape = 's32[1]{0}', space=sflag, size = 0x4, scoped, tag = 'scoped memory for tpu_custom_call.1']
    #allocation10 [shape = 'u8[8192]{0}', space=vmem, size = 0x2000, scoped, tag = 'input window, operand 8, single buffered']
    #allocation11 [shape = 'u8[8192]{0}', space=vmem, size = 0x2000, scoped, tag = 'output window, operand 0']
    #allocation12 [shape = 'u8[8192]{0}', space=vmem, size = 0x2000, scoped, tag = 'output window, operand 1']
    #allocation13 [shape = 's32[2]{0}', space=sflag, size = 0x8, scoped, tag = 'scoped memory for tpu_custom_call.1']
    %21 = vsyncpa [#allocation6], 0
    %s22 = scalar_lea.sflag [#allocation6], 1
    %23 = vsyncpa %s22, 0
    %24 = vsyncpa [#allocation9], 0
    %25 = vsyncpa [#allocation7], 0
    %s26 = scalar_lea.sflag [#allocation7], 1
    %27 = vsyncpa %s26, 0
    %28 = vsyncpa [#allocation13], 0
    %s29 = scalar_lea.sflag [#allocation13], 1
    %30 = vsyncpa %s29, 0
    loop: start=0, step=1, limit=6
    $region2: #{tpu_custom_call.1} parent=1 // loop_pre_header
      _
    $region3: #{tpu_custom_call.1} parent=1 // loop_header
      %s32 = sphi 0, %s36
      %p33 = scmp.ge.s32.totalorder %s32, 6
      %s39 = sphi 0, %s51
      %s40 = sphi 0, %s47
      %s41 = sphi 0, %s39
      %s42 = sphi 0, %s40
      %s43 = sphi 0, %s41
      %s44 = sphi 0, %s42
      %s54 = sphi 0, %s56
      %s57 = sphi 0, %s54
      %s58 = sphi 0, %s57
      %s74 = sphi 0, %s58
      %s80 = sphi 0, %s82
      %s83 = sphi 0, %s80
      %s84 = sphi 0, %s83
      %s100 = sphi 0, %s84
      %s104 = sphi 0, %s104
      %s106 = sphi 0, %s104
      %s107 = sphi 0, %s106
      %s121 = sphi 0, %s107
      %s125 = sphi 0, %s125
      %s127 = sphi 0, %s125
      %s128 = sphi 0, %s127
      %s142 = sphi 0, %s128
      %s146 = sphi 0, %s146
      %s148 = sphi 0, %s146
      %s149 = sphi 0, %s148
      %s163 = sphi 0, %s149
      %s167 = sphi 0, %s167
      %s169 = sphi 0, %s167
      %s170 = sphi 0, %s169
      %s184 = sphi 0, %s170
      %s188 = sphi 0, %s188
      %s190 = sphi 0, %s188
      %s191 = sphi 0, %s190
      %s205 = sphi 0, %s191
      %s209 = sphi 0, %s209
      %s211 = sphi 0, %s209
      %s212 = sphi 0, %s211
      %s226 = sphi 0, %s212
      %s230 = sphi 0, %s230
      %s232 = sphi 0, %s230
      %s233 = sphi 0, %s232
      %s247 = sphi 0, %s233
      %s251 = sphi 0, %s251
      %s253 = sphi 0, %s251
      %s254 = sphi 0, %s253
      %s268 = sphi 0, %s254
      %s272 = sphi 0, %s272
      %s274 = sphi 0, %s272
      %s275 = sphi 0, %s274
      %s289 = sphi 0, %s275
      %s293 = sphi 0, %s293
      %s295 = sphi 0, %s293
      %s296 = sphi 0, %s295
      %s310 = sphi 0, %s296
      %s314 = sphi 0, %s314
      %s316 = sphi 0, %s314
      %s317 = sphi 0, %s316
      %s331 = sphi 0, %s317
      %s335 = sphi 0, %s335
      %s337 = sphi 0, %s335
      %s338 = sphi 0, %s337
      %s352 = sphi 0, %s338
      %s360 = sphi 0, %s362
      %s363 = sphi 0, %s360
      %s364 = sphi 0, %s363
      %s380 = sphi 0, %s364
      %s388 = sphi 0, %s390
      %s391 = sphi 0, %s388
      %s392 = sphi 0, %s391
      %s408 = sphi 0, %s392
    $region4: #{tpu_custom_call.1} parent=1 // loop_header_branch
      %35 = sbr.rel (%p33) target = $region8
    $region5: #{tpu_custom_call.1} parent=1 // loop_body
      %s37 = ssub.s32 %s32, 1
      %s38 = ssub.s32 %s32, 2
      %s45 = sadd.s32 1, %s40
      %p46 = scmp.ge.s32.totalorder %s45, 2
      %s47 = scalar_select %p46, 0, %s45
      %s48 = sadd.s32 1, %s39
      %s49 = scalar_select %p46, %s48, %s39
      %p50 = scmp.ge.s32.totalorder %s49, 2
      %s51 = scalar_select %p50, 0, %s49
      %s52 = ssub.s32 %s39, %s51
      %p53 = scmp.eq.s32.totalorder %s52, 0
      %s55 = sadd.s32 %s54, 1
      %s56 = scalar_select %p53, %s54, %s55
      %p59 = pneg %p53
      %p60 = scmp.eq.s32.totalorder %s32, 3
      %p61 = por %p59, %p60
      %p62 = scmp.ne.s32.totalorder %s54, %s57
      %p63 = scmp.eq.s32.totalorder %s32, 0
      %p64 = por %p62, %p63
      %p65 = scmp.ne.s32.totalorder %s54, %s57
      %p66 = scmp.eq.s32.totalorder %s37, 3
      %p67 = por %p65, %p66
      %p68 = scmp.ne.s32.totalorder %s57, %s58
      %p69 = scmp.eq.s32.totalorder %s37, 0
      %p70 = por %p68, %p69
      %p71 = scmp.ne.s32.totalorder %s57, %s58
      %p72 = scmp.eq.s32.totalorder %s38, 3
      %p73 = por %p71, %p72
      %p75 = scmp.ne.s32.totalorder %s58, %s74
      %p76 = scmp.eq.s32.totalorder %s38, 0
      %p77 = por %p75, %p76
      %s78 = ssub.s32 %s39, %s51
      %p79 = scmp.eq.s32.totalorder %s78, 0
      %s81 = sadd.s32 %s80, 1
      %s82 = scalar_select %p79, %s80, %s81
      %p85 = pneg %p79
      %p86 = scmp.eq.s32.totalorder %s32, 3
      %p87 = por %p85, %p86
      %p88 = scmp.ne.s32.totalorder %s80, %s83
      %p89 = scmp.eq.s32.totalorder %s32, 0
      %p90 = por %p88, %p89
      %p91 = scmp.ne.s32.totalorder %s80, %s83
      %p92 = scmp.eq.s32.totalorder %s37, 3
      %p93 = por %p91, %p92
      %p94 = scmp.ne.s32.totalorder %s83, %s84
      %p95 = scmp.eq.s32.totalorder %s37, 0
      %p96 = por %p94, %p95
      %p97 = scmp.ne.s32.totalorder %s83, %s84
      %p98 = scmp.eq.s32.totalorder %s38, 3
      %p99 = por %p97, %p98
      %p101 = scmp.ne.s32.totalorder %s84, %s100
      %p102 = scmp.eq.s32.totalorder %s38, 0
      %p103 = por %p101, %p102
      %s105 = sadd.s32 %s104, 1
      %p108 = scmp.eq.s32.totalorder %s32, 3
      %p109 = scmp.ne.s32.totalorder %s104, %s106
      %p110 = scmp.eq.s32.totalorder %s32, 0
      %p111 = por %p109, %p110
      %p112 = scmp.ne.s32.totalorder %s104, %s106
      %p113 = scmp.eq.s32.totalorder %s37, 3
      %p114 = por %p112, %p113
      %p115 = scmp.ne.s32.totalorder %s106, %s107
      %p116 = scmp.eq.s32.totalorder %s37, 0
      %p117 = por %p115, %p116
      %p118 = scmp.ne.s32.totalorder %s106, %s107
      %p119 = scmp.eq.s32.totalorder %s38, 3
      %p120 = por %p118, %p119
      %p122 = scmp.ne.s32.totalorder %s107, %s121
      %p123 = scmp.eq.s32.totalorder %s38, 0
      %p124 = por %p122, %p123
      %s126 = sadd.s32 %s125, 1
      %p129 = scmp.eq.s32.totalorder %s32, 3
      %p130 = scmp.ne.s32.totalorder %s125, %s127
      %p131 = scmp.eq.s32.totalorder %s32, 0
      %p132 = por %p130, %p131
      %p133 = scmp.ne.s32.totalorder %s125, %s127
      %p134 = scmp.eq.s32.totalorder %s37, 3
      %p135 = por %p133, %p134
      %p136 = scmp.ne.s32.totalorder %s127, %s128
      %p137 = scmp.eq.s32.totalorder %s37, 0
      %p138 = por %p136, %p137
      %p139 = scmp.ne.s32.totalorder %s127, %s128
      %p140 = scmp.eq.s32.totalorder %s38, 3
      %p141 = por %p139, %p140
      %p143 = scmp.ne.s32.totalorder %s128, %s142
      %p144 = scmp.eq.s32.totalorder %s38, 0
      %p145 = por %p143, %p144
      %s147 = sadd.s32 %s146, 1
      %p150 = scmp.eq.s32.totalorder %s32, 3
      %p151 = scmp.ne.s32.totalorder %s146, %s148
      %p152 = scmp.eq.s32.totalorder %s32, 0
      %p153 = por %p151, %p152
      %p154 = scmp.ne.s32.totalorder %s146, %s148
      %p155 = scmp.eq.s32.totalorder %s37, 3
      %p156 = por %p154, %p155
      %p157 = scmp.ne.s32.totalorder %s148, %s149
      %p158 = scmp.eq.s32.totalorder %s37, 0
      %p159 = por %p157, %p158
      %p160 = scmp.ne.s32.totalorder %s148, %s149
      %p161 = scmp.eq.s32.totalorder %s38, 3
      %p162 = por %p160, %p161
      %p164 = scmp.ne.s32.totalorder %s149, %s163
      %p165 = scmp.eq.s32.totalorder %s38, 0
      %p166 = por %p164, %p165
      %s168 = sadd.s32 %s167, 1
      %p171 = scmp.eq.s32.totalorder %s32, 3
      %p172 = scmp.ne.s32.totalorder %s167, %s169
      %p173 = scmp.eq.s32.totalorder %s32, 0
      %p174 = por %p172, %p173
      %p175 = scmp.ne.s32.totalorder %s167, %s169
      %p176 = scmp.eq.s32.totalorder %s37, 3
      %p177 = por %p175, %p176
      %p178 = scmp.ne.s32.totalorder %s169, %s170
      %p179 = scmp.eq.s32.totalorder %s37, 0
      %p180 = por %p178, %p179
      %p181 = scmp.ne.s32.totalorder %s169, %s170
      %p182 = scmp.eq.s32.totalorder %s38, 3
      %p183 = por %p181, %p182
      %p185 = scmp.ne.s32.totalorder %s170, %s184
      %p186 = scmp.eq.s32.totalorder %s38, 0
      %p187 = por %p185, %p186
      %s189 = sadd.s32 %s188, 1
      %p192 = scmp.eq.s32.totalorder %s32, 3
      %p193 = scmp.ne.s32.totalorder %s188, %s190
      %p194 = scmp.eq.s32.totalorder %s32, 0
      %p195 = por %p193, %p194
      %p196 = scmp.ne.s32.totalorder %s188, %s190
      %p197 = scmp.eq.s32.totalorder %s37, 3
      %p198 = por %p196, %p197
      %p199 = scmp.ne.s32.totalorder %s190, %s191
      %p200 = scmp.eq.s32.totalorder %s37, 0
      %p201 = por %p199, %p200
      %p202 = scmp.ne.s32.totalorder %s190, %s191
      %p203 = scmp.eq.s32.totalorder %s38, 3
      %p204 = por %p202, %p203
      %p206 = scmp.ne.s32.totalorder %s191, %s205
      %p207 = scmp.eq.s32.totalorder %s38, 0
      %p208 = por %p206, %p207
      %s210 = sadd.s32 %s209, 1
      %p213 = scmp.eq.s32.totalorder %s32, 3
      %p214 = scmp.ne.s32.totalorder %s209, %s211
      %p215 = scmp.eq.s32.totalorder %s32, 0
      %p216 = por %p214, %p215
      %p217 = scmp.ne.s32.totalorder %s209, %s211
      %p218 = scmp.eq.s32.totalorder %s37, 3
      %p219 = por %p217, %p218
      %p220 = scmp.ne.s32.totalorder %s211, %s212
      %p221 = scmp.eq.s32.totalorder %s37, 0
      %p222 = por %p220, %p221
      %p223 = scmp.ne.s32.totalorder %s211, %s212
      %p224 = scmp.eq.s32.totalorder %s38, 3
      %p225 = por %p223, %p224
      %p227 = scmp.ne.s32.totalorder %s212, %s226
      %p228 = scmp.eq.s32.totalorder %s38, 0
      %p229 = por %p227, %p228
      %s231 = sadd.s32 %s230, 1
      %p234 = scmp.eq.s32.totalorder %s32, 3
      %p235 = scmp.ne.s32.totalorder %s230, %s232
      %p236 = scmp.eq.s32.totalorder %s32, 0
      %p237 = por %p235, %p236
      %p238 = scmp.ne.s32.totalorder %s230, %s232
      %p239 = scmp.eq.s32.totalorder %s37, 3
      %p240 = por %p238, %p239
      %p241 = scmp.ne.s32.totalorder %s232, %s233
      %p242 = scmp.eq.s32.totalorder %s37, 0
      %p243 = por %p241, %p242
      %p244 = scmp.ne.s32.totalorder %s232, %s233
      %p245 = scmp.eq.s32.totalorder %s38, 3
      %p246 = por %p244, %p245
      %p248 = scmp.ne.s32.totalorder %s233, %s247
      %p249 = scmp.eq.s32.totalorder %s38, 0
      %p250 = por %p248, %p249
      %s252 = sadd.s32 %s251, 1
      %p255 = scmp.eq.s32.totalorder %s32, 3
      %p256 = scmp.ne.s32.totalorder %s251, %s253
      %p257 = scmp.eq.s32.totalorder %s32, 0
      %p258 = por %p256, %p257
      %p259 = scmp.ne.s32.totalorder %s251, %s253
      %p260 = scmp.eq.s32.totalorder %s37, 3
      %p261 = por %p259, %p260
      %p262 = scmp.ne.s32.totalorder %s253, %s254
      %p263 = scmp.eq.s32.totalorder %s37, 0
      %p264 = por %p262, %p263
      %p265 = scmp.ne.s32.totalorder %s253, %s254
      %p266 = scmp.eq.s32.totalorder %s38, 3
      %p267 = por %p265, %p266
      %p269 = scmp.ne.s32.totalorder %s254, %s268
      %p270 = scmp.eq.s32.totalorder %s38, 0
      %p271 = por %p269, %p270
      %s273 = sadd.s32 %s272, 1
      %p276 = scmp.eq.s32.totalorder %s32, 3
      %p277 = scmp.ne.s32.totalorder %s272, %s274
      %p278 = scmp.eq.s32.totalorder %s32, 0
      %p279 = por %p277, %p278
      %p280 = scmp.ne.s32.totalorder %s272, %s274
      %p281 = scmp.eq.s32.totalorder %s37, 3
      %p282 = por %p280, %p281
      %p283 = scmp.ne.s32.totalorder %s274, %s275
      %p284 = scmp.eq.s32.totalorder %s37, 0
      %p285 = por %p283, %p284
      %p286 = scmp.ne.s32.totalorder %s274, %s275
      %p287 = scmp.eq.s32.totalorder %s38, 3
      %p288 = por %p286, %p287
      %p290 = scmp.ne.s32.totalorder %s275, %s289
      %p291 = scmp.eq.s32.totalorder %s38, 0
      %p292 = por %p290, %p291
      %s294 = sadd.s32 %s293, 1
      %p297 = scmp.eq.s32.totalorder %s32, 3
      %p298 = scmp.ne.s32.totalorder %s293, %s295
      %p299 = scmp.eq.s32.totalorder %s32, 0
      %p300 = por %p298, %p299
      %p301 = scmp.ne.s32.totalorder %s293, %s295
      %p302 = scmp.eq.s32.totalorder %s37, 3
      %p303 = por %p301, %p302
      %p304 = scmp.ne.s32.totalorder %s295, %s296
      %p305 = scmp.eq.s32.totalorder %s37, 0
      %p306 = por %p304, %p305
      %p307 = scmp.ne.s32.totalorder %s295, %s296
      %p308 = scmp.eq.s32.totalorder %s38, 3
      %p309 = por %p307, %p308
      %p311 = scmp.ne.s32.totalorder %s296, %s310
      %p312 = scmp.eq.s32.totalorder %s38, 0
      %p313 = por %p311, %p312
      %s315 = sadd.s32 %s314, 1
      %p318 = scmp.eq.s32.totalorder %s32, 3
      %p319 = scmp.ne.s32.totalorder %s314, %s316
      %p320 = scmp.eq.s32.totalorder %s32, 0
      %p321 = por %p319, %p320
      %p322 = scmp.ne.s32.totalorder %s314, %s316
      %p323 = scmp.eq.s32.totalorder %s37, 3
      %p324 = por %p322, %p323
      %p325 = scmp.ne.s32.totalorder %s316, %s317
      %p326 = scmp.eq.s32.totalorder %s37, 0
      %p327 = por %p325, %p326
      %p328 = scmp.ne.s32.totalorder %s316, %s317
      %p329 = scmp.eq.s32.totalorder %s38, 3
      %p330 = por %p328, %p329
      %p332 = scmp.ne.s32.totalorder %s317, %s331
      %p333 = scmp.eq.s32.totalorder %s38, 0
      %p334 = por %p332, %p333
      %s336 = sadd.s32 %s335, 1
      %p339 = scmp.eq.s32.totalorder %s32, 3
      %p340 = scmp.ne.s32.totalorder %s335, %s337
      %p341 = scmp.eq.s32.totalorder %s32, 0
      %p342 = por %p340, %p341
      %p343 = scmp.ne.s32.totalorder %s335, %s337
      %p344 = scmp.eq.s32.totalorder %s37, 3
      %p345 = por %p343, %p344
      %p346 = scmp.ne.s32.totalorder %s337, %s338
      %p347 = scmp.eq.s32.totalorder %s37, 0
      %p348 = por %p346, %p347
      %p349 = scmp.ne.s32.totalorder %s337, %s338
      %p350 = scmp.eq.s32.totalorder %s38, 3
      %p351 = por %p349, %p350
      %p353 = scmp.ne.s32.totalorder %s338, %s352
      %p354 = scmp.eq.s32.totalorder %s38, 0
      %p355 = por %p353, %p354
      %s356 = ssub.s32 %s39, %s51
      %s357 = ssub.s32 %s40, %s47
      %s358 = sor.u32 %s356, %s357
      %p359 = scmp.eq.s32.totalorder %s358, 0
      %s361 = sadd.s32 %s360, 1
      %s362 = scalar_select %p359, %s360, %s361
      %p365 = pneg %p359
      %p366 = scmp.eq.s32.totalorder %s32, 3
      %p367 = por %p365, %p366
      %p368 = scmp.ne.s32.totalorder %s360, %s363
      %p369 = scmp.eq.s32.totalorder %s32, 0
      %p370 = por %p368, %p369
      %p371 = scmp.ne.s32.totalorder %s360, %s363
      %p372 = scmp.eq.s32.totalorder %s37, 3
      %p373 = por %p371, %p372
      %p374 = scmp.ne.s32.totalorder %s363, %s364
      %p375 = scmp.eq.s32.totalorder %s37, 0
      %p376 = por %p374, %p375
      %p377 = scmp.ne.s32.totalorder %s363, %s364
      %p378 = scmp.eq.s32.totalorder %s38, 3
      %p379 = por %p377, %p378
      %p381 = scmp.ne.s32.totalorder %s364, %s380
      %p382 = scmp.eq.s32.totalorder %s38, 0
      %p383 = por %p381, %p382
      %s384 = ssub.s32 %s39, %s51
      %s385 = ssub.s32 %s40, %s47
      %s386 = sor.u32 %s384, %s385
      %p387 = scmp.eq.s32.totalorder %s386, 0
      %s389 = sadd.s32 %s388, 1
      %s390 = scalar_select %p387, %s388, %s389
      %p393 = pneg %p387
      %p394 = scmp.eq.s32.totalorder %s32, 3
      %p395 = por %p393, %p394
      %p396 = scmp.ne.s32.totalorder %s388, %s391
      %p397 = scmp.eq.s32.totalorder %s32, 0
      %p398 = por %p396, %p397
      %p399 = scmp.ne.s32.totalorder %s388, %s391
      %p400 = scmp.eq.s32.totalorder %s37, 3
      %p401 = por %p399, %p400
      %p402 = scmp.ne.s32.totalorder %s391, %s392
      %p403 = scmp.eq.s32.totalorder %s37, 0
      %p404 = por %p402, %p403
      %p405 = scmp.ne.s32.totalorder %s391, %s392
      %p406 = scmp.eq.s32.totalorder %s38, 3
      %p407 = por %p405, %p406
      %p409 = scmp.ne.s32.totalorder %s392, %s408
      %p410 = scmp.eq.s32.totalorder %s38, 0
      %p411 = por %p409, %p410
      %p412 = scmp.le.s32.totalorder 1, %s32
      %p413 = scmp.lt.s32.totalorder %s32, 5
      %p414 = pnand %p412, %p413
      %p415 = pneg %p414
      // Predicated region
      $region9: #{tpu_custom_call.1} parent=5 // pred_check
        _
      $region10: #{tpu_custom_call.1} parent=5 // pred_check_branch
        %417 = sbr.rel (%p414) target = $region12
      $region11: #{tpu_custom_call.1} parent=5 // pred_region
        %s418 = ssub.s32 %s32, 1
        // Predicated region
        $region13: #{tpu_custom_call.1} parent=11 // pred_check
          %p419 = pneg %p117
        $region14: #{tpu_custom_call.1} parent=11 // pred_check_branch
          %421 = sbr.rel (%p419) target = $region16
        $region15: #{tpu_custom_call.1} parent=11 // pred_region
          _
        $region16: #{tpu_custom_call.1} parent=11 // pred_fallthru
          _
        // Predicated region
        $region17: #{tpu_custom_call.1} parent=11 // pred_check
          %p422 = pneg %p138
        $region18: #{tpu_custom_call.1} parent=11 // pred_check_branch
          %424 = sbr.rel (%p422) target = $region20
        $region19: #{tpu_custom_call.1} parent=11 // pred_region
          _
        $region20: #{tpu_custom_call.1} parent=11 // pred_fallthru
          _
        // Predicated region
        $region21: #{tpu_custom_call.1} parent=11 // pred_check
          %p425 = pneg %p159
        $region22: #{tpu_custom_call.1} parent=11 // pred_check_branch
          %427 = sbr.rel (%p425) target = $region24
        $region23: #{tpu_custom_call.1} parent=11 // pred_region
          %429 = vsyncadd [#allocation9], 0
          %s430 = sshll.u32 %s4, 4
          %s431 = int_to_ptr.hbm [resolvable:$true] %s430
          %s432 = sshll.u32 [#allocation8], 4
          %s433 = int_to_ptr.vmem [resolvable:$true] %s432
          %438 = dma.hbm_to_vmem [thread:$0]  %s431, 256, %s433, [#allocation9], 64, 64, 4
        $region24: #{tpu_custom_call.1} parent=11 // pred_fallthru
          _
        // Predicated region
        $region25: #{tpu_custom_call.1} parent=11 // pred_check
          %p439 = pneg %p180
        $region26: #{tpu_custom_call.1} parent=11 // pred_check_branch
          %441 = sbr.rel (%p439) target = $region28
        $region27: #{tpu_custom_call.1} parent=11 // pred_region
          _
        $region28: #{tpu_custom_call.1} parent=11 // pred_fallthru
          _
        // Predicated region
        $region29: #{tpu_custom_call.1} parent=11 // pred_check
          %p442 = pneg %p201
        $region30: #{tpu_custom_call.1} parent=11 // pred_check_branch
          %444 = sbr.rel (%p442) target = $region32
        $region31: #{tpu_custom_call.1} parent=11 // pred_region
          _
        $region32: #{tpu_custom_call.1} parent=11 // pred_fallthru
          _
        // Predicated region
        $region33: #{tpu_custom_call.1} parent=11 // pred_check
          %p445 = pneg %p222
        $region34: #{tpu_custom_call.1} parent=11 // pred_check_branch
          %447 = sbr.rel (%p445) target = $region36
        $region35: #{tpu_custom_call.1} parent=11 // pred_region
          _
        $region36: #{tpu_custom_call.1} parent=11 // pred_fallthru
          _
        // Predicated region
        $region37: #{tpu_custom_call.1} parent=11 // pred_check
          %p448 = pneg %p243
        $region38: #{tpu_custom_call.1} parent=11 // pred_check_branch
          %450 = sbr.rel (%p448) target = $region40
        $region39: #{tpu_custom_call.1} parent=11 // pred_region
          %452 = vsyncadd [#allocation9], 0
          %s453 = sshll.u32 %s8, 4
          %s454 = int_to_ptr.hbm [resolvable:$true] %s453
          %s455 = sshll.u32 [#allocation10], 4
          %s456 = int_to_ptr.vmem [resolvable:$true] %s455
          %461 = dma.hbm_to_vmem [thread:$0]  %s454, 256, %s456, [#allocation9], 64, 64, 4
        $region40: #{tpu_custom_call.1} parent=11 // pred_fallthru
          _
        // Predicated region
        $region41: #{tpu_custom_call.1} parent=11 // pred_check
          %p462 = pneg %p264
        $region42: #{tpu_custom_call.1} parent=11 // pred_check_branch
          %464 = sbr.rel (%p462) target = $region44
        $region43: #{tpu_custom_call.1} parent=11 // pred_region
          _
        $region44: #{tpu_custom_call.1} parent=11 // pred_fallthru
          _
        // Predicated region
        $region45: #{tpu_custom_call.1} parent=11 // pred_check
          %p465 = pneg %p285
        $region46: #{tpu_custom_call.1} parent=11 // pred_check_branch
          %467 = sbr.rel (%p465) target = $region48
        $region47: #{tpu_custom_call.1} parent=11 // pred_region
          _
        $region48: #{tpu_custom_call.1} parent=11 // pred_fallthru
          _
        // Predicated region
        $region49: #{tpu_custom_call.1} parent=11 // pred_check
          %p468 = pneg %p306
        $region50: #{tpu_custom_call.1} parent=11 // pred_check_branch
          %470 = sbr.rel (%p468) target = $region52
        $region51: #{tpu_custom_call.1} parent=11 // pred_region
          _
        $region52: #{tpu_custom_call.1} parent=11 // pred_fallthru
          _
        // Predicated region
        $region53: #{tpu_custom_call.1} parent=11 // pred_check
          %p471 = pneg %p327
        $region54: #{tpu_custom_call.1} parent=11 // pred_check_branch
          %473 = sbr.rel (%p471) target = $region56
        $region55: #{tpu_custom_call.1} parent=11 // pred_region
          _
        $region56: #{tpu_custom_call.1} parent=11 // pred_fallthru
          _
        // Predicated region
        $region57: #{tpu_custom_call.1} parent=11 // pred_check
          %p474 = pneg %p348
        $region58: #{tpu_custom_call.1} parent=11 // pred_check_branch
          %476 = sbr.rel (%p474) target = $region60
        $region59: #{tpu_custom_call.1} parent=11 // pred_region
          _
        $region60: #{tpu_custom_call.1} parent=11 // pred_fallthru
          _
      $region12: #{tpu_custom_call.1} parent=5 // pred_fallthru
        _
      %p477 = scmp.lt.s32.totalorder %s32, 4
      // Predicated region
      $region61: #{tpu_custom_call.1} parent=5 // pred_check
        %p478 = pneg %p477
      $region62: #{tpu_custom_call.1} parent=5 // pred_check_branch
        %480 = sbr.rel (%p478) target = $region64
      $region63: #{tpu_custom_call.1} parent=5 // pred_region
        // Predicated region
        $region65: #{tpu_custom_call.1} parent=63 // pred_check
          %p481 = pneg %p64
        $region66: #{tpu_custom_call.1} parent=63 // pred_check_branch
          %483 = sbr.rel (%p481) target = $region68
        $region67: #{tpu_custom_call.1} parent=63 // pred_region
          %p484 = scmp.lt.s32.totalorder %s39, 1
          %s485 = scalar_select %p484, %s39, 1
          %s486 = smul.addr %s485, 2
          %s487 = smul.addr %s486, 8
          %s488 = scalar_lea.vmem %s0, %s487
        $region68: #{tpu_custom_call.1} parent=63 // pred_fallthru
          _
        // Predicated region
        $region69: #{tpu_custom_call.1} parent=63 // pred_check
          %p489 = pneg %p90
        $region70: #{tpu_custom_call.1} parent=63 // pred_check_branch
          %491 = sbr.rel (%p489) target = $region72
        $region71: #{tpu_custom_call.1} parent=63 // pred_region
          %s492 = sand.u32 %s80, 1
          %s493 = scalar_lea.sflag [#allocation6], %s492
          %s494 = sand.u32 %s80, 1
          %s495 = scalar_lea.vmem [#allocation5], %s494
          %497 = vsyncadd %s493, 0
          %s498 = scalar_lea.hbm %s1, %s39
          %s500 = sshll.u32 %s498, 4
          %s501 = int_to_ptr.hbm [resolvable:$true] %s500
          %s502 = sshll.u32 %s495, 4
          %s503 = int_to_ptr.vmem [resolvable:$true] %s502
          %505 = dma.hbm_to_vmem [thread:$0]  %s501, 16, %s503, %s493
        $region72: #{tpu_custom_call.1} parent=63 // pred_fallthru
          _
      $region64: #{tpu_custom_call.1} parent=5 // pred_fallthru
        _
      %p506 = scmp.le.s32.totalorder 1, %s32
      %p507 = scmp.lt.s32.totalorder %s32, 5
      %p508 = pnand %p506, %p507
      %p509 = pneg %p508
      // Predicated region
      $region73: #{tpu_custom_call.1} parent=5 // pred_check
        _
      $region74: #{tpu_custom_call.1} parent=5 // pred_check_branch
        %511 = sbr.rel (%p508) target = $region76
      $region75: #{tpu_custom_call.1} parent=5 // pred_region
        %s512 = ssub.s32 %s32, 1
        %s513 = sand.u32 %s83, 1
        %s514 = scalar_lea.sflag [#allocation6], %s513
        %s515 = sand.u32 %s83, 1
        %s516 = scalar_lea.vmem [#allocation5], %s515
        // Predicated region
        $region77: #{tpu_custom_call.1} parent=75 // pred_check
          %p517 = pneg %p96
        $region78: #{tpu_custom_call.1} parent=75 // pred_check_branch
          %519 = sbr.rel (%p517) target = $region80
        $region79: #{tpu_custom_call.1} parent=75 // pred_region
          %521 = dma.done %s514, 16
        $region80: #{tpu_custom_call.1} parent=75 // pred_fallthru
          _
        // Predicated region
        $region81: #{tpu_custom_call.1} parent=75 // pred_check
          %p522 = pneg %p159
        $region82: #{tpu_custom_call.1} parent=75 // pred_check_branch
          %524 = sbr.rel (%p522) target = $region84
        $region83: #{tpu_custom_call.1} parent=75 // pred_region
          %526 = dma.done [#allocation9], 256
        $region84: #{tpu_custom_call.1} parent=75 // pred_fallthru
          _
        // Predicated region
        $region85: #{tpu_custom_call.1} parent=75 // pred_check
          %p527 = pneg %p243
        $region86: #{tpu_custom_call.1} parent=75 // pred_check_branch
          %529 = sbr.rel (%p527) target = $region88
        $region87: #{tpu_custom_call.1} parent=75 // pred_region
          %531 = dma.done [#allocation9], 256
        $region88: #{tpu_custom_call.1} parent=75 // pred_fallthru
          _
        %p532 = scmp.lt.s32.totalorder %s41, 1
        %s533 = scalar_select %p532, %s41, 1
        %s534 = smul.addr %s533, 2
        %s535 = smul.addr %s534, 8
        %s536 = scalar_lea.vmem %s0, %s535
        %p537 = pneg %p70
        %p538 = pneg %p67
        %s539 = sand.u32 %s83, 1
        %s540 = scalar_lea.sflag [#allocation6], %s539
        %s541 = sand.u32 %s83, 1
        %s542 = scalar_lea.vmem [#allocation5], %s541
        %p543 = pneg %p96
        %p544 = pneg %p93
        %p545 = pneg %p117
        %p546 = pneg %p114
        %p547 = pneg %p138
        %p548 = pneg %p135
        %p549 = pneg %p159
        %p550 = pneg %p156
        %p551 = pneg %p180
        %p552 = pneg %p177
        %p553 = pneg %p201
        %p554 = pneg %p198
        %p555 = pneg %p222
        %p556 = pneg %p219
        %p557 = pneg %p243
        %p558 = pneg %p240
        %p559 = pneg %p264
        %p560 = pneg %p261
        %p561 = pneg %p285
        %p562 = pneg %p282
        %p563 = pneg %p306
        %p564 = pneg %p303
        %p565 = pneg %p327
        %p566 = pneg %p324
        %p567 = pneg %p348
        %p568 = pneg %p345
        %p569 = pneg %p376
        %p570 = pneg %p373
        %s571 = sand.u32 %s363, 1
        %s572 = scalar_lea.sflag [#allocation7], %s571
        %s573 = sand.u32 %s363, 1
        %s574 = smul.addr %s573, 8
        %s575 = scalar_lea.vmem [#allocation11], %s574
        %p576 = pneg %p404
        %p577 = pneg %p401
        %s578 = sand.u32 %s391, 1
        %s579 = scalar_lea.sflag [#allocation13], %s578
        %s580 = sand.u32 %s391, 1
        %s581 = smul.addr %s580, 8
        %s582 = scalar_lea.vmem [#allocation12], %s581
        %p583 = scmp.lt.s32.totalorder %s41, 1
        %s584 = scalar_select %p583, %s41, 1
        %s585 = smul.addr %s584, 2
        %s586 = smul.addr %s585, 8
        %s587 = scalar_lea.vmem %s0, %s586
        %p589 = scmp.eq.s32.totalorder %s42, 0
        // Predicated region
        $region89: #{tpu_custom_call.1} parent=75 // pred_check
          %p590 = pneg %p589
        $region90: #{tpu_custom_call.1} parent=75 // pred_check_branch
          %592 = sbr.rel (%p590) target = $region92
        $region91: #{tpu_custom_call.1} parent=75 // pred_region
          %v593 = vld [vmem:[%s587] sm:$0xff]
          %v594 = vld [vmem:[%s587 + $0x8] sm:$0xff]
          %v595 = vpack.c.bf16 %v594, %v593
          %v596 = vld [vmem:[%s2] sm:$0xf]
          %v597 = vld [vmem:[%s2 + $0x4] sm:$0xf]
          %v598 = vld [vmem:[%s2 + $0x8] sm:$0xf]
          %v599 = vld [vmem:[%s2 + $0xc] sm:$0xf]
          %v600 = vld [vmem:[%s3] sm:$0x1]
          %v602 = vperm.slane %v600, 0
          %v608 = vunpack.c.l.b16 %v596
          %v609 = vunpack.c.l.b16 %v597
          %v610 = vunpack.c.l.b16 %v598
          %v611 = vunpack.c.l.b16 %v599
          %v612 = vpack.c.b16 %v609, %v608
          %v613 = vpack.c.b16 %v611, %v610
          %vm616 = vcmask 261120
          %v618 = vsel %vm616, %v595, 0
          %620 = vmatpush.bf16.msra.mxu0 0
          %621 = vmatpush.bf16.msra.mxu0 0
          %622 = vmatpush.bf16.msra.mxu0 0
          %623 = vmatpush.bf16.msra.mxu0 0
          %624 = vmatpush.bf16.msra.mxu0 0
          %625 = vmatpush.bf16.msra.mxu0 0
          %626 = vmatpush.bf16.msra.mxu0 %v613
          %627 = vmatpush.bf16.msra.mxu0 %v612
          %628 = vmatmul.bf16.gmra.mxu0 %v618
          %v629 = vpop.f32.mrf.mxu0
          %v630 = vadd.f32 %v602, %v629
          %v631 = vpop.f32.mrf.mxu0
          %v632 = vadd.f32 %v602, %v631
          %633 = vdwg.mxu0
          %v634 = vpack.c.bf16 %v630, %v630
          %v635 = vpack.c.bf16 %v632, %v632
          %vm636 = vcmask 125952
          %637 = vst.msk [vmem:[#allocation2] sm:$0xf] %vm636, %v634
          %638 = vst.msk [vmem:[#allocation2 + $0x4] sm:$0xf] %vm636, %v635
          %641 = vrot.lane.b32.xlu0 %v634, 96
          %v642 = vpop.permute.xlu0 %641
          %643 = vrot.lane.b32.xlu0 %v635, 96
          %v644 = vpop.permute.xlu0 %643
          %647 = vst.msk [vmem:[#allocation3] sm:$0xf] %vm636, %v642
          %648 = vst.msk [vmem:[#allocation3 + $0x4] sm:$0xf] %vm636, %v644
          %649 = vrot.lane.b32.xlu0 %v634, 64
          %v650 = vpop.permute.xlu0 %649
          %651 = vrot.lane.b32.xlu0 %v635, 64
          %v652 = vpop.permute.xlu0 %651
          %655 = vst.msk [vmem:[#allocation4] sm:$0xf] %vm636, %v650
          %656 = vst.msk [vmem:[#allocation4 + $0x4] sm:$0xf] %vm636, %v652
          %657 = vrot.lane.b32.xlu0 %v634, 112
          %v658 = vpop.permute.xlu0 %657
          %659 = vrot.lane.b32.xlu0 %v635, 112
          %v660 = vpop.permute.xlu0 %659
          %s663 = scalar_lea.vmem [#allocation2], 8
          %664 = vst.msk [vmem:[%s663] sm:$0xf] %vm636, %v658
          %665 = vst.msk [vmem:[%s663 + $0x4] sm:$0xf] %vm636, %v660
          %666 = vrot.lane.b32.xlu0 %v634, 80
          %v667 = vpop.permute.xlu0 %666
          %668 = vrot.lane.b32.xlu0 %v635, 80
          %v669 = vpop.permute.xlu0 %668
          %s672 = scalar_lea.vmem [#allocation3], 8
          %673 = vst.msk [vmem:[%s672] sm:$0xf] %vm636, %v667
          %674 = vst.msk [vmem:[%s672 + $0x4] sm:$0xf] %vm636, %v669
          %675 = vrot.lane.b32.xlu0 %v634, 48
          %v676 = vpop.permute.xlu0 %675
          %677 = vrot.lane.b32.xlu0 %v635, 48
          %v678 = vpop.permute.xlu0 %677
          %s681 = scalar_lea.vmem [#allocation4], 8
          %682 = vst.msk [vmem:[%s681] sm:$0xf] %vm636, %v676
          %683 = vst.msk [vmem:[%s681 + $0x4] sm:$0xf] %vm636, %v678
        $region92: #{tpu_custom_call.1} parent=75 // pred_fallthru
          _
        %s684 = smul.u32 %s42, 8
        %s685 = sshra.s32 %s684, 3
        %s686 = sand.u32 %s684, 7
        %s687 = smul.addr %s685, 4
        %s688 = scalar_lea.vmem [#allocation2], %s687
        %v689 = vld [vmem:[%s688] sm:$0xf]
        %v690 = vld [vmem:[%s688 + $0x8] sm:$0xf]
        %v691 = vld [vmem:[#allocation3] sm:$0xf]
        %v692 = vld [vmem:[#allocation3 + $0x4] sm:$0xf]
        %v693 = vld [vmem:[#allocation3 + $0x8] sm:$0xf]
        %v694 = vld [vmem:[#allocation3 + $0xc] sm:$0xf]
        %v695 = vld [vmem:[%s516] sm:$0x1]
        %v697 = vperm.slane %v695, 0
        %v701 = vunpack.c.l.b16 %v691
        %v702 = vunpack.c.l.b16 %v692
        %v703 = vpack.c.b16 %v702, %v701
        %vm704 = vcmask 130048
        %v706 = vsel %vm704, %v689, 0
        %v709 = vsel %vm704, %v703, 0
        %711 = vmatpush.bf16.xpose.msra.mxu0 0
        %712 = vmatpush.bf16.xpose.msra.mxu0 0
        %713 = vmatpush.bf16.xpose.msra.mxu0 0
        %714 = vmatpush.bf16.xpose.msra.mxu0 0
        %715 = vmatpush.bf16.xpose.msra.mxu0 0
        %716 = vmatpush.bf16.xpose.msra.mxu0 0
        %717 = vmatpush.bf16.xpose.msra.mxu0 0
        %718 = vmatpush.bf16.xpose.msra.mxu0 %v709
        %719 = vmatmul.bf16.gmra.mxu0 %v706
        %v720 = vpop.f32.mrf.mxu0
        %v721 = vadd.f32 %v697, %v720
        %v722 = vpop.f32.mrf.mxu0
        %723 = vdwg.mxu0
        %v726 = vunpack.c.l.b16 %v693
        %v727 = vunpack.c.l.b16 %v694
        %v728 = vpack.c.b16 %v727, %v726
        %v730 = vsel %vm704, %v690, 0
        %v733 = vsel %vm704, %v728, 0
        %735 = vmatpush.bf16.xpose.msra.mxu0 0
        %736 = vmatpush.bf16.xpose.msra.mxu0 0
        %737 = vmatpush.bf16.xpose.msra.mxu0 0
        %738 = vmatpush.bf16.xpose.msra.mxu0 0
        %739 = vmatpush.bf16.xpose.msra.mxu0 0
        %740 = vmatpush.bf16.xpose.msra.mxu0 0
        %741 = vmatpush.bf16.xpose.msra.mxu0 0
        %742 = vmatpush.bf16.xpose.msra.mxu0 %v733
        %743 = vmatmul.bf16.gmra.mxu0 %v730
        %v744 = vpop.f32.mrf.mxu0
        %v745 = vadd.f32 %v697, %v744
        %v746 = vpop.f32.mrf.mxu0
        %747 = vdwg.mxu0
        %v748 = vsel %vm704, %v721, -inf
        %749 = vmax.xlane.f32.xlu0 %v748
        %v750 = vpop.xlane.xlu0 %749
        %v751 = vsel %vm704, %v745, -inf
        %752 = vmax.xlane.f32.xlu0 %v751
        %v753 = vpop.xlane.xlu0 %752
        %v754 = vsub.f32 %v721, %v750
        %v755 = vsub.f32 %v745, %v753
        %v756 = vmul.f32 %v754, 1.442695
        %v757 = vpow.pop %v756
        %v758 = vmul.f32 %v755, 1.442695
        %v759 = vpow.pop %v758
        %v760 = vsel %vm704, %v757, 0.0
        %761 = vadd.xlane.f32.xlu0 %v760
        %v762 = vpop.xlane.xlu0 %761
        %v763 = vsel %vm704, %v759, 0.0
        %764 = vadd.xlane.f32.xlu0 %v763
        %v765 = vpop.xlane.xlu0 %764
        %v766 = vrcp.pop %v762
        %v767 = vmul.f32 %v762, %v766
        %v768 = vsub.f32 1.0, %v767
        %v769 = vmul.f32 %v766, %v768
        %v770 = vadd.f32 %v766, %v769
        %vm771 = vweird.f32 %v762
        %vm772 = vweird.f32 %v766
        %vm773 = vmor %vm771, %vm772
        %v774 = vsel %vm773, %v766, %v770
        %v775 = vand.u32 2147483647, %v762
        %vm776 = vcmp.eq.f32.partialorder %v775, 8.507059e+37
        %v777 = vand.u32 %v762, 2147483648
        %v778 = vor.u32 1.1754944e-38, %v777
        %v779 = vsel %vm776, %v778, %v774
        %v780 = vmul.f32 1.0, %v779
        %v781 = vrcp.pop %v765
        %v782 = vmul.f32 %v765, %v781
        %v783 = vsub.f32 1.0, %v782
        %v784 = vmul.f32 %v781, %v783
        %v785 = vadd.f32 %v781, %v784
        %vm786 = vweird.f32 %v765
        %vm787 = vweird.f32 %v781
        %vm788 = vmor %vm786, %vm787
        %v789 = vsel %vm788, %v781, %v785
        %v790 = vand.u32 2147483647, %v765
        %vm791 = vcmp.eq.f32.partialorder %v790, 8.507059e+37
        %v792 = vand.u32 %v765, 2147483648
        %v793 = vor.u32 1.1754944e-38, %v792
        %v794 = vsel %vm791, %v793, %v789
        %v795 = vmul.f32 1.0, %v794
        %v796 = vmul.f32 %v757, %v780
        %v797 = vmul.f32 %v759, %v795
        %v798 = vpack.c.bf16 %v796, %v796
        %v799 = vpack.c.bf16 %v797, %v797
        %vm800 = vcmask 125952
        %801 = vst.msk [vmem:[%s582] sm:$0xf] %vm800, %v798
        %802 = vst.msk [vmem:[%s582 + $0x4] sm:$0xf] %vm800, %v799
        %v803 = vld [vmem:[#allocation4] sm:$0xf]
        %v804 = vld [vmem:[#allocation4 + $0x4] sm:$0xf]
        %v805 = vld [vmem:[#allocation4 + $0x8] sm:$0xf]
        %v806 = vld [vmem:[#allocation4 + $0xc] sm:$0xf]
        %v809 = vunpack.c.l.b16 %v803
        %v810 = vunpack.c.l.b16 %v804
        %v811 = vpack.c.b16 %v810, %v809
        %v814 = vsel %vm704, %v798, 0
        %816 = vmatpush.bf16.msra.mxu0 0
        %817 = vmatpush.bf16.msra.mxu0 0
        %818 = vmatpush.bf16.msra.mxu0 0
        %819 = vmatpush.bf16.msra.mxu0 0
        %820 = vmatpush.bf16.msra.mxu0 0
        %821 = vmatpush.bf16.msra.mxu0 0
        %822 = vmatpush.bf16.msra.mxu0 0
        %823 = vmatpush.bf16.msra.mxu0 %v811
        %824 = vmatmul.bf16.gmra.mxu0 %v814
        %v825 = vpop.f32.mrf.mxu0
        %v826 = vadd.f32 0.0, %v825
        %v827 = vpop.f32.mrf.mxu0
        %828 = vdwg.mxu0
        %v831 = vunpack.c.l.b16 %v805
        %v832 = vunpack.c.l.b16 %v806
        %v833 = vpack.c.b16 %v832, %v831
        %v836 = vsel %vm704, %v799, 0
        %838 = vmatpush.bf16.msra.mxu0 0
        %839 = vmatpush.bf16.msra.mxu0 0
        %840 = vmatpush.bf16.msra.mxu0 0
        %841 = vmatpush.bf16.msra.mxu0 0
        %842 = vmatpush.bf16.msra.mxu0 0
        %843 = vmatpush.bf16.msra.mxu0 0
        %844 = vmatpush.bf16.msra.mxu0 0
        %845 = vmatpush.bf16.msra.mxu0 %v833
        %846 = vmatmul.bf16.gmra.mxu0 %v836
        %v847 = vpop.f32.mrf.mxu0
        %v848 = vadd.f32 0.0, %v847
        %v849 = vpop.f32.mrf.mxu0
        %850 = vdwg.mxu0
        %852 = vrot.lane.b32.xlu0 %v848, 16
        %v853 = vpop.permute.xlu0 %852
        %v855 = vsel %vm704, %v826, %v853
        %v856 = vpack.c.bf16 %v855, %v855
        %v857 = vld [vmem:[#allocation8] sm:$0xf]
        %v858 = vld [vmem:[#allocation8 + $0x4] sm:$0xf]
        %v859 = vld [vmem:[#allocation8 + $0x8] sm:$0xf]
        %v860 = vld [vmem:[#allocation8 + $0xc] sm:$0xf]
        %v861 = vld [vmem:[%s5] sm:$0x1]
        %v863 = vperm.slane %v861, 0
        %v869 = vunpack.c.l.b16 %v857
        %v870 = vunpack.c.l.b16 %v858
        %v871 = vunpack.c.l.b16 %v859
        %v872 = vunpack.c.l.b16 %v860
        %v873 = vpack.c.b16 %v870, %v869
        %v874 = vpack.c.b16 %v872, %v871
        %vm877 = vcmask 261120
        %v879 = vsel %vm877, %v856, 0
        %881 = vmatpush.bf16.msra.mxu0 0
        %882 = vmatpush.bf16.msra.mxu0 0
        %883 = vmatpush.bf16.msra.mxu0 0
        %884 = vmatpush.bf16.msra.mxu0 0
        %885 = vmatpush.bf16.msra.mxu0 0
        %886 = vmatpush.bf16.msra.mxu0 0
        %887 = vmatpush.bf16.msra.mxu0 %v874
        %888 = vmatpush.bf16.msra.mxu0 %v873
        %889 = vmatmul.bf16.gmra.mxu0 %v879
        %v890 = vpop.f32.mrf.mxu0
        %v891 = vadd.f32 %v863, %v890
        %v892 = vpop.f32.mrf.mxu0
        %893 = vdwg.mxu0
        %s894 = scalar_lea.vmem %s587, %s684
        %v895 = vld [vmem:[%s894] sm:$0xff]
        %v896 = vadd.f32 %v891, %v895
        %v897 = vld [vmem:[%s6] sm:$0x1]
        %v898 = vld [vmem:[%s7] sm:$0x1]
        %v899 = vsel %vm877, %v896, 0.0
        %900 = vadd.xlane.f32.xlu0 %v899
        %v901 = vpop.xlane.xlu0 %900
        %v902 = vrcp.pop 32.0
        %v903 = vmul.f32 32.0, %v902
        %v904 = vsub.f32 1.0, %v903
        %v905 = vmul.f32 %v902, %v904
        %v906 = vadd.f32 %v902, %v905
        %vm907 = vweird.f32 %v902
        %v908 = vsel %vm907, %v902, %v906
        %v909 = vmul.f32 %v901, %v908
        %v910 = vsub.f32 %v896, %v909
        %v911 = vmul.f32 %v910, %v910
        %v912 = vsel %vm877, %v911, 0.0
        %913 = vadd.xlane.f32.xlu0 %v912
        %v914 = vpop.xlane.xlu0 %913
        %v915 = vmul.f32 %v914, %v908
        %v916 = vadd.f32 %v915, 1e-05
        %v917 = vrsqrt.pop %v916
        %v918 = vmul.f32 %v917, %v916
        %v919 = vmul.f32 %v918, %v917
        %v920 = vmul.f32 0.5, %v919
        %v921 = vsub.f32 1.5, %v920
        %v922 = vmul.f32 %v917, %v921
        %vm923 = vweird.f32 %v916
        %vm924 = vweird.f32 %v917
        %vm925 = vmor %vm923, %vm924
        %v926 = vsel %vm925, %v917, %v922
        %v927 = vmul.f32 %v910, %v926
        %v929 = vperm.slane %v897, 0
        %v931 = vmul.f32 %v927, %v929
        %v933 = vperm.slane %v898, 0
        %v935 = vadd.f32 %v931, %v933
        %v936 = vpack.c.bf16 %v935, %v935
        %v937 = vld [vmem:[#allocation10] sm:$0xf]
        %v938 = vld [vmem:[#allocation10 + $0x4] sm:$0xf]
        %v939 = vld [vmem:[#allocation10 + $0x8] sm:$0xf]
        %v940 = vld [vmem:[#allocation10 + $0xc] sm:$0xf]
        %v941 = vld [vmem:[%s9] sm:$0x1]
        %v943 = vperm.slane %v941, 0
        %v949 = vunpack.c.l.b16 %v937
        %v950 = vunpack.c.l.b16 %v938
        %v951 = vunpack.c.l.b16 %v939
        %v952 = vunpack.c.l.b16 %v940
        %v953 = vpack.c.b16 %v950, %v949
        %v954 = vpack.c.b16 %v952, %v951
        %v958 = vsel %vm877, %v936, 0
        %960 = vmatpush.bf16.msra.mxu0 0
        %961 = vmatpush.bf16.msra.mxu0 0
        %962 = vmatpush.bf16.msra.mxu0 0
        %963 = vmatpush.bf16.msra.mxu0 0
        %964 = vmatpush.bf16.msra.mxu0 0
        %965 = vmatpush.bf16.msra.mxu0 0
        %966 = vmatpush.bf16.msra.mxu0 %v954
        %967 = vmatpush.bf16.msra.mxu0 %v953
        %968 = vmatmul.bf16.gmra.mxu0 %v958
        %v969 = vpop.f32.mrf.mxu0
        %v970 = vadd.f32 %v943, %v969
        %v971 = vpop.f32.mrf.mxu0
        %972 = vdwg.mxu0
        %v973 = vmax.f32 %v970, 0.0
        %v974 = vpack.c.bf16 %v973, %v973
        %v975 = vld [vmem:[%s10] sm:$0xf]
        %v976 = vld [vmem:[%s10 + $0x4] sm:$0xf]
        %v977 = vld [vmem:[%s10 + $0x8] sm:$0xf]
        %v978 = vld [vmem:[%s10 + $0xc] sm:$0xf]
        %v979 = vld [vmem:[%s10 + $0x10] sm:$0xf]
        %v980 = vld [vmem:[%s10 + $0x14] sm:$0xf]
        %v981 = vld [vmem:[%s10 + $0x18] sm:$0xf]
        %v982 = vld [vmem:[%s10 + $0x1c] sm:$0xf]
        %v983 = vld [vmem:[%s11] sm:$0x1]
        %v985 = vperm.slane %v983, 0
        %v995 = vunpack.c.l.b16 %v975
        %v996 = vunpack.c.l.b16 %v976
        %v997 = vunpack.c.l.b16 %v977
        %v998 = vunpack.c.l.b16 %v978
        %v999 = vunpack.c.l.b16 %v979
        %v1000 = vunpack.c.l.b16 %v980
        %v1001 = vunpack.c.l.b16 %v981
        %v1002 = vunpack.c.l.b16 %v982
        %v1003 = vpack.c.b16 %v996, %v995
        %v1004 = vpack.c.b16 %v998, %v997
        %v1005 = vpack.c.b16 %v1000, %v999
        %v1006 = vpack.c.b16 %v1002, %v1001
        %vm1011 = vcmask 523264
        %v1013 = vsel %vm1011, %v974, 0
        %1015 = vmatpush.bf16.msra.mxu0 0
        %1016 = vmatpush.bf16.msra.mxu0 0
        %1017 = vmatpush.bf16.msra.mxu0 0
        %1018 = vmatpush.bf16.msra.mxu0 0
        %1019 = vmatpush.bf16.msra.mxu0 %v1006
        %1020 = vmatpush.bf16.msra.mxu0 %v1005
        %1021 = vmatpush.bf16.msra.mxu0 %v1004
        %1022 = vmatpush.bf16.msra.mxu0 %v1003
        %1023 = vmatmul.bf16.gmra.mxu0 %v1013
        %v1024 = vpop.f32.mrf.mxu0
        %v1025 = vadd.f32 %v985, %v1024
        %v1026 = vpop.f32.mrf.mxu0
        %1027 = vdwg.mxu0
        %v1028 = vadd.f32 %v1025, %v935
        %v1029 = vld [vmem:[%s12] sm:$0x1]
        %v1030 = vld [vmem:[%s13] sm:$0x1]
        %v1031 = vsel %vm877, %v1028, 0.0
        %1032 = vadd.xlane.f32.xlu0 %v1031
        %v1033 = vpop.xlane.xlu0 %1032
        %v1034 = vmul.f32 %v1033, %v908
        %v1035 = vsub.f32 %v1028, %v1034
        %v1036 = vmul.f32 %v1035, %v1035
        %v1037 = vsel %vm877, %v1036, 0.0
        %1038 = vadd.xlane.f32.xlu0 %v1037
        %v1039 = vpop.xlane.xlu0 %1038
        %v1040 = vmul.f32 %v1039, %v908
        %v1041 = vadd.f32 %v1040, 1e-05
        %v1042 = vrsqrt.pop %v1041
        %v1043 = vmul.f32 %v1042, %v1041
        %v1044 = vmul.f32 %v1043, %v1042
        %v1045 = vmul.f32 0.5, %v1044
        %v1046 = vsub.f32 1.5, %v1045
        %v1047 = vmul.f32 %v1042, %v1046
        %vm1048 = vweird.f32 %v1041
        %vm1049 = vweird.f32 %v1042
        %vm1050 = vmor %vm1048, %vm1049
        %v1051 = vsel %vm1050, %v1042, %v1047
        %v1052 = vmul.f32 %v1035, %v1051
        %v1054 = vperm.slane %v1029, 0
        %v1056 = vmul.f32 %v1052, %v1054
        %v1058 = vperm.slane %v1030, 0
        %v1060 = vadd.f32 %v1056, %v1058
        %1061 = vst.msk [vmem:[%s575] sm:$0xff] %vm877, %v1060
        %s1062 = sand.u32 %s363, 1
        %s1063 = scalar_lea.sflag [#allocation7], %s1062
        %s1064 = sand.u32 %s363, 1
        %s1065 = smul.addr %s1064, 8
        %s1066 = scalar_lea.vmem [#allocation11], %s1065
        %s1067 = sand.u32 %s391, 1
        %s1068 = scalar_lea.sflag [#allocation13], %s1067
        %s1069 = sand.u32 %s391, 1
        %s1070 = smul.addr %s1069, 8
        %s1071 = scalar_lea.vmem [#allocation12], %s1070
        // Predicated region
        $region93: #{tpu_custom_call.1} parent=75 // pred_check
          %p1072 = pneg %p373
        $region94: #{tpu_custom_call.1} parent=75 // pred_check_branch
          %1074 = sbr.rel (%p1072) target = $region96
        $region95: #{tpu_custom_call.1} parent=75 // pred_region
          %1076 = vsyncadd %s1063, 0
          %s1077 = smul.addr %s41, 2
          %s1078 = sadd.s32 %s42, %s1077
          %s1079 = smul.addr %s1078, 8
          %s1080 = scalar_lea.hbm %s14, %s1079
          %s1082 = sshll.u32 %s1066, 4
          %s1083 = int_to_ptr.vmem [resolvable:$true] %s1082
          %s1084 = sshll.u32 %s1080, 4
          %s1085 = int_to_ptr.hbm [resolvable:$true] %s1084
          %1087 = dma.vmem_to_hbm [thread:$0]  %s1083, 128, %s1085, %s1063
        $region96: #{tpu_custom_call.1} parent=75 // pred_fallthru
          _
        // Predicated region
        $region97: #{tpu_custom_call.1} parent=75 // pred_check
          %p1088 = pneg %p401
        $region98: #{tpu_custom_call.1} parent=75 // pred_check_branch
          %1090 = sbr.rel (%p1088) target = $region100
        $region99: #{tpu_custom_call.1} parent=75 // pred_region
          %1092 = vsyncadd %s1068, 0
          %s1093 = smul.addr %s41, 4
          %s1094 = sadd.s32 %s42, %s1093
          %s1095 = smul.addr %s1094, 4
          %s1096 = scalar_lea.hbm %s15, %s1095
          %s1097 = sshll.u32 %s1071, 4
          %s1098 = int_to_ptr.vmem [resolvable:$true] %s1097
          %s1099 = sshll.u32 %s1096, 4
          %s1100 = int_to_ptr.hbm [resolvable:$true] %s1099
          %1105 = dma.vmem_to_hbm [thread:$0]  %s1098, 128, %s1100, %s1068, 64, 128, 4
        $region100: #{tpu_custom_call.1} parent=75 // pred_fallthru
          _
      $region76: #{tpu_custom_call.1} parent=5 // pred_fallthru
        _
      %p1106 = scmp.le.s32.totalorder 2, %s32
      // Predicated region
      $region101: #{tpu_custom_call.1} parent=5 // pred_check
        %p1107 = pneg %p1106
      $region102: #{tpu_custom_call.1} parent=5 // pred_check_branch
        %1109 = sbr.rel (%p1107) target = $region104
      $region103: #{tpu_custom_call.1} parent=5 // pred_region
        %s1110 = ssub.s32 %s32, 2
        // Predicated region
        $region105: #{tpu_custom_call.1} parent=103 // pred_check
          %p1111 = pneg %p379
        $region106: #{tpu_custom_call.1} parent=103 // pred_check_branch
          %1113 = sbr.rel (%p1111) target = $region108
        $region107: #{tpu_custom_call.1} parent=103 // pred_region
          %s1114 = sand.u32 %s364, 1
          %s1115 = scalar_lea.sflag [#allocation7], %s1114
          %s1116 = sand.u32 %s364, 1
          %s1117 = smul.addr %s1116, 8
          %s1118 = scalar_lea.vmem [#allocation11], %s1117
          %1120 = dma.done %s1115, 128
        $region108: #{tpu_custom_call.1} parent=103 // pred_fallthru
          _
        // Predicated region
        $region109: #{tpu_custom_call.1} parent=103 // pred_check
          %p1121 = pneg %p407
        $region110: #{tpu_custom_call.1} parent=103 // pred_check_branch
          %1123 = sbr.rel (%p1121) target = $region112
        $region111: #{tpu_custom_call.1} parent=103 // pred_region
          %s1124 = sand.u32 %s392, 1
          %s1125 = scalar_lea.sflag [#allocation13], %s1124
          %s1126 = sand.u32 %s392, 1
          %s1127 = smul.addr %s1126, 8
          %s1128 = scalar_lea.vmem [#allocation12], %s1127
          %1130 = dma.done %s1125, 128
        $region112: #{tpu_custom_call.1} parent=103 // pred_fallthru
          _
      $region104: #{tpu_custom_call.1} parent=5 // pred_fallthru
        _
    $region6: #{tpu_custom_call.1} parent=1 // loop_footer
      %s36 = sadd.s32 1, %s32
    $region7: #{tpu_custom_call.1} parent=1 // loop_footer_branch
      %31 = sbr.rel target = $region3
    $region8: #{tpu_custom_call.1} parent=1 // loop_exit
      _
    %1131 = vsyncpa [#allocation6], 1
    %s1132 = scalar_lea.sflag [#allocation6], 1
    %1133 = vsyncpa %s1132, 1
    %1134 = vsyncpa [#allocation9], 1
    %1135 = vsyncpa [#allocation7], 1
    %s1136 = scalar_lea.sflag [#allocation7], 1
    %1137 = vsyncpa %s1136, 1
    %1138 = vsyncpa [#allocation13], 1
    %s1139 = scalar_lea.sflag [#allocation13], 1
    %1140 = vsyncpa %s1139, 1

</llo_original>
